<compile_context>
chip_gen: v7x
topology: tpu7x:2x2x1
jax: 0.10.0
libtpu: 0.0.40
codegen_flags: <defaults>
</compile_context>

<pallas_src>
import functools

import jax
import jax.numpy as jnp
from jax.experimental import pallas as pl
from jax.experimental.pallas import tpu as pltpu

_LN_EPS = 1e-5          # torch.nn.LayerNorm default
_LEAKY_SLOPE = 0.2      # nn.LeakyReLU(0.2)
_ND = 512               # hidden width from the module (nd = 512)


def _round_up(x, m):
    return ((x + m - 1) // m) * m


def _layernorm(h, gamma, beta):
    # One-pass LayerNorm: var = E[h^2] - mean^2, clamped at 0 against f32 cancellation.
    mean = jnp.mean(h, axis=-1, keepdims=True)
    m2 = jnp.mean(h * h, axis=-1, keepdims=True)
    var = jnp.maximum(m2 - mean * mean, 0.0)
    return (h - mean) * jax.lax.rsqrt(var + _LN_EPS) * gamma + beta


def _leaky_relu(h):
    # maximum(h, 0.2*h) == LeakyReLU(0.2) for slope in (0, 1); saves a compare+select.
    return jnp.maximum(h, _LEAKY_SLOPE * h)


def length_estimator_kernel(x_ref,
                            w1_ref, b1_ref, g1_ref, be1_ref,
                            w2_ref, b2_ref, g2_ref, be2_ref,
                            w3_ref, b3_ref, g3_ref, be3_ref,
                            w4_ref, b4_ref,
                            o_ref):
    # x arrives as f32 (single 4 B/elem DMA); cast to bf16 on the VPU for the MXU.
    x = x_ref[...].astype(jnp.bfloat16)

    # Block 1: Linear(Din, 512) -> LayerNorm(512) -> LeakyReLU -> Dropout(eval: id)
    h = jnp.dot(x, w1_ref[...], preferred_element_type=jnp.float32) + b1_ref[...]
    h = _leaky_relu(_layernorm(h, g1_ref[...], be1_ref[...]))

    # Block 2: Linear(512, 256) -> LayerNorm(256) -> LeakyReLU -> Dropout(eval: id)
    h = jnp.dot(h.astype(jnp.bfloat16), w2_ref[...],
                preferred_element_type=jnp.float32) + b2_ref[...]
    h = _leaky_relu(_layernorm(h, g2_ref[...], be2_ref[...]))

    # Block 3: Linear(256, 128) -> LayerNorm(128) -> LeakyReLU
    h = jnp.dot(h.astype(jnp.bfloat16), w3_ref[...],
                preferred_element_type=jnp.float32) + b3_ref[...]
    h = _leaky_relu(_layernorm(h, g3_ref[...], be3_ref[...]))

    # Head: Linear(128, Dout_p)   (Dout zero-padded to a lane-dense 128 columns)
    out = jnp.dot(h.astype(jnp.bfloat16), w4_ref[...],
                  preferred_element_type=jnp.float32) + b4_ref[...]
    o_ref[...] = out.astype(o_ref.dtype)


def init_params(key, input_size, output_size, dtype=jnp.float32):
    """Parameter init matching the module's __init_weights:
    Linear weights ~ N(0, 0.02), Linear biases = 0, LayerNorm gamma=1 / beta=0.
    Linear weights are stored as (in_features, out_features) == torch weight.T."""
    nd = _ND
    dims = [(input_size, nd), (nd, nd // 2), (nd // 2, nd // 4), (nd // 4, output_size)]
    keys = jax.random.split(key, len(dims))
    params = {}
    for i, ((din, dout), k) in enumerate(zip(dims, keys), start=1):
        params[f"w{i}"] = (0.02 * jax.random.normal(k, (din, dout))).astype(dtype)
        params[f"b{i}"] = jnp.zeros((1, dout), dtype)
        if i < 4:  # the last Linear has no LayerNorm after it
            params[f"g{i}"] = jnp.ones((1, dout), dtype)
            params[f"be{i}"] = jnp.zeros((1, dout), dtype)
    return params


def _vmem_bytes_estimate(bt, din, dout_p):
    """Rough per-call VMEM footprint (double-buffered I/O blocks + resident bf16
    weights + f32 activation temporaries with a 2x safety factor)."""
    nd = _ND
    x_blocks = 2 * bt * din * 4                   # f32 input tile, double-buffered
    o_blocks = 2 * bt * dout_p * 2                # bf16 output tile, double-buffered
    w_elems = din * nd + nd * (nd // 2) + (nd // 2) * (nd // 4) + (nd // 4) * dout_p
    weights = 2 * 2 * w_elems                     # bf16, double-buffered
    small = 2 * 4 * (3 * 2 * nd + 2 * dout_p)     # biases / LN params (f32)
    acts = 2 * 4 * bt * (nd + nd // 2 + nd // 4)  # f32 activations + LN temps (x2)
    return x_blocks + o_blocks + weights + small + acts


@functools.partial(jax.jit, static_argnames=("batch_tile",))
def length_estimator(x, params, batch_tile=1024):
    """Eval-mode forward.  batch_tile is the main tuning knob:
       - ~1024 on v5e (MXU-bound; shapes natively 128-aligned),
       - 1024-2048 on v6e/v7x (amortizes the ~0.35 us per-grid-step overhead).
       The tile is capped so the 'parallel' batch axis has >= 2 grid steps whenever
       the padded batch allows it, so both v7x TensorCores get work."""
    B, Din = x.shape
    Dout = params["w4"].shape[1]
    Dout_p = _round_up(Dout, 128)   # lane-dense output store (unmasked vst)

    # 128-aligned batch tile, clamped to the (128-padded) batch.
    bt = _round_up(max(1, min(batch_tile, B)), 128)
    Bp128 = _round_up(B, 128)
    if Bp128 >= 256:
        # Guarantee >= 2 grid steps on the parallel axis (v7x dual TensorCores).
        bt = min(bt, max(128, (Bp128 // 2) // 128 * 128))
    Bp = _round_up(B, bt)
    grid = (Bp // bt,)

    # Only row-pad the batch when needed (no Din padding, no wrapper-side bf16 cast
    # of x -- the kernel casts after a plain f32 DMA).  Padded rows are zeros; LN of
    # a zero row is finite and those rows are sliced off below.
    xp = x if Bp == B else jnp.pad(x, ((0, Bp - B), (0, 0)))

    # Weights cast to bf16 once per call (tiny); head weight/bias column-padded to 128.
    w1 = params["w1"].astype(jnp.bfloat16)
    w2 = params["w2"].astype(jnp.bfloat16)
    w3 = params["w3"].astype(jnp.bfloat16)
    w4 = jnp.pad(params["w4"], ((0, 0), (0, Dout_p - Dout))).astype(jnp.bfloat16)
    b4 = jnp.pad(params["b4"], ((0, 0), (0, Dout_p - Dout)))

    ordered_params = [
        w1, params["b1"], params["g1"], params["be1"],
        w2, params["b2"], params["g2"], params["be2"],
        w3, params["b3"], params["g3"], params["be3"],
        w4, b4,
    ]

    def full(shape):
        # Whole-array block, same block index at every grid step -> fetched once,
        # stays resident in VMEM across the batch loop.
        return pl.BlockSpec(shape, lambda i: (0,) * len(shape))

    # x block: (bt, Din) -- last dim equals the full array dim, so Din=64 is legal.
    in_specs = [pl.BlockSpec((bt, Din), lambda i: (i, 0))]
    in_specs += [full(p.shape) for p in ordered_params]

    # Right-size the scoped VMEM limit from the actual footprint; never above 32 MiB
    # (safe even on v7x's 64 MiB physical VMEM), and unset when the default suffices.
    est = _vmem_bytes_estimate(bt, Din, Dout_p)
    vmem_limit = None
    if est > 16 * 1024 * 1024:
        vmem_limit = min(_round_up(est + (4 << 20), 1 << 20), 32 * 1024 * 1024)

    out_p = pl.pallas_call(
        length_estimator_kernel,
        # bf16 output halves the largest HBM write stream; accuracy budget already
        # assumes bf16 MXU operands.  Cast back to x.dtype below.
        out_shape=jax.ShapeDtypeStruct((Bp, Dout_p), jnp.bfloat16),
        grid_spec=pltpu.PrefetchScalarGridSpec(
            num_scalar_prefetch=0,
            grid=grid,
            in_specs=in_specs,
            out_specs=pl.BlockSpec((bt, Dout_p), lambda i: (i, 0)),
        ),
        compiler_params=pltpu.CompilerParams(
            dimension_semantics=("parallel",),
            vmem_limit_bytes=vmem_limit),
    )(xp, *ordered_params)

    return out_p[:B, :Dout].astype(x.dtype)


def _reference(x, p):
    """Pure-JAX f32 reference (eval-mode forward) for a sanity check."""
    def ln(h, g, b):
        mean = jnp.mean(h, axis=-1, keepdims=True)
        var = jnp.mean((h - mean) ** 2, axis=-1, keepdims=True)
        return (h - mean) * jax.lax.rsqrt(var + _LN_EPS) * g + b
    h = x @ p["w1"] + p["b1"]
    h = _leaky_relu(ln(h, p["g1"], p["be1"]))
    h = h @ p["w2"] + p["b2"]
    h = _leaky_relu(ln(h, p["g2"], p["be2"]))
    h = h @ p["w3"] + p["b3"]
    h = _leaky_relu(ln(h, p["g3"], p["be3"]))
    return h @ p["w4"] + p["b4"]


if __name__ == "__main__":
    input_size = 64     # text embedding size
    output_size = 50    # number of length bins
    batch = 8

    key = jax.random.PRNGKey(0)
    k_params, k_x = jax.random.split(key)
    params = init_params(k_params, input_size, output_size)
    x = jax.random.normal(k_x, (batch, input_size), jnp.float32)

    out = length_estimator(x, params)          # batch_tile clamps to 128 for B=8
    out = jax.block_until_ready(out)

    ref = _reference(x, params)
    assert out.shape == (batch, output_size)
    # bf16 MXU operands + bf16 output store (f32 accumulate / f32 LayerNorm)
    # -> looser tolerance than a pure-f32 forward.
    assert jnp.allclose(out, ref, atol=2e-2, rtol=2e-2), "mismatch vs JAX reference"

    print("KERNEL_OK")
</pallas_src>

<mosaic_0001>
module attributes {stable_mosaic.version = 11 : i64} {
  func.func @length_estimator_kernel(%arg0: i32, %arg1: memref<128x64xf32, #tpu.memory_space<vmem>>, %arg2: memref<64x512xbf16, #tpu.memory_space<vmem>>, %arg3: memref<1x512xf32, #tpu.memory_space<vmem>>, %arg4: memref<1x512xf32, #tpu.memory_space<vmem>>, %arg5: memref<1x512xf32, #tpu.memory_space<vmem>>, %arg6: memref<512x256xbf16, #tpu.memory_space<vmem>>, %arg7: memref<1x256xf32, #tpu.memory_space<vmem>>, %arg8: memref<1x256xf32, #tpu.memory_space<vmem>>, %arg9: memref<1x256xf32, #tpu.memory_space<vmem>>, %arg10: memref<256x128xbf16, #tpu.memory_space<vmem>>, %arg11: memref<1x128xf32, #tpu.memory_space<vmem>>, %arg12: memref<1x128xf32, #tpu.memory_space<vmem>>, %arg13: memref<1x128xf32, #tpu.memory_space<vmem>>, %arg14: memref<128x128xbf16, #tpu.memory_space<vmem>>, %arg15: memref<1x128xf32, #tpu.memory_space<vmem>>, %arg16: memref<128x128xbf16, #tpu.memory_space<vmem>>) attributes {dimension_semantics = [#tpu.dimension_semantics<parallel>], iteration_bounds = array<i64: 1>, scalar_prefetch = 0 : i64, scratch_operands = 0 : i64, tpu.core_type = #tpu.core_type<tc>, window_params = [{transform_indices = @transform_0, window_bounds = array<i64: 128, 64>}, {pipeline_mode = #tpu.pipeline_mode<synchronous>, transform_indices = @transform_1, window_bounds = array<i64: 64, 512>}, {pipeline_mode = #tpu.pipeline_mode<synchronous>, transform_indices = @transform_2, window_bounds = array<i64: 1, 512>}, {pipeline_mode = #tpu.pipeline_mode<synchronous>, transform_indices = @transform_3, window_bounds = array<i64: 1, 512>}, {pipeline_mode = #tpu.pipeline_mode<synchronous>, transform_indices = @transform_4, window_bounds = array<i64: 1, 512>}, {pipeline_mode = #tpu.pipeline_mode<synchronous>, transform_indices = @transform_5, window_bounds = array<i64: 512, 256>}, {pipeline_mode = #tpu.pipeline_mode<synchronous>, transform_indices = @transform_6, window_bounds = array<i64: 1, 256>}, {pipeline_mode = #tpu.pipeline_mode<synchronous>, transform_indices = @transform_7, window_bounds = array<i64: 1, 256>}, {pipeline_mode = #tpu.pipeline_mode<synchronous>, transform_indices = @transform_8, window_bounds = array<i64: 1, 256>}, {pipeline_mode = #tpu.pipeline_mode<synchronous>, transform_indices = @transform_9, window_bounds = array<i64: 256, 128>}, {pipeline_mode = #tpu.pipeline_mode<synchronous>, transform_indices = @transform_10, window_bounds = array<i64: 1, 128>}, {pipeline_mode = #tpu.pipeline_mode<synchronous>, transform_indices = @transform_11, window_bounds = array<i64: 1, 128>}, {pipeline_mode = #tpu.pipeline_mode<synchronous>, transform_indices = @transform_12, window_bounds = array<i64: 1, 128>}, {pipeline_mode = #tpu.pipeline_mode<synchronous>, transform_indices = @transform_13, window_bounds = array<i64: 128, 128>}, {pipeline_mode = #tpu.pipeline_mode<synchronous>, transform_indices = @transform_14, window_bounds = array<i64: 1, 128>}, {transform_indices = @transform_15, window_bounds = array<i64: 128, 128>}]} {
    %c0 = arith.constant 0 : index
    %c0_0 = arith.constant 0 : index
    %0 = vector.load %arg1[%c0, %c0_0] : memref<128x64xf32, #tpu.memory_space<vmem>>, vector<128x64xf32>
    %1 = arith.truncf %0 : vector<128x64xf32> to vector<128x64xbf16>
    %c0_1 = arith.constant 0 : index
    %c0_2 = arith.constant 0 : index
    %2 = vector.load %arg2[%c0_1, %c0_2] : memref<64x512xbf16, #tpu.memory_space<vmem>>, vector<64x512xbf16>
    %cst = arith.constant dense<0.000000e+00> : vector<128x512xf32>
    %3 = tpu.matmul %1, %2, %cst {dimension_numbers = #tpu.dot_dimension_numbers<[1], [0], [0], [1], [0, 0, 1, 1], [], []>} : vector<128x64xbf16>, vector<64x512xbf16>, vector<128x512xf32> -> vector<128x512xf32>
    %c0_3 = arith.constant 0 : index
    %c0_4 = arith.constant 0 : index
    %4 = vector.load %arg3[%c0_3, %c0_4] : memref<1x512xf32, #tpu.memory_space<vmem>>, vector<1x512xf32>
    %5 = vector.broadcast %4 : vector<1x512xf32> to vector<128x512xf32>
    %6 = arith.addf %3, %5 : vector<128x512xf32>
    %c0_5 = arith.constant 0 : index
    %c0_6 = arith.constant 0 : index
    %7 = vector.load %arg4[%c0_5, %c0_6] : memref<1x512xf32, #tpu.memory_space<vmem>>, vector<1x512xf32>
    %c0_7 = arith.constant 0 : index
    %c0_8 = arith.constant 0 : index
    %8 = vector.load %arg5[%c0_7, %c0_8] : memref<1x512xf32, #tpu.memory_space<vmem>>, vector<1x512xf32>
    %cst_9 = arith.constant dense<0.000000e+00> : vector<128xf32>
    %9 = vector.multi_reduction <add>, %6, %cst_9 [1] : vector<128x512xf32> to vector<128xf32>
    %10 = vector.shape_cast %9 : vector<128xf32> to vector<128x1xf32>
    %cst_10 = arith.constant 5.120000e+02 : f32
    %11 = vector.broadcast %cst_10 : f32 to vector<128x1xf32>
    %12 = arith.divf %10, %11 : vector<128x1xf32>
    %13 = arith.mulf %6, %6 : vector<128x512xf32>
    %cst_11 = arith.constant dense<0.000000e+00> : vector<128xf32>
    %14 = vector.multi_reduction <add>, %13, %cst_11 [1] : vector<128x512xf32> to vector<128xf32>
    %15 = vector.shape_cast %14 : vector<128xf32> to vector<128x1xf32>
    %cst_12 = arith.constant 5.120000e+02 : f32
    %16 = vector.broadcast %cst_12 : f32 to vector<128x1xf32>
    %17 = arith.divf %15, %16 : vector<128x1xf32>
    %18 = arith.mulf %12, %12 : vector<128x1xf32>
    %19 = arith.subf %17, %18 : vector<128x1xf32>
    %cst_13 = arith.constant 0.000000e+00 : f32
    %20 = vector.broadcast %cst_13 : f32 to vector<128x1xf32>
    %21 = arith.maximumf %19, %20 : vector<128x1xf32>
    %22 = vector.broadcast %12 : vector<128x1xf32> to vector<128x512xf32>
    %23 = arith.subf %6, %22 : vector<128x512xf32>
    %cst_14 = arith.constant 9.99999974E-6 : f32
    %24 = vector.broadcast %cst_14 : f32 to vector<128x1xf32>
    %25 = arith.addf %21, %24 : vector<128x1xf32>
    %26 = math.rsqrt %25 : vector<128x1xf32>
    %27 = vector.broadcast %26 : vector<128x1xf32> to vector<128x512xf32>
    %28 = arith.mulf %23, %27 : vector<128x512xf32>
    %29 = vector.broadcast %7 : vector<1x512xf32> to vector<128x512xf32>
    %30 = arith.mulf %28, %29 : vector<128x512xf32>
    %31 = vector.broadcast %8 : vector<1x512xf32> to vector<128x512xf32>
    %32 = arith.addf %30, %31 : vector<128x512xf32>
    %cst_15 = arith.constant 2.000000e-01 : f32
    %33 = vector.broadcast %cst_15 : f32 to vector<128x512xf32>
    %34 = arith.mulf %33, %32 : vector<128x512xf32>
    %35 = arith.maximumf %32, %34 : vector<128x512xf32>
    %36 = arith.truncf %35 : vector<128x512xf32> to vector<128x512xbf16>
    %c0_16 = arith.constant 0 : index
    %c0_17 = arith.constant 0 : index
    %37 = vector.load %arg6[%c0_16, %c0_17] : memref<512x256xbf16, #tpu.memory_space<vmem>>, vector<512x256xbf16>
    %cst_18 = arith.constant dense<0.000000e+00> : vector<128x256xf32>
    %38 = tpu.matmul %36, %37, %cst_18 {dimension_numbers = #tpu.dot_dimension_numbers<[1], [0], [0], [1], [0, 0, 1, 1], [], []>} : vector<128x512xbf16>, vector<512x256xbf16>, vector<128x256xf32> -> vector<128x256xf32>
    %c0_19 = arith.constant 0 : index
    %c0_20 = arith.constant 0 : index
    %39 = vector.load %arg7[%c0_19, %c0_20] : memref<1x256xf32, #tpu.memory_space<vmem>>, vector<1x256xf32>
    %40 = vector.broadcast %39 : vector<1x256xf32> to vector<128x256xf32>
    %41 = arith.addf %38, %40 : vector<128x256xf32>
    %c0_21 = arith.constant 0 : index
    %c0_22 = arith.constant 0 : index
    %42 = vector.load %arg8[%c0_21, %c0_22] : memref<1x256xf32, #tpu.memory_space<vmem>>, vector<1x256xf32>
    %c0_23 = arith.constant 0 : index
    %c0_24 = arith.constant 0 : index
    %43 = vector.load %arg9[%c0_23, %c0_24] : memref<1x256xf32, #tpu.memory_space<vmem>>, vector<1x256xf32>
    %cst_25 = arith.constant dense<0.000000e+00> : vector<128xf32>
    %44 = vector.multi_reduction <add>, %41, %cst_25 [1] : vector<128x256xf32> to vector<128xf32>
    %45 = vector.shape_cast %44 : vector<128xf32> to vector<128x1xf32>
    %cst_26 = arith.constant 2.560000e+02 : f32
    %46 = vector.broadcast %cst_26 : f32 to vector<128x1xf32>
    %47 = arith.divf %45, %46 : vector<128x1xf32>
    %48 = arith.mulf %41, %41 : vector<128x256xf32>
    %cst_27 = arith.constant dense<0.000000e+00> : vector<128xf32>
    %49 = vector.multi_reduction <add>, %48, %cst_27 [1] : vector<128x256xf32> to vector<128xf32>
    %50 = vector.shape_cast %49 : vector<128xf32> to vector<128x1xf32>
    %cst_28 = arith.constant 2.560000e+02 : f32
    %51 = vector.broadcast %cst_28 : f32 to vector<128x1xf32>
    %52 = arith.divf %50, %51 : vector<128x1xf32>
    %53 = arith.mulf %47, %47 : vector<128x1xf32>
    %54 = arith.subf %52, %53 : vector<128x1xf32>
    %cst_29 = arith.constant 0.000000e+00 : f32
    %55 = vector.broadcast %cst_29 : f32 to vector<128x1xf32>
    %56 = arith.maximumf %54, %55 : vector<128x1xf32>
    %57 = vector.broadcast %47 : vector<128x1xf32> to vector<128x256xf32>
    %58 = arith.subf %41, %57 : vector<128x256xf32>
    %cst_30 = arith.constant 9.99999974E-6 : f32
    %59 = vector.broadcast %cst_30 : f32 to vector<128x1xf32>
    %60 = arith.addf %56, %59 : vector<128x1xf32>
    %61 = math.rsqrt %60 : vector<128x1xf32>
    %62 = vector.broadcast %61 : vector<128x1xf32> to vector<128x256xf32>
    %63 = arith.mulf %58, %62 : vector<128x256xf32>
    %64 = vector.broadcast %42 : vector<1x256xf32> to vector<128x256xf32>
    %65 = arith.mulf %63, %64 : vector<128x256xf32>
    %66 = vector.broadcast %43 : vector<1x256xf32> to vector<128x256xf32>
    %67 = arith.addf %65, %66 : vector<128x256xf32>
    %cst_31 = arith.constant 2.000000e-01 : f32
    %68 = vector.broadcast %cst_31 : f32 to vector<128x256xf32>
    %69 = arith.mulf %68, %67 : vector<128x256xf32>
    %70 = arith.maximumf %67, %69 : vector<128x256xf32>
    %71 = arith.truncf %70 : vector<128x256xf32> to vector<128x256xbf16>
    %c0_32 = arith.constant 0 : index
    %c0_33 = arith.constant 0 : index
    %72 = vector.load %arg10[%c0_32, %c0_33] : memref<256x128xbf16, #tpu.memory_space<vmem>>, vector<256x128xbf16>
    %cst_34 = arith.constant dense<0.000000e+00> : vector<128x128xf32>
    %73 = tpu.matmul %71, %72, %cst_34 {dimension_numbers = #tpu.dot_dimension_numbers<[1], [0], [0], [1], [0, 0, 1, 1], [], []>} : vector<128x256xbf16>, vector<256x128xbf16>, vector<128x128xf32> -> vector<128x128xf32>
    %c0_35 = arith.constant 0 : index
    %c0_36 = arith.constant 0 : index
    %74 = vector.load %arg11[%c0_35, %c0_36] : memref<1x128xf32, #tpu.memory_space<vmem>>, vector<1x128xf32>
    %75 = vector.broadcast %74 : vector<1x128xf32> to vector<128x128xf32>
    %76 = arith.addf %73, %75 : vector<128x128xf32>
    %c0_37 = arith.constant 0 : index
    %c0_38 = arith.constant 0 : index
    %77 = vector.load %arg12[%c0_37, %c0_38] : memref<1x128xf32, #tpu.memory_space<vmem>>, vector<1x128xf32>
    %c0_39 = arith.constant 0 : index
    %c0_40 = arith.constant 0 : index
    %78 = vector.load %arg13[%c0_39, %c0_40] : memref<1x128xf32, #tpu.memory_space<vmem>>, vector<1x128xf32>
    %cst_41 = arith.constant dense<0.000000e+00> : vector<128xf32>
    %79 = vector.multi_reduction <add>, %76, %cst_41 [1] : vector<128x128xf32> to vector<128xf32>
    %80 = vector.shape_cast %79 : vector<128xf32> to vector<128x1xf32>
    %cst_42 = arith.constant 1.280000e+02 : f32
    %81 = vector.broadcast %cst_42 : f32 to vector<128x1xf32>
    %82 = arith.divf %80, %81 : vector<128x1xf32>
    %83 = arith.mulf %76, %76 : vector<128x128xf32>
    %cst_43 = arith.constant dense<0.000000e+00> : vector<128xf32>
    %84 = vector.multi_reduction <add>, %83, %cst_43 [1] : vector<128x128xf32> to vector<128xf32>
    %85 = vector.shape_cast %84 : vector<128xf32> to vector<128x1xf32>
    %cst_44 = arith.constant 1.280000e+02 : f32
    %86 = vector.broadcast %cst_44 : f32 to vector<128x1xf32>
    %87 = arith.divf %85, %86 : vector<128x1xf32>
    %88 = arith.mulf %82, %82 : vector<128x1xf32>
    %89 = arith.subf %87, %88 : vector<128x1xf32>
    %cst_45 = arith.constant 0.000000e+00 : f32
    %90 = vector.broadcast %cst_45 : f32 to vector<128x1xf32>
    %91 = arith.maximumf %89, %90 : vector<128x1xf32>
    %92 = vector.broadcast %82 : vector<128x1xf32> to vector<128x128xf32>
    %93 = arith.subf %76, %92 : vector<128x128xf32>
    %cst_46 = arith.constant 9.99999974E-6 : f32
    %94 = vector.broadcast %cst_46 : f32 to vector<128x1xf32>
    %95 = arith.addf %91, %94 : vector<128x1xf32>
    %96 = math.rsqrt %95 : vector<128x1xf32>
    %97 = vector.broadcast %96 : vector<128x1xf32> to vector<128x128xf32>
    %98 = arith.mulf %93, %97 : vector<128x128xf32>
    %99 = vector.broadcast %77 : vector<1x128xf32> to vector<128x128xf32>
    %100 = arith.mulf %98, %99 : vector<128x128xf32>
    %101 = vector.broadcast %78 : vector<1x128xf32> to vector<128x128xf32>
    %102 = arith.addf %100, %101 : vector<128x128xf32>
    %cst_47 = arith.constant 2.000000e-01 : f32
    %103 = vector.broadcast %cst_47 : f32 to vector<128x128xf32>
    %104 = arith.mulf %103, %102 : vector<128x128xf32>
    %105 = arith.maximumf %102, %104 : vector<128x128xf32>
    %106 = arith.truncf %105 : vector<128x128xf32> to vector<128x128xbf16>
    %c0_48 = arith.constant 0 : index
    %c0_49 = arith.constant 0 : index
    %107 = vector.load %arg14[%c0_48, %c0_49] : memref<128x128xbf16, #tpu.memory_space<vmem>>, vector<128x128xbf16>
    %cst_50 = arith.constant dense<0.000000e+00> : vector<128x128xf32>
    %108 = tpu.matmul %106, %107, %cst_50 {dimension_numbers = #tpu.dot_dimension_numbers<[1], [0], [0], [1], [0, 0, 1, 1], [], []>} : vector<128x128xbf16>, vector<128x128xbf16>, vector<128x128xf32> -> vector<128x128xf32>
    %c0_51 = arith.constant 0 : index
    %c0_52 = arith.constant 0 : index
    %109 = vector.load %arg15[%c0_51, %c0_52] : memref<1x128xf32, #tpu.memory_space<vmem>>, vector<1x128xf32>
    %110 = vector.broadcast %109 : vector<1x128xf32> to vector<128x128xf32>
    %111 = arith.addf %108, %110 : vector<128x128xf32>
    %112 = arith.truncf %111 : vector<128x128xf32> to vector<128x128xbf16>
    %c0_53 = arith.constant 0 : index
    %c0_54 = arith.constant 0 : index
    %113 = vector.load %arg16[%c0_53, %c0_54] : memref<128x128xbf16, #tpu.memory_space<vmem>>, vector<128x128xbf16>
    tpu.vector_store %arg16[%c0_53, %c0_54], %112 {strides = array<i32>} : memref<128x128xbf16, #tpu.memory_space<vmem>>, vector<128x128xbf16>,
    return
  }
  func.func @transform_0(%arg0: i32) -> (i32, i32) {
    %c0_i32 = arith.constant 0 : i32
    %c0_i32_0 = arith.constant 0 : i32
    return %arg0, %c0_i32 : i32, i32
  }
  func.func @transform_1(%arg0: i32) -> (i32, i32) {
    %c0_i32 = arith.constant 0 : i32
    %c0_i32_0 = arith.constant 0 : i32
    %c0_i32_1 = arith.constant 0 : i32
    return %c0_i32, %c0_i32_0 : i32, i32
  }
  func.func @transform_2(%arg0: i32) -> (i32, i32) {
    %c0_i32 = arith.constant 0 : i32
    %c0_i32_0 = arith.constant 0 : i32
    %c0_i32_1 = arith.constant 0 : i32
    return %c0_i32, %c0_i32_0 : i32, i32
  }
  func.func @transform_3(%arg0: i32) -> (i32, i32) {
    %c0_i32 = arith.constant 0 : i32
    %c0_i32_0 = arith.constant 0 : i32
    %c0_i32_1 = arith.constant 0 : i32
    return %c0_i32, %c0_i32_0 : i32, i32
  }
  func.func @transform_4(%arg0: i32) -> (i32, i32) {
    %c0_i32 = arith.constant 0 : i32
    %c0_i32_0 = arith.constant 0 : i32
    %c0_i32_1 = arith.constant 0 : i32
    return %c0_i32, %c0_i32_0 : i32, i32
  }
  func.func @transform_5(%arg0: i32) -> (i32, i32) {
    %c0_i32 = arith.constant 0 : i32
    %c0_i32_0 = arith.constant 0 : i32
    %c0_i32_1 = arith.constant 0 : i32
    return %c0_i32, %c0_i32_0 : i32, i32
  }
  func.func @transform_6(%arg0: i32) -> (i32, i32) {
    %c0_i32 = arith.constant 0 : i32
    %c0_i32_0 = arith.constant 0 : i32
    %c0_i32_1 = arith.constant 0 : i32
    return %c0_i32, %c0_i32_0 : i32, i32
  }
  func.func @transform_7(%arg0: i32) -> (i32, i32) {
    %c0_i32 = arith.constant 0 : i32
    %c0_i32_0 = arith.constant 0 : i32
    %c0_i32_1 = arith.constant 0 : i32
    return %c0_i32, %c0_i32_0 : i32, i32
  }
  func.func @transform_8(%arg0: i32) -> (i32, i32) {
    %c0_i32 = arith.constant 0 : i32
    %c0_i32_0 = arith.constant 0 : i32
    %c0_i32_1 = arith.constant 0 : i32
    return %c0_i32, %c0_i32_0 : i32, i32
  }
  func.func @transform_9(%arg0: i32) -> (i32, i32) {
    %c0_i32 = arith.constant 0 : i32
    %c0_i32_0 = arith.constant 0 : i32
    %c0_i32_1 = arith.constant 0 : i32
    return %c0_i32, %c0_i32_0 : i32, i32
  }
  func.func @transform_10(%arg0: i32) -> (i32, i32) {
    %c0_i32 = arith.constant 0 : i32
    %c0_i32_0 = arith.constant 0 : i32
    %c0_i32_1 = arith.constant 0 : i32
    return %c0_i32, %c0_i32_0 : i32, i32
  }
  func.func @transform_11(%arg0: i32) -> (i32, i32) {
    %c0_i32 = arith.constant 0 : i32
    %c0_i32_0 = arith.constant 0 : i32
    %c0_i32_1 = arith.constant 0 : i32
    return %c0_i32, %c0_i32_0 : i32, i32
  }
  func.func @transform_12(%arg0: i32) -> (i32, i32) {
    %c0_i32 = arith.constant 0 : i32
    %c0_i32_0 = arith.constant 0 : i32
    %c0_i32_1 = arith.constant 0 : i32
    return %c0_i32, %c0_i32_0 : i32, i32
  }
  func.func @transform_13(%arg0: i32) -> (i32, i32) {
    %c0_i32 = arith.constant 0 : i32
    %c0_i32_0 = arith.constant 0 : i32
    %c0_i32_1 = arith.constant 0 : i32
    return %c0_i32, %c0_i32_0 : i32, i32
  }
  func.func @transform_14(%arg0: i32) -> (i32, i32) {
    %c0_i32 = arith.constant 0 : i32
    %c0_i32_0 = arith.constant 0 : i32
    %c0_i32_1 = arith.constant 0 : i32
    return %c0_i32, %c0_i32_0 : i32, i32
  }
  func.func @transform_15(%arg0: i32) -> (i32, i32) {
    %c0_i32 = arith.constant 0 : i32
    %c0_i32_0 = arith.constant 0 : i32
    return %arg0, %c0_i32 : i32, i32
  }
}

</mosaic_0001>

<llo_original>
// kernel: length_estimator.1
$region0: #{length_estimator.1}
  #allocation0 [shape = 'u32[]', space=smem, size = 0x4, offset = 0x4, fixed_abs, tag = 'smem constant byte address 0x4 - core index']
  #allocation1 [shape = 'u32[144,128]{1,0:T(1,128)}', space=vmem, size = 0x12000, scoped, tag = 'internal scratch']
  %s0 = inlined_call_operand.vmem [shape: f32[128,64], index: 0, kind: input, shape index: {}]
  %s1 = inlined_call_operand.vmem [shape: bf16[64,512], index: 1, kind: input, shape index: {}]
  %s2 = inlined_call_operand.vmem [shape: f32[1,512], index: 2, kind: input, shape index: {}]
  %s3 = inlined_call_operand.vmem [shape: f32[1,512], index: 3, kind: input, shape index: {}]
  %s4 = inlined_call_operand.vmem [shape: f32[1,512], index: 4, kind: input, shape index: {}]
  %s5 = inlined_call_operand.vmem [shape: bf16[512,256], index: 5, kind: input, shape index: {}]
  %s6 = inlined_call_operand.vmem [shape: f32[1,256], index: 6, kind: input, shape index: {}]
  %s7 = inlined_call_operand.vmem [shape: f32[1,256], index: 7, kind: input, shape index: {}]
  %s8 = inlined_call_operand.vmem [shape: f32[1,256], index: 8, kind: input, shape index: {}]
  %s9 = inlined_call_operand.vmem [shape: bf16[256,128], index: 9, kind: input, shape index: {}]
  %s10 = inlined_call_operand.vmem [shape: f32[1,128], index: 10, kind: input, shape index: {}]
  %s11 = inlined_call_operand.vmem [shape: f32[1,128], index: 11, kind: input, shape index: {}]
  %s12 = inlined_call_operand.vmem [shape: f32[1,128], index: 12, kind: input, shape index: {}]
  %s13 = inlined_call_operand.vmem [shape: bf16[128,128], index: 13, kind: input, shape index: {}]
  %s14 = inlined_call_operand.vmem [shape: f32[1,128], index: 14, kind: input, shape index: {}]
  %s15 = inlined_call_operand.vmem [shape: bf16[128,128], index: 15, kind: output, shape index: {}]
  %s16 = sld [smem:[#allocation0]]
  $region70: #{length_estimator.1} parent=0
    _
  %s18 = ssub.s32 1, %s16
  %s19 = scalar_select 0, %s18, %s16
  // Predicated region
  $region2: #{length_estimator.1} parent=0 // pred_check
    _
  $region3: #{length_estimator.1} parent=0 // pred_check_branch
    %21 = sbr.rel (0) target = $region5
  $region4: #{length_estimator.1} parent=0 // pred_region
    _
  $region5: #{length_estimator.1} parent=0 // pred_fallthru
    _
  // Predicated region
  $region6: #{length_estimator.1} parent=0 // pred_check
    _
  $region7: #{length_estimator.1} parent=0 // pred_check_branch
    %23 = sbr.rel (0) target = $region9
  $region8: #{length_estimator.1} parent=0 // pred_region
    _
  $region9: #{length_estimator.1} parent=0 // pred_fallthru
    _
  // Predicated region
  $region10: #{length_estimator.1} parent=0 // pred_check
    _
  $region11: #{length_estimator.1} parent=0 // pred_check_branch
    %25 = sbr.rel (0) target = $region13
  $region12: #{length_estimator.1} parent=0 // pred_region
    _
  $region13: #{length_estimator.1} parent=0 // pred_fallthru
    _
  // Predicated region
  $region14: #{length_estimator.1} parent=0 // pred_check
    _
  $region15: #{length_estimator.1} parent=0 // pred_check_branch
    %27 = sbr.rel (0) target = $region17
  $region16: #{length_estimator.1} parent=0 // pred_region
    _
  $region17: #{length_estimator.1} parent=0 // pred_fallthru
    _
  // Predicated region
  $region18: #{length_estimator.1} parent=0 // pred_check
    _
  $region19: #{length_estimator.1} parent=0 // pred_check_branch
    %29 = sbr.rel (0) target = $region21
  $region20: #{length_estimator.1} parent=0 // pred_region
    _
  $region21: #{length_estimator.1} parent=0 // pred_fallthru
    _
  // Predicated region
  $region22: #{length_estimator.1} parent=0 // pred_check
    _
  $region23: #{length_estimator.1} parent=0 // pred_check_branch
    %31 = sbr.rel (0) target = $region25
  $region24: #{length_estimator.1} parent=0 // pred_region
    _
  $region25: #{length_estimator.1} parent=0 // pred_fallthru
    _
  // Predicated region
  $region26: #{length_estimator.1} parent=0 // pred_check
    _
  $region27: #{length_estimator.1} parent=0 // pred_check_branch
    %33 = sbr.rel (0) target = $region29
  $region28: #{length_estimator.1} parent=0 // pred_region
    _
  $region29: #{length_estimator.1} parent=0 // pred_fallthru
    _
  // Predicated region
  $region30: #{length_estimator.1} parent=0 // pred_check
    _
  $region31: #{length_estimator.1} parent=0 // pred_check_branch
    %35 = sbr.rel (0) target = $region33
  $region32: #{length_estimator.1} parent=0 // pred_region
    _
  $region33: #{length_estimator.1} parent=0 // pred_fallthru
    _
  // Predicated region
  $region34: #{length_estimator.1} parent=0 // pred_check
    _
  $region35: #{length_estimator.1} parent=0 // pred_check_branch
    %37 = sbr.rel (0) target = $region37
  $region36: #{length_estimator.1} parent=0 // pred_region
    _
  $region37: #{length_estimator.1} parent=0 // pred_fallthru
    _
  // Predicated region
  $region38: #{length_estimator.1} parent=0 // pred_check
    _
  $region39: #{length_estimator.1} parent=0 // pred_check_branch
    %39 = sbr.rel (0) target = $region41
  $region40: #{length_estimator.1} parent=0 // pred_region
    _
  $region41: #{length_estimator.1} parent=0 // pred_fallthru
    _
  // Predicated region
  $region42: #{length_estimator.1} parent=0 // pred_check
    _
  $region43: #{length_estimator.1} parent=0 // pred_check_branch
    %41 = sbr.rel (0) target = $region45
  $region44: #{length_estimator.1} parent=0 // pred_region
    _
  $region45: #{length_estimator.1} parent=0 // pred_fallthru
    _
  // Predicated region
  $region46: #{length_estimator.1} parent=0 // pred_check
    _
  $region47: #{length_estimator.1} parent=0 // pred_check_branch
    %43 = sbr.rel (0) target = $region49
  $region48: #{length_estimator.1} parent=0 // pred_region
    _
  $region49: #{length_estimator.1} parent=0 // pred_fallthru
    _
  // Predicated region
  $region50: #{length_estimator.1} parent=0 // pred_check
    _
  $region51: #{length_estimator.1} parent=0 // pred_check_branch
    %45 = sbr.rel (0) target = $region53
  $region52: #{length_estimator.1} parent=0 // pred_region
    _
  $region53: #{length_estimator.1} parent=0 // pred_fallthru
    _
  // Predicated region
  $region54: #{length_estimator.1} parent=0 // pred_check
    _
  $region55: #{length_estimator.1} parent=0 // pred_check_branch
    %47 = sbr.rel (0) target = $region57
  $region56: #{length_estimator.1} parent=0 // pred_region
    _
  $region57: #{length_estimator.1} parent=0 // pred_fallthru
    _
  // Predicated region
  $region58: #{length_estimator.1} parent=0 // pred_check
    _
  $region59: #{length_estimator.1} parent=0 // pred_check_branch
    %49 = sbr.rel (0) target = $region61
  $region60: #{length_estimator.1} parent=0 // pred_region
    _
  $region61: #{length_estimator.1} parent=0 // pred_fallthru
    _
  %v51 = vld [vmem:[%s0] sm:$0xff]
  %v52 = vld [vmem:[%s0 + $0x8] sm:$0xff]
  %v53 = vld [vmem:[%s0 + $0x10] sm:$0xff]
  %v54 = vld [vmem:[%s0 + $0x18] sm:$0xff]
  %v55 = vld [vmem:[%s0 + $0x20] sm:$0xff]
  %v56 = vld [vmem:[%s0 + $0x28] sm:$0xff]
  %v57 = vld [vmem:[%s0 + $0x30] sm:$0xff]
  %v58 = vld [vmem:[%s0 + $0x38] sm:$0xff]
  %v59 = vld [vmem:[%s0 + $0x40] sm:$0xff]
  %v60 = vld [vmem:[%s0 + $0x48] sm:$0xff]
  %v61 = vld [vmem:[%s0 + $0x50] sm:$0xff]
  %v62 = vld [vmem:[%s0 + $0x58] sm:$0xff]
  %v63 = vld [vmem:[%s0 + $0x60] sm:$0xff]
  %v64 = vld [vmem:[%s0 + $0x68] sm:$0xff]
  %v65 = vld [vmem:[%s0 + $0x70] sm:$0xff]
  %v66 = vld [vmem:[%s0 + $0x78] sm:$0xff]
  %v67 = vpack.c.bf16 %v52, %v51
  %v68 = vpack.c.bf16 %v54, %v53
  %v69 = vpack.c.bf16 %v56, %v55
  %v70 = vpack.c.bf16 %v58, %v57
  %v71 = vpack.c.bf16 %v60, %v59
  %v72 = vpack.c.bf16 %v62, %v61
  %v73 = vpack.c.bf16 %v64, %v63
  %v74 = vpack.c.bf16 %v66, %v65
  %v75 = vld [vmem:[%s1] sm:$0xff]
  %v76 = vld [vmem:[%s1 + $0x8] sm:$0xff]
  %v77 = vld [vmem:[%s1 + $0x10] sm:$0xff]
  %v78 = vld [vmem:[%s1 + $0x18] sm:$0xff]
  %v79 = vld [vmem:[%s1 + $0x20] sm:$0xff]
  %v80 = vld [vmem:[%s1 + $0x28] sm:$0xff]
  %v81 = vld [vmem:[%s1 + $0x30] sm:$0xff]
  %v82 = vld [vmem:[%s1 + $0x38] sm:$0xff]
  %v83 = vld [vmem:[%s1 + $0x40] sm:$0xff]
  %v84 = vld [vmem:[%s1 + $0x48] sm:$0xff]
  %v85 = vld [vmem:[%s1 + $0x50] sm:$0xff]
  %v86 = vld [vmem:[%s1 + $0x58] sm:$0xff]
  %v87 = vld [vmem:[%s1 + $0x60] sm:$0xff]
  %v88 = vld [vmem:[%s1 + $0x68] sm:$0xff]
  %v89 = vld [vmem:[%s1 + $0x70] sm:$0xff]
  %v90 = vld [vmem:[%s1 + $0x78] sm:$0xff]
  %v91 = vld [vmem:[%s2] sm:$0xf]
  %v93 = vlaneseq
  %v94 = vshrl.u32 %v93, 7
  %v95 = vsub.s32 0, %v94
  %v96 = vrot.slane %v91, %v95
  %v97 = vlaneseq
  %v98 = vshrl.u32 %v97, 7
  %v99 = vsub.s32 1, %v98
  %v100 = vrot.slane %v91, %v99
  %v101 = vlaneseq
  %v102 = vshrl.u32 %v101, 7
  %v103 = vsub.s32 2, %v102
  %v104 = vrot.slane %v91, %v103
  %v105 = vlaneseq
  %v106 = vshrl.u32 %v105, 7
  %v107 = vsub.s32 3, %v106
  %v108 = vrot.slane %v91, %v107
  %v129 = vunpack.c.l.b16 %v75
  %v130 = vunpack.c.h.b16 %v75
  %v131 = vunpack.c.l.b16 %v76
  %v132 = vunpack.c.h.b16 %v76
  %v133 = vunpack.c.l.b16 %v77
  %v134 = vunpack.c.h.b16 %v77
  %v135 = vunpack.c.l.b16 %v78
  %v136 = vunpack.c.h.b16 %v78
  %v137 = vunpack.c.l.b16 %v79
  %v138 = vunpack.c.h.b16 %v79
  %v139 = vunpack.c.l.b16 %v80
  %v140 = vunpack.c.h.b16 %v80
  %v141 = vunpack.c.l.b16 %v81
  %v142 = vunpack.c.h.b16 %v81
  %v143 = vunpack.c.l.b16 %v82
  %v144 = vunpack.c.h.b16 %v82
  %v145 = vunpack.c.l.b16 %v83
  %v146 = vunpack.c.h.b16 %v83
  %v147 = vunpack.c.l.b16 %v84
  %v148 = vunpack.c.h.b16 %v84
  %v149 = vunpack.c.l.b16 %v85
  %v150 = vunpack.c.h.b16 %v85
  %v151 = vunpack.c.l.b16 %v86
  %v152 = vunpack.c.h.b16 %v86
  %v153 = vunpack.c.l.b16 %v87
  %v154 = vunpack.c.h.b16 %v87
  %v155 = vunpack.c.l.b16 %v88
  %v156 = vunpack.c.h.b16 %v88
  %v157 = vunpack.c.l.b16 %v89
  %v158 = vunpack.c.h.b16 %v89
  %v159 = vunpack.c.l.b16 %v90
  %v160 = vunpack.c.h.b16 %v90
  %v161 = vpack.c.b16 %v133, %v129
  %v162 = vpack.c.b16 %v134, %v130
  %v163 = vpack.c.b16 %v135, %v131
  %v164 = vpack.c.b16 %v136, %v132
  %v165 = vpack.c.b16 %v141, %v137
  %v166 = vpack.c.b16 %v142, %v138
  %v167 = vpack.c.b16 %v143, %v139
  %v168 = vpack.c.b16 %v144, %v140
  %v169 = vpack.c.b16 %v149, %v145
  %v170 = vpack.c.b16 %v150, %v146
  %v171 = vpack.c.b16 %v151, %v147
  %v172 = vpack.c.b16 %v152, %v148
  %v173 = vpack.c.b16 %v157, %v153
  %v174 = vpack.c.b16 %v158, %v154
  %v175 = vpack.c.b16 %v159, %v155
  %v176 = vpack.c.b16 %v160, %v156
  %vm193 = vcmask 523264
  %v195 = vsel %vm193, %v67, 0
  %v198 = vsel %vm193, %v68, 0
  %v201 = vsel %vm193, %v69, 0
  %v204 = vsel %vm193, %v70, 0
  %v207 = vsel %vm193, %v71, 0
  %v210 = vsel %vm193, %v72, 0
  %v213 = vsel %vm193, %v73, 0
  %v216 = vsel %vm193, %v74, 0
  %218 = vmatprep.subr.bf16.mxu0 %v162
  %219 = vmatpush1.bf16.msra.mxu0 %v161
  %220 = vmatprep.subr.bf16.mxu0 %v166
  %221 = vmatpush1.bf16.msra.mxu0 %v165
  %222 = vmatprep.subr.bf16.mxu0 %v170
  %223 = vmatpush1.bf16.msra.mxu0 %v169
  %224 = vmatprep.subr.bf16.mxu0 %v174
  %225 = vmatpush1.bf16.msra.mxu0 %v173
  %226 = vmatprep.subr.bf16.mxu0 0
  %227 = vmatpush1.bf16.msra.mxu0 0
  %228 = vmatprep.subr.bf16.mxu0 0
  %229 = vmatpush1.bf16.msra.mxu0 0
  %230 = vmatprep.subr.bf16.mxu0 0
  %231 = vmatpush1.bf16.msra.mxu0 0
  %232 = vmatprep.subr.bf16.mxu0 0
  %233 = vmatpush1.bf16.msra.mxu0 0
  %234 = vmatprep.subr.bf16.mxu0 0
  %235 = vmatpush1.bf16.msra.mxu0 0
  %236 = vmatprep.subr.bf16.mxu0 0
  %237 = vmatpush1.bf16.msra.mxu0 0
  %238 = vmatprep.subr.bf16.mxu0 0
  %239 = vmatpush1.bf16.msra.mxu0 0
  %240 = vmatprep.subr.bf16.mxu0 0
  %241 = vmatpush1.bf16.msra.mxu0 0
  %242 = vmatprep.subr.bf16.mxu0 0
  %243 = vmatpush1.bf16.msra.mxu0 0
  %244 = vmatprep.subr.bf16.mxu0 0
  %245 = vmatpush1.bf16.msra.mxu0 0
  %246 = vmatprep.subr.bf16.mxu0 0
  %247 = vmatpush1.bf16.msra.mxu0 0
  %248 = vmatprep.subr.bf16.mxu0 0
  %249 = vmatpush1.bf16.msra.mxu0 0
  %250 = vmatprep.mubr.bf16.mxu0 0
  %251 = vmatmul.mubr.bf16.gmra.mrb[0].mxu0 %v195
  %v252 = vpop.f32.mrb[0].mxu0
  %v253 = vadd.f32 %v96, %v252
  %v254 = vpop.f32.mrb[0].mxu0
  %v255 = vadd.f32 %v100, %v254
  %v256 = vpop.f32.mrb[0].mxu0
  %v257 = vadd.f32 %v96, %v256
  %v258 = vpop.f32.mrb[0].mxu0
  %v259 = vadd.f32 %v100, %v258
  %260 = vmatprep.mubr.bf16.mxu0 0
  %261 = vmatmul.mubr.bf16.gmra.mrb[0].mxu0 %v198
  %v262 = vpop.f32.mrb[0].mxu0
  %v263 = vadd.f32 %v96, %v262
  %v264 = vpop.f32.mrb[0].mxu0
  %v265 = vadd.f32 %v100, %v264
  %v266 = vpop.f32.mrb[0].mxu0
  %v267 = vadd.f32 %v96, %v266
  %v268 = vpop.f32.mrb[0].mxu0
  %v269 = vadd.f32 %v100, %v268
  %270 = vmatprep.mubr.bf16.mxu0 0
  %271 = vmatmul.mubr.bf16.gmra.mrb[0].mxu0 %v201
  %v272 = vpop.f32.mrb[0].mxu0
  %v273 = vadd.f32 %v96, %v272
  %v274 = vpop.f32.mrb[0].mxu0
  %v275 = vadd.f32 %v100, %v274
  %v276 = vpop.f32.mrb[0].mxu0
  %v277 = vadd.f32 %v96, %v276
  %v278 = vpop.f32.mrb[0].mxu0
  %v279 = vadd.f32 %v100, %v278
  %280 = vmatprep.mubr.bf16.mxu0 0
  %281 = vmatmul.mubr.bf16.gmra.mrb[0].mxu0 %v204
  %v282 = vpop.f32.mrb[0].mxu0
  %v283 = vadd.f32 %v96, %v282
  %v284 = vpop.f32.mrb[0].mxu0
  %v285 = vadd.f32 %v100, %v284
  %v286 = vpop.f32.mrb[0].mxu0
  %v287 = vadd.f32 %v96, %v286
  %v288 = vpop.f32.mrb[0].mxu0
  %v289 = vadd.f32 %v100, %v288
  %290 = vmatprep.mubr.bf16.mxu0 0
  %291 = vmatmul.mubr.bf16.gmra.mrb[0].mxu0 %v207
  %v292 = vpop.f32.mrb[0].mxu0
  %v293 = vadd.f32 %v96, %v292
  %v294 = vpop.f32.mrb[0].mxu0
  %v295 = vadd.f32 %v100, %v294
  %v296 = vpop.f32.mrb[0].mxu0
  %v297 = vadd.f32 %v96, %v296
  %v298 = vpop.f32.mrb[0].mxu0
  %v299 = vadd.f32 %v100, %v298
  %300 = vmatprep.mubr.bf16.mxu0 0
  %301 = vmatmul.mubr.bf16.gmra.mrb[0].mxu0 %v210
  %v302 = vpop.f32.mrb[0].mxu0
  %v303 = vadd.f32 %v96, %v302
  %v304 = vpop.f32.mrb[0].mxu0
  %v305 = vadd.f32 %v100, %v304
  %v306 = vpop.f32.mrb[0].mxu0
  %v307 = vadd.f32 %v96, %v306
  %v308 = vpop.f32.mrb[0].mxu0
  %v309 = vadd.f32 %v100, %v308
  %310 = vmatprep.mubr.bf16.mxu0 0
  %311 = vmatmul.mubr.bf16.gmra.mrb[0].mxu0 %v213
  %v312 = vpop.f32.mrb[0].mxu0
  %v313 = vadd.f32 %v96, %v312
  %v314 = vpop.f32.mrb[0].mxu0
  %v315 = vadd.f32 %v100, %v314
  %v316 = vpop.f32.mrb[0].mxu0
  %v317 = vadd.f32 %v96, %v316
  %v318 = vpop.f32.mrb[0].mxu0
  %v319 = vadd.f32 %v100, %v318
  %320 = vmatprep.mubr.bf16.mxu0 0
  %321 = vmatmul.mubr.bf16.gmra.mrb[0].mxu0 %v216
  %v322 = vpop.f32.mrb[0].mxu0
  %v323 = vadd.f32 %v96, %v322
  %v324 = vpop.f32.mrb[0].mxu0
  %v325 = vadd.f32 %v100, %v324
  %v326 = vpop.f32.mrb[0].mxu0
  %v327 = vadd.f32 %v96, %v326
  %v328 = vpop.f32.mrb[0].mxu0
  %v329 = vadd.f32 %v100, %v328
  %330 = vdwg.mxu0
  %331 = vmatprep.subr.bf16.mxu0 %v164
  %332 = vmatpush1.bf16.msra.mxu0 %v163
  %333 = vmatprep.subr.bf16.mxu0 %v168
  %334 = vmatpush1.bf16.msra.mxu0 %v167
  %335 = vmatprep.subr.bf16.mxu0 %v172
  %336 = vmatpush1.bf16.msra.mxu0 %v171
  %337 = vmatprep.subr.bf16.mxu0 %v176
  %338 = vmatpush1.bf16.msra.mxu0 %v175
  %339 = vmatprep.subr.bf16.mxu0 0
  %340 = vmatpush1.bf16.msra.mxu0 0
  %341 = vmatprep.subr.bf16.mxu0 0
  %342 = vmatpush1.bf16.msra.mxu0 0
  %343 = vmatprep.subr.bf16.mxu0 0
  %344 = vmatpush1.bf16.msra.mxu0 0
  %345 = vmatprep.subr.bf16.mxu0 0
  %346 = vmatpush1.bf16.msra.mxu0 0
  %347 = vmatprep.subr.bf16.mxu0 0
  %348 = vmatpush1.bf16.msra.mxu0 0
  %349 = vmatprep.subr.bf16.mxu0 0
  %350 = vmatpush1.bf16.msra.mxu0 0
  %351 = vmatprep.subr.bf16.mxu0 0
  %352 = vmatpush1.bf16.msra.mxu0 0
  %353 = vmatprep.subr.bf16.mxu0 0
  %354 = vmatpush1.bf16.msra.mxu0 0
  %355 = vmatprep.subr.bf16.mxu0 0
  %356 = vmatpush1.bf16.msra.mxu0 0
  %357 = vmatprep.subr.bf16.mxu0 0
  %358 = vmatpush1.bf16.msra.mxu0 0
  %359 = vmatprep.subr.bf16.mxu0 0
  %360 = vmatpush1.bf16.msra.mxu0 0
  %361 = vmatprep.subr.bf16.mxu0 0
  %362 = vmatpush1.bf16.msra.mxu0 0
  %363 = vmatprep.mubr.bf16.mxu0 0
  %364 = vmatmul.mubr.bf16.gmra.mrb[0].mxu0 %v195
  %v365 = vpop.f32.mrb[0].mxu0
  %v366 = vadd.f32 %v104, %v365
  %v367 = vpop.f32.mrb[0].mxu0
  %v368 = vadd.f32 %v108, %v367
  %v369 = vpop.f32.mrb[0].mxu0
  %v370 = vadd.f32 %v104, %v369
  %v371 = vpop.f32.mrb[0].mxu0
  %v372 = vadd.f32 %v108, %v371
  %373 = vmatprep.mubr.bf16.mxu0 0
  %374 = vmatmul.mubr.bf16.gmra.mrb[0].mxu0 %v198
  %v375 = vpop.f32.mrb[0].mxu0
  %v376 = vadd.f32 %v104, %v375
  %v377 = vpop.f32.mrb[0].mxu0
  %v378 = vadd.f32 %v108, %v377
  %v379 = vpop.f32.mrb[0].mxu0
  %v380 = vadd.f32 %v104, %v379
  %v381 = vpop.f32.mrb[0].mxu0
  %v382 = vadd.f32 %v108, %v381
  %383 = vmatprep.mubr.bf16.mxu0 0
  %384 = vmatmul.mubr.bf16.gmra.mrb[0].mxu0 %v201
  %v385 = vpop.f32.mrb[0].mxu0
  %v386 = vadd.f32 %v104, %v385
  %v387 = vpop.f32.mrb[0].mxu0
  %v388 = vadd.f32 %v108, %v387
  %v389 = vpop.f32.mrb[0].mxu0
  %v390 = vadd.f32 %v104, %v389
  %v391 = vpop.f32.mrb[0].mxu0
  %v392 = vadd.f32 %v108, %v391
  %393 = vmatprep.mubr.bf16.mxu0 0
  %394 = vmatmul.mubr.bf16.gmra.mrb[0].mxu0 %v204
  %v395 = vpop.f32.mrb[0].mxu0
  %v396 = vadd.f32 %v104, %v395
  %v397 = vpop.f32.mrb[0].mxu0
  %v398 = vadd.f32 %v108, %v397
  %v399 = vpop.f32.mrb[0].mxu0
  %v400 = vadd.f32 %v104, %v399
  %v401 = vpop.f32.mrb[0].mxu0
  %v402 = vadd.f32 %v108, %v401
  %403 = vmatprep.mubr.bf16.mxu0 0
  %404 = vmatmul.mubr.bf16.gmra.mrb[0].mxu0 %v207
  %v405 = vpop.f32.mrb[0].mxu0
  %v406 = vadd.f32 %v104, %v405
  %v407 = vpop.f32.mrb[0].mxu0
  %v408 = vadd.f32 %v108, %v407
  %v409 = vpop.f32.mrb[0].mxu0
  %v410 = vadd.f32 %v104, %v409
  %v411 = vpop.f32.mrb[0].mxu0
  %v412 = vadd.f32 %v108, %v411
  %413 = vmatprep.mubr.bf16.mxu0 0
  %414 = vmatmul.mubr.bf16.gmra.mrb[0].mxu0 %v210
  %v415 = vpop.f32.mrb[0].mxu0
  %v416 = vadd.f32 %v104, %v415
  %v417 = vpop.f32.mrb[0].mxu0
  %v418 = vadd.f32 %v108, %v417
  %v419 = vpop.f32.mrb[0].mxu0
  %v420 = vadd.f32 %v104, %v419
  %v421 = vpop.f32.mrb[0].mxu0
  %v422 = vadd.f32 %v108, %v421
  %423 = vmatprep.mubr.bf16.mxu0 0
  %424 = vmatmul.mubr.bf16.gmra.mrb[0].mxu0 %v213
  %v425 = vpop.f32.mrb[0].mxu0
  %v426 = vadd.f32 %v104, %v425
  %v427 = vpop.f32.mrb[0].mxu0
  %v428 = vadd.f32 %v108, %v427
  %v429 = vpop.f32.mrb[0].mxu0
  %v430 = vadd.f32 %v104, %v429
  %v431 = vpop.f32.mrb[0].mxu0
  %v432 = vadd.f32 %v108, %v431
  %433 = vmatprep.mubr.bf16.mxu0 0
  %434 = vmatmul.mubr.bf16.gmra.mrb[0].mxu0 %v216
  %v435 = vpop.f32.mrb[0].mxu0
  %v436 = vadd.f32 %v104, %v435
  %v437 = vpop.f32.mrb[0].mxu0
  %v438 = vadd.f32 %v108, %v437
  %v439 = vpop.f32.mrb[0].mxu0
  %v440 = vadd.f32 %v104, %v439
  %v441 = vpop.f32.mrb[0].mxu0
  %v442 = vadd.f32 %v108, %v441
  %443 = vdwg.mxu0
  %v444 = vld [vmem:[%s3] sm:$0xf]
  %v445 = vld [vmem:[%s4] sm:$0xf]
  %v446 = vadd.f32 %v253, %v255
  %v447 = vadd.f32 %v446, %v366
  %v448 = vadd.f32 %v447, %v368
  %449 = vadd.xlane.f32.xlu0 %v448
  %v450 = vpop.xlane.xlu0 %449
  %v451 = vadd.f32 %v257, %v259
  %v452 = vadd.f32 %v451, %v370
  %v453 = vadd.f32 %v452, %v372
  %454 = vadd.xlane.f32.xlu0 %v453
  %v455 = vpop.xlane.xlu0 %454
  %v456 = vadd.f32 %v263, %v265
  %v457 = vadd.f32 %v456, %v376
  %v458 = vadd.f32 %v457, %v378
  %459 = vadd.xlane.f32.xlu0 %v458
  %v460 = vpop.xlane.xlu0 %459
  %v461 = vadd.f32 %v267, %v269
  %v462 = vadd.f32 %v461, %v380
  %v463 = vadd.f32 %v462, %v382
  %464 = vadd.xlane.f32.xlu0 %v463
  %v465 = vpop.xlane.xlu0 %464
  %v466 = vadd.f32 %v273, %v275
  %v467 = vadd.f32 %v466, %v386
  %v468 = vadd.f32 %v467, %v388
  %469 = vadd.xlane.f32.xlu0 %v468
  %v470 = vpop.xlane.xlu0 %469
  %v471 = vadd.f32 %v277, %v279
  %v472 = vadd.f32 %v471, %v390
  %v473 = vadd.f32 %v472, %v392
  %474 = vadd.xlane.f32.xlu0 %v473
  %v475 = vpop.xlane.xlu0 %474
  %v476 = vadd.f32 %v283, %v285
  %v477 = vadd.f32 %v476, %v396
  %v478 = vadd.f32 %v477, %v398
  %479 = vadd.xlane.f32.xlu0 %v478
  %v480 = vpop.xlane.xlu0 %479
  %v481 = vadd.f32 %v287, %v289
  %v482 = vadd.f32 %v481, %v400
  %v483 = vadd.f32 %v482, %v402
  %484 = vadd.xlane.f32.xlu0 %v483
  %v485 = vpop.xlane.xlu0 %484
  %v486 = vadd.f32 %v293, %v295
  %v487 = vadd.f32 %v486, %v406
  %v488 = vadd.f32 %v487, %v408
  %489 = vadd.xlane.f32.xlu0 %v488
  %v490 = vpop.xlane.xlu0 %489
  %v491 = vadd.f32 %v297, %v299
  %v492 = vadd.f32 %v491, %v410
  %v493 = vadd.f32 %v492, %v412
  %494 = vadd.xlane.f32.xlu0 %v493
  %v495 = vpop.xlane.xlu0 %494
  %v496 = vadd.f32 %v303, %v305
  %v497 = vadd.f32 %v496, %v416
  %v498 = vadd.f32 %v497, %v418
  %499 = vadd.xlane.f32.xlu0 %v498
  %v500 = vpop.xlane.xlu0 %499
  %v501 = vadd.f32 %v307, %v309
  %v502 = vadd.f32 %v501, %v420
  %v503 = vadd.f32 %v502, %v422
  %504 = vadd.xlane.f32.xlu0 %v503
  %v505 = vpop.xlane.xlu0 %504
  %v506 = vadd.f32 %v313, %v315
  %v507 = vadd.f32 %v506, %v426
  %v508 = vadd.f32 %v507, %v428
  %509 = vadd.xlane.f32.xlu0 %v508
  %v510 = vpop.xlane.xlu0 %509
  %v511 = vadd.f32 %v317, %v319
  %v512 = vadd.f32 %v511, %v430
  %v513 = vadd.f32 %v512, %v432
  %514 = vadd.xlane.f32.xlu0 %v513
  %v515 = vpop.xlane.xlu0 %514
  %v516 = vadd.f32 %v323, %v325
  %v517 = vadd.f32 %v516, %v436
  %v518 = vadd.f32 %v517, %v438
  %519 = vadd.xlane.f32.xlu0 %v518
  %v520 = vpop.xlane.xlu0 %519
  %v521 = vadd.f32 %v327, %v329
  %v522 = vadd.f32 %v521, %v440
  %v523 = vadd.f32 %v522, %v442
  %524 = vadd.xlane.f32.xlu0 %v523
  %v525 = vpop.xlane.xlu0 %524
  %v526 = vrcp.pop 512.0
  %v527 = vmul.f32 %v450, %v526
  %v528 = vmul.f32 %v455, %v526
  %v529 = vmul.f32 %v460, %v526
  %v530 = vmul.f32 %v465, %v526
  %v531 = vmul.f32 %v470, %v526
  %v532 = vmul.f32 %v475, %v526
  %v533 = vmul.f32 %v480, %v526
  %v534 = vmul.f32 %v485, %v526
  %v535 = vmul.f32 %v490, %v526
  %v536 = vmul.f32 %v495, %v526
  %v537 = vmul.f32 %v500, %v526
  %v538 = vmul.f32 %v505, %v526
  %v539 = vmul.f32 %v510, %v526
  %v540 = vmul.f32 %v515, %v526
  %v541 = vmul.f32 %v520, %v526
  %v542 = vmul.f32 %v525, %v526
  %v543 = vmul.f32 %v253, %v253
  %v544 = vmul.f32 %v255, %v255
  %v545 = vmul.f32 %v366, %v366
  %v546 = vmul.f32 %v368, %v368
  %v547 = vmul.f32 %v257, %v257
  %v548 = vmul.f32 %v259, %v259
  %v549 = vmul.f32 %v370, %v370
  %v550 = vmul.f32 %v372, %v372
  %v551 = vmul.f32 %v263, %v263
  %v552 = vmul.f32 %v265, %v265
  %v553 = vmul.f32 %v376, %v376
  %v554 = vmul.f32 %v378, %v378
  %v555 = vmul.f32 %v267, %v267
  %v556 = vmul.f32 %v269, %v269
  %v557 = vmul.f32 %v380, %v380
  %v558 = vmul.f32 %v382, %v382
  %v559 = vmul.f32 %v273, %v273
  %v560 = vmul.f32 %v275, %v275
  %v561 = vmul.f32 %v386, %v386
  %v562 = vmul.f32 %v388, %v388
  %v563 = vmul.f32 %v277, %v277
  %v564 = vmul.f32 %v279, %v279
  %v565 = vmul.f32 %v390, %v390
  %v566 = vmul.f32 %v392, %v392
  %v567 = vmul.f32 %v283, %v283
  %v568 = vmul.f32 %v285, %v285
  %v569 = vmul.f32 %v396, %v396
  %v570 = vmul.f32 %v398, %v398
  %v571 = vmul.f32 %v287, %v287
  %v572 = vmul.f32 %v289, %v289
  %v573 = vmul.f32 %v400, %v400
  %v574 = vmul.f32 %v402, %v402
  %v575 = vmul.f32 %v293, %v293
  %v576 = vmul.f32 %v295, %v295
  %v577 = vmul.f32 %v406, %v406
  %v578 = vmul.f32 %v408, %v408
  %v579 = vmul.f32 %v297, %v297
  %v580 = vmul.f32 %v299, %v299
  %v581 = vmul.f32 %v410, %v410
  %v582 = vmul.f32 %v412, %v412
  %v583 = vmul.f32 %v303, %v303
  %v584 = vmul.f32 %v305, %v305
  %v585 = vmul.f32 %v416, %v416
  %v586 = vmul.f32 %v418, %v418
  %v587 = vmul.f32 %v307, %v307
  %v588 = vmul.f32 %v309, %v309
  %v589 = vmul.f32 %v420, %v420
  %v590 = vmul.f32 %v422, %v422
  %v591 = vmul.f32 %v313, %v313
  %v592 = vmul.f32 %v315, %v315
  %v593 = vmul.f32 %v426, %v426
  %v594 = vmul.f32 %v428, %v428
  %v595 = vmul.f32 %v317, %v317
  %v596 = vmul.f32 %v319, %v319
  %v597 = vmul.f32 %v430, %v430
  %v598 = vmul.f32 %v432, %v432
  %v599 = vmul.f32 %v323, %v323
  %v600 = vmul.f32 %v325, %v325
  %v601 = vmul.f32 %v436, %v436
  %v602 = vmul.f32 %v438, %v438
  %v603 = vmul.f32 %v327, %v327
  %v604 = vmul.f32 %v329, %v329
  %v605 = vmul.f32 %v440, %v440
  %v606 = vmul.f32 %v442, %v442
  %v607 = vadd.f32 %v543, %v544
  %v608 = vadd.f32 %v607, %v545
  %v609 = vadd.f32 %v608, %v546
  %610 = vadd.xlane.f32.xlu0 %v609
  %v611 = vpop.xlane.xlu0 %610
  %v612 = vadd.f32 %v547, %v548
  %v613 = vadd.f32 %v612, %v549
  %v614 = vadd.f32 %v613, %v550
  %615 = vadd.xlane.f32.xlu0 %v614
  %v616 = vpop.xlane.xlu0 %615
  %v617 = vadd.f32 %v551, %v552
  %v618 = vadd.f32 %v617, %v553
  %v619 = vadd.f32 %v618, %v554
  %620 = vadd.xlane.f32.xlu0 %v619
  %v621 = vpop.xlane.xlu0 %620
  %v622 = vadd.f32 %v555, %v556
  %v623 = vadd.f32 %v622, %v557
  %v624 = vadd.f32 %v623, %v558
  %625 = vadd.xlane.f32.xlu0 %v624
  %v626 = vpop.xlane.xlu0 %625
  %v627 = vadd.f32 %v559, %v560
  %v628 = vadd.f32 %v627, %v561
  %v629 = vadd.f32 %v628, %v562
  %630 = vadd.xlane.f32.xlu0 %v629
  %v631 = vpop.xlane.xlu0 %630
  %v632 = vadd.f32 %v563, %v564
  %v633 = vadd.f32 %v632, %v565
  %v634 = vadd.f32 %v633, %v566
  %635 = vadd.xlane.f32.xlu0 %v634
  %v636 = vpop.xlane.xlu0 %635
  %v637 = vadd.f32 %v567, %v568
  %v638 = vadd.f32 %v637, %v569
  %v639 = vadd.f32 %v638, %v570
  %640 = vadd.xlane.f32.xlu0 %v639
  %v641 = vpop.xlane.xlu0 %640
  %v642 = vadd.f32 %v571, %v572
  %v643 = vadd.f32 %v642, %v573
  %v644 = vadd.f32 %v643, %v574
  %645 = vadd.xlane.f32.xlu0 %v644
  %v646 = vpop.xlane.xlu0 %645
  %v647 = vadd.f32 %v575, %v576
  %v648 = vadd.f32 %v647, %v577
  %v649 = vadd.f32 %v648, %v578
  %650 = vadd.xlane.f32.xlu0 %v649
  %v651 = vpop.xlane.xlu0 %650
  %v652 = vadd.f32 %v579, %v580
  %v653 = vadd.f32 %v652, %v581
  %v654 = vadd.f32 %v653, %v582
  %655 = vadd.xlane.f32.xlu0 %v654
  %v656 = vpop.xlane.xlu0 %655
  %v657 = vadd.f32 %v583, %v584
  %v658 = vadd.f32 %v657, %v585
  %v659 = vadd.f32 %v658, %v586
  %660 = vadd.xlane.f32.xlu0 %v659
  %v661 = vpop.xlane.xlu0 %660
  %v662 = vadd.f32 %v587, %v588
  %v663 = vadd.f32 %v662, %v589
  %v664 = vadd.f32 %v663, %v590
  %665 = vadd.xlane.f32.xlu0 %v664
  %v666 = vpop.xlane.xlu0 %665
  %v667 = vadd.f32 %v591, %v592
  %v668 = vadd.f32 %v667, %v593
  %v669 = vadd.f32 %v668, %v594
  %670 = vadd.xlane.f32.xlu0 %v669
  %v671 = vpop.xlane.xlu0 %670
  %v672 = vadd.f32 %v595, %v596
  %v673 = vadd.f32 %v672, %v597
  %v674 = vadd.f32 %v673, %v598
  %675 = vadd.xlane.f32.xlu0 %v674
  %v676 = vpop.xlane.xlu0 %675
  %v677 = vadd.f32 %v599, %v600
  %v678 = vadd.f32 %v677, %v601
  %v679 = vadd.f32 %v678, %v602
  %680 = vadd.xlane.f32.xlu0 %v679
  %v681 = vpop.xlane.xlu0 %680
  %v682 = vadd.f32 %v603, %v604
  %v683 = vadd.f32 %v682, %v605
  %v684 = vadd.f32 %v683, %v606
  %685 = vadd.xlane.f32.xlu0 %v684
  %v686 = vpop.xlane.xlu0 %685
  %v687 = vmul.f32 %v611, %v526
  %v688 = vmul.f32 %v616, %v526
  %v689 = vmul.f32 %v621, %v526
  %v690 = vmul.f32 %v626, %v526
  %v691 = vmul.f32 %v631, %v526
  %v692 = vmul.f32 %v636, %v526
  %v693 = vmul.f32 %v641, %v526
  %v694 = vmul.f32 %v646, %v526
  %v695 = vmul.f32 %v651, %v526
  %v696 = vmul.f32 %v656, %v526
  %v697 = vmul.f32 %v661, %v526
  %v698 = vmul.f32 %v666, %v526
  %v699 = vmul.f32 %v671, %v526
  %v700 = vmul.f32 %v676, %v526
  %v701 = vmul.f32 %v681, %v526
  %v702 = vmul.f32 %v686, %v526
  %v703 = vmul.f32 %v527, %v527
  %v704 = vmul.f32 %v528, %v528
  %v705 = vmul.f32 %v529, %v529
  %v706 = vmul.f32 %v530, %v530
  %v707 = vmul.f32 %v531, %v531
  %v708 = vmul.f32 %v532, %v532
  %v709 = vmul.f32 %v533, %v533
  %v710 = vmul.f32 %v534, %v534
  %v711 = vmul.f32 %v535, %v535
  %v712 = vmul.f32 %v536, %v536
  %v713 = vmul.f32 %v537, %v537
  %v714 = vmul.f32 %v538, %v538
  %v715 = vmul.f32 %v539, %v539
  %v716 = vmul.f32 %v540, %v540
  %v717 = vmul.f32 %v541, %v541
  %v718 = vmul.f32 %v542, %v542
  %v719 = vsub.f32 %v687, %v703
  %v720 = vsub.f32 %v688, %v704
  %v721 = vsub.f32 %v689, %v705
  %v722 = vsub.f32 %v690, %v706
  %v723 = vsub.f32 %v691, %v707
  %v724 = vsub.f32 %v692, %v708
  %v725 = vsub.f32 %v693, %v709
  %v726 = vsub.f32 %v694, %v710
  %v727 = vsub.f32 %v695, %v711
  %v728 = vsub.f32 %v696, %v712
  %v729 = vsub.f32 %v697, %v713
  %v730 = vsub.f32 %v698, %v714
  %v731 = vsub.f32 %v699, %v715
  %v732 = vsub.f32 %v700, %v716
  %v733 = vsub.f32 %v701, %v717
  %v734 = vsub.f32 %v702, %v718
  %v735 = vmax.f32 %v719, 0.0
  %v736 = vmax.f32 %v720, 0.0
  %v737 = vmax.f32 %v721, 0.0
  %v738 = vmax.f32 %v722, 0.0
  %v739 = vmax.f32 %v723, 0.0
  %v740 = vmax.f32 %v724, 0.0
  %v741 = vmax.f32 %v725, 0.0
  %v742 = vmax.f32 %v726, 0.0
  %v743 = vmax.f32 %v727, 0.0
  %v744 = vmax.f32 %v728, 0.0
  %v745 = vmax.f32 %v729, 0.0
  %v746 = vmax.f32 %v730, 0.0
  %v747 = vmax.f32 %v731, 0.0
  %v748 = vmax.f32 %v732, 0.0
  %v749 = vmax.f32 %v733, 0.0
  %v750 = vmax.f32 %v734, 0.0
  %v751 = vsub.f32 %v253, %v527
  %v752 = vsub.f32 %v255, %v527
  %v753 = vsub.f32 %v366, %v527
  %v754 = vsub.f32 %v368, %v527
  %v755 = vsub.f32 %v257, %v528
  %v756 = vsub.f32 %v259, %v528
  %v757 = vsub.f32 %v370, %v528
  %v758 = vsub.f32 %v372, %v528
  %v759 = vsub.f32 %v263, %v529
  %v760 = vsub.f32 %v265, %v529
  %v761 = vsub.f32 %v376, %v529
  %v762 = vsub.f32 %v378, %v529
  %v763 = vsub.f32 %v267, %v530
  %v764 = vsub.f32 %v269, %v530
  %v765 = vsub.f32 %v380, %v530
  %v766 = vsub.f32 %v382, %v530
  %v767 = vsub.f32 %v273, %v531
  %v768 = vsub.f32 %v275, %v531
  %v769 = vsub.f32 %v386, %v531
  %v770 = vsub.f32 %v388, %v531
  %v771 = vsub.f32 %v277, %v532
  %v772 = vsub.f32 %v279, %v532
  %v773 = vsub.f32 %v390, %v532
  %v774 = vsub.f32 %v392, %v532
  %v775 = vsub.f32 %v283, %v533
  %v776 = vsub.f32 %v285, %v533
  %v777 = vsub.f32 %v396, %v533
  %v778 = vsub.f32 %v398, %v533
  %v779 = vsub.f32 %v287, %v534
  %v780 = vsub.f32 %v289, %v534
  %v781 = vsub.f32 %v400, %v534
  %v782 = vsub.f32 %v402, %v534
  %v783 = vsub.f32 %v293, %v535
  %v784 = vsub.f32 %v295, %v535
  %v785 = vsub.f32 %v406, %v535
  %v786 = vsub.f32 %v408, %v535
  %v787 = vsub.f32 %v297, %v536
  %v788 = vsub.f32 %v299, %v536
  %v789 = vsub.f32 %v410, %v536
  %v790 = vsub.f32 %v412, %v536
  %v791 = vsub.f32 %v303, %v537
  %v792 = vsub.f32 %v305, %v537
  %v793 = vsub.f32 %v416, %v537
  %v794 = vsub.f32 %v418, %v537
  %v795 = vsub.f32 %v307, %v538
  %v796 = vsub.f32 %v309, %v538
  %v797 = vsub.f32 %v420, %v538
  %v798 = vsub.f32 %v422, %v538
  %v799 = vsub.f32 %v313, %v539
  %v800 = vsub.f32 %v315, %v539
  %v801 = vsub.f32 %v426, %v539
  %v802 = vsub.f32 %v428, %v539
  %v803 = vsub.f32 %v317, %v540
  %v804 = vsub.f32 %v319, %v540
  %v805 = vsub.f32 %v430, %v540
  %v806 = vsub.f32 %v432, %v540
  %v807 = vsub.f32 %v323, %v541
  %v808 = vsub.f32 %v325, %v541
  %v809 = vsub.f32 %v436, %v541
  %v810 = vsub.f32 %v438, %v541
  %v811 = vsub.f32 %v327, %v542
  %v812 = vsub.f32 %v329, %v542
  %v813 = vsub.f32 %v440, %v542
  %v814 = vsub.f32 %v442, %v542
  %v815 = vadd.f32 %v735, 1e-05
  %v816 = vadd.f32 %v736, 1e-05
  %v817 = vadd.f32 %v737, 1e-05
  %v818 = vadd.f32 %v738, 1e-05
  %v819 = vadd.f32 %v739, 1e-05
  %v820 = vadd.f32 %v740, 1e-05
  %v821 = vadd.f32 %v741, 1e-05
  %v822 = vadd.f32 %v742, 1e-05
  %v823 = vadd.f32 %v743, 1e-05
  %v824 = vadd.f32 %v744, 1e-05
  %v825 = vadd.f32 %v745, 1e-05
  %v826 = vadd.f32 %v746, 1e-05
  %v827 = vadd.f32 %v747, 1e-05
  %v828 = vadd.f32 %v748, 1e-05
  %v829 = vadd.f32 %v749, 1e-05
  %v830 = vadd.f32 %v750, 1e-05
  %v831 = vrsqrt.pop %v815
  %v832 = vrsqrt.pop %v816
  %v833 = vrsqrt.pop %v817
  %v834 = vrsqrt.pop %v818
  %v835 = vrsqrt.pop %v819
  %v836 = vrsqrt.pop %v820
  %v837 = vrsqrt.pop %v821
  %v838 = vrsqrt.pop %v822
  %v839 = vrsqrt.pop %v823
  %v840 = vrsqrt.pop %v824
  %v841 = vrsqrt.pop %v825
  %v842 = vrsqrt.pop %v826
  %v843 = vrsqrt.pop %v827
  %v844 = vrsqrt.pop %v828
  %v845 = vrsqrt.pop %v829
  %v846 = vrsqrt.pop %v830
  %v847 = vmul.f32 %v751, %v831
  %v848 = vmul.f32 %v752, %v831
  %v849 = vmul.f32 %v753, %v831
  %v850 = vmul.f32 %v754, %v831
  %v851 = vmul.f32 %v755, %v832
  %v852 = vmul.f32 %v756, %v832
  %v853 = vmul.f32 %v757, %v832
  %v854 = vmul.f32 %v758, %v832
  %v855 = vmul.f32 %v759, %v833
  %v856 = vmul.f32 %v760, %v833
  %v857 = vmul.f32 %v761, %v833
  %v858 = vmul.f32 %v762, %v833
  %v859 = vmul.f32 %v763, %v834
  %v860 = vmul.f32 %v764, %v834
  %v861 = vmul.f32 %v765, %v834
  %v862 = vmul.f32 %v766, %v834
  %v863 = vmul.f32 %v767, %v835
  %v864 = vmul.f32 %v768, %v835
  %v865 = vmul.f32 %v769, %v835
  %v866 = vmul.f32 %v770, %v835
  %v867 = vmul.f32 %v771, %v836
  %v868 = vmul.f32 %v772, %v836
  %v869 = vmul.f32 %v773, %v836
  %v870 = vmul.f32 %v774, %v836
  %v871 = vmul.f32 %v775, %v837
  %v872 = vmul.f32 %v776, %v837
  %v873 = vmul.f32 %v777, %v837
  %v874 = vmul.f32 %v778, %v837
  %v875 = vmul.f32 %v779, %v838
  %v876 = vmul.f32 %v780, %v838
  %v877 = vmul.f32 %v781, %v838
  %v878 = vmul.f32 %v782, %v838
  %v879 = vmul.f32 %v783, %v839
  %v880 = vmul.f32 %v784, %v839
  %v881 = vmul.f32 %v785, %v839
  %v882 = vmul.f32 %v786, %v839
  %v883 = vmul.f32 %v787, %v840
  %v884 = vmul.f32 %v788, %v840
  %v885 = vmul.f32 %v789, %v840
  %v886 = vmul.f32 %v790, %v840
  %v887 = vmul.f32 %v791, %v841
  %v888 = vmul.f32 %v792, %v841
  %v889 = vmul.f32 %v793, %v841
  %v890 = vmul.f32 %v794, %v841
  %v891 = vmul.f32 %v795, %v842
  %v892 = vmul.f32 %v796, %v842
  %v893 = vmul.f32 %v797, %v842
  %v894 = vmul.f32 %v798, %v842
  %v895 = vmul.f32 %v799, %v843
  %v896 = vmul.f32 %v800, %v843
  %v897 = vmul.f32 %v801, %v843
  %v898 = vmul.f32 %v802, %v843
  %v899 = vmul.f32 %v803, %v844
  %v900 = vmul.f32 %v804, %v844
  %v901 = vmul.f32 %v805, %v844
  %v902 = vmul.f32 %v806, %v844
  %v903 = vmul.f32 %v807, %v845
  %v904 = vmul.f32 %v808, %v845
  %v905 = vmul.f32 %v809, %v845
  %v906 = vmul.f32 %v810, %v845
  %v907 = vmul.f32 %v811, %v846
  %v908 = vmul.f32 %v812, %v846
  %v909 = vmul.f32 %v813, %v846
  %v910 = vmul.f32 %v814, %v846
  %v912 = vlaneseq
  %v913 = vshrl.u32 %v912, 7
  %v914 = vsub.s32 0, %v913
  %v915 = vrot.slane %v444, %v914
  %v916 = vlaneseq
  %v917 = vshrl.u32 %v916, 7
  %v918 = vsub.s32 1, %v917
  %v919 = vrot.slane %v444, %v918
  %v920 = vlaneseq
  %v921 = vshrl.u32 %v920, 7
  %v922 = vsub.s32 2, %v921
  %v923 = vrot.slane %v444, %v922
  %v924 = vlaneseq
  %v925 = vshrl.u32 %v924, 7
  %v926 = vsub.s32 3, %v925
  %v927 = vrot.slane %v444, %v926
  %v932 = vmul.f32 %v847, %v915
  %v933 = vmul.f32 %v848, %v919
  %v934 = vmul.f32 %v849, %v923
  %v935 = vmul.f32 %v850, %v927
  %v936 = vmul.f32 %v851, %v915
  %v937 = vmul.f32 %v852, %v919
  %v938 = vmul.f32 %v853, %v923
  %v939 = vmul.f32 %v854, %v927
  %v940 = vmul.f32 %v855, %v915
  %v941 = vmul.f32 %v856, %v919
  %v942 = vmul.f32 %v857, %v923
  %v943 = vmul.f32 %v858, %v927
  %v944 = vmul.f32 %v859, %v915
  %v945 = vmul.f32 %v860, %v919
  %v946 = vmul.f32 %v861, %v923
  %v947 = vmul.f32 %v862, %v927
  %v948 = vmul.f32 %v863, %v915
  %v949 = vmul.f32 %v864, %v919
  %v950 = vmul.f32 %v865, %v923
  %v951 = vmul.f32 %v866, %v927
  %v952 = vmul.f32 %v867, %v915
  %v953 = vmul.f32 %v868, %v919
  %v954 = vmul.f32 %v869, %v923
  %v955 = vmul.f32 %v870, %v927
  %v956 = vmul.f32 %v871, %v915
  %v957 = vmul.f32 %v872, %v919
  %v958 = vmul.f32 %v873, %v923
  %v959 = vmul.f32 %v874, %v927
  %v960 = vmul.f32 %v875, %v915
  %v961 = vmul.f32 %v876, %v919
  %v962 = vmul.f32 %v877, %v923
  %v963 = vmul.f32 %v878, %v927
  %v964 = vmul.f32 %v879, %v915
  %v965 = vmul.f32 %v880, %v919
  %v966 = vmul.f32 %v881, %v923
  %v967 = vmul.f32 %v882, %v927
  %v968 = vmul.f32 %v883, %v915
  %v969 = vmul.f32 %v884, %v919
  %v970 = vmul.f32 %v885, %v923
  %v971 = vmul.f32 %v886, %v927
  %v972 = vmul.f32 %v887, %v915
  %v973 = vmul.f32 %v888, %v919
  %v974 = vmul.f32 %v889, %v923
  %v975 = vmul.f32 %v890, %v927
  %v976 = vmul.f32 %v891, %v915
  %v977 = vmul.f32 %v892, %v919
  %v978 = vmul.f32 %v893, %v923
  %v979 = vmul.f32 %v894, %v927
  %v980 = vmul.f32 %v895, %v915
  %v981 = vmul.f32 %v896, %v919
  %v982 = vmul.f32 %v897, %v923
  %v983 = vmul.f32 %v898, %v927
  %v984 = vmul.f32 %v899, %v915
  %v985 = vmul.f32 %v900, %v919
  %v986 = vmul.f32 %v901, %v923
  %v987 = vmul.f32 %v902, %v927
  %v988 = vmul.f32 %v903, %v915
  %v989 = vmul.f32 %v904, %v919
  %v990 = vmul.f32 %v905, %v923
  %v991 = vmul.f32 %v906, %v927
  %v992 = vmul.f32 %v907, %v915
  %v993 = vmul.f32 %v908, %v919
  %v994 = vmul.f32 %v909, %v923
  %v995 = vmul.f32 %v910, %v927
  %v997 = vlaneseq
  %v998 = vshrl.u32 %v997, 7
  %v999 = vsub.s32 0, %v998
  %v1000 = vrot.slane %v445, %v999
  %v1001 = vlaneseq
  %v1002 = vshrl.u32 %v1001, 7
  %v1003 = vsub.s32 1, %v1002
  %v1004 = vrot.slane %v445, %v1003
  %v1005 = vlaneseq
  %v1006 = vshrl.u32 %v1005, 7
  %v1007 = vsub.s32 2, %v1006
  %v1008 = vrot.slane %v445, %v1007
  %v1009 = vlaneseq
  %v1010 = vshrl.u32 %v1009, 7
  %v1011 = vsub.s32 3, %v1010
  %v1012 = vrot.slane %v445, %v1011
  %v1017 = vadd.f32 %v932, %v1000
  %v1018 = vadd.f32 %v933, %v1004
  %v1019 = vadd.f32 %v934, %v1008
  %v1020 = vadd.f32 %v935, %v1012
  %v1021 = vadd.f32 %v936, %v1000
  %v1022 = vadd.f32 %v937, %v1004
  %v1023 = vadd.f32 %v938, %v1008
  %v1024 = vadd.f32 %v939, %v1012
  %v1025 = vadd.f32 %v940, %v1000
  %v1026 = vadd.f32 %v941, %v1004
  %v1027 = vadd.f32 %v942, %v1008
  %v1028 = vadd.f32 %v943, %v1012
  %v1029 = vadd.f32 %v944, %v1000
  %v1030 = vadd.f32 %v945, %v1004
  %v1031 = vadd.f32 %v946, %v1008
  %v1032 = vadd.f32 %v947, %v1012
  %v1033 = vadd.f32 %v948, %v1000
  %v1034 = vadd.f32 %v949, %v1004
  %v1035 = vadd.f32 %v950, %v1008
  %v1036 = vadd.f32 %v951, %v1012
  %v1037 = vadd.f32 %v952, %v1000
  %v1038 = vadd.f32 %v953, %v1004
  %v1039 = vadd.f32 %v954, %v1008
  %v1040 = vadd.f32 %v955, %v1012
  %v1041 = vadd.f32 %v956, %v1000
  %v1042 = vadd.f32 %v957, %v1004
  %v1043 = vadd.f32 %v958, %v1008
  %v1044 = vadd.f32 %v959, %v1012
  %v1045 = vadd.f32 %v960, %v1000
  %v1046 = vadd.f32 %v961, %v1004
  %v1047 = vadd.f32 %v962, %v1008
  %v1048 = vadd.f32 %v963, %v1012
  %v1049 = vadd.f32 %v964, %v1000
  %v1050 = vadd.f32 %v965, %v1004
  %v1051 = vadd.f32 %v966, %v1008
  %v1052 = vadd.f32 %v967, %v1012
  %v1053 = vadd.f32 %v968, %v1000
  %v1054 = vadd.f32 %v969, %v1004
  %v1055 = vadd.f32 %v970, %v1008
  %v1056 = vadd.f32 %v971, %v1012
  %v1057 = vadd.f32 %v972, %v1000
  %v1058 = vadd.f32 %v973, %v1004
  %v1059 = vadd.f32 %v974, %v1008
  %v1060 = vadd.f32 %v975, %v1012
  %v1061 = vadd.f32 %v976, %v1000
  %v1062 = vadd.f32 %v977, %v1004
  %v1063 = vadd.f32 %v978, %v1008
  %v1064 = vadd.f32 %v979, %v1012
  %v1065 = vadd.f32 %v980, %v1000
  %v1066 = vadd.f32 %v981, %v1004
  %v1067 = vadd.f32 %v982, %v1008
  %v1068 = vadd.f32 %v983, %v1012
  %v1069 = vadd.f32 %v984, %v1000
  %v1070 = vadd.f32 %v985, %v1004
  %v1071 = vadd.f32 %v986, %v1008
  %v1072 = vadd.f32 %v987, %v1012
  %v1073 = vadd.f32 %v988, %v1000
  %v1074 = vadd.f32 %v989, %v1004
  %v1075 = vadd.f32 %v990, %v1008
  %v1076 = vadd.f32 %v991, %v1012
  %v1077 = vadd.f32 %v992, %v1000
  %v1078 = vadd.f32 %v993, %v1004
  %v1079 = vadd.f32 %v994, %v1008
  %v1080 = vadd.f32 %v995, %v1012
  %v1081 = vmul.f32 %v1017, 0.2
  %v1082 = vmul.f32 %v1018, 0.2
  %v1083 = vmul.f32 %v1019, 0.2
  %v1084 = vmul.f32 %v1020, 0.2
  %v1085 = vmul.f32 %v1021, 0.2
  %v1086 = vmul.f32 %v1022, 0.2
  %v1087 = vmul.f32 %v1023, 0.2
  %v1088 = vmul.f32 %v1024, 0.2
  %v1089 = vmul.f32 %v1025, 0.2
  %v1090 = vmul.f32 %v1026, 0.2
  %v1091 = vmul.f32 %v1027, 0.2
  %v1092 = vmul.f32 %v1028, 0.2
  %v1093 = vmul.f32 %v1029, 0.2
  %v1094 = vmul.f32 %v1030, 0.2
  %v1095 = vmul.f32 %v1031, 0.2
  %v1096 = vmul.f32 %v1032, 0.2
  %v1097 = vmul.f32 %v1033, 0.2
  %v1098 = vmul.f32 %v1034, 0.2
  %v1099 = vmul.f32 %v1035, 0.2
  %v1100 = vmul.f32 %v1036, 0.2
  %v1101 = vmul.f32 %v1037, 0.2
  %v1102 = vmul.f32 %v1038, 0.2
  %v1103 = vmul.f32 %v1039, 0.2
  %v1104 = vmul.f32 %v1040, 0.2
  %v1105 = vmul.f32 %v1041, 0.2
  %v1106 = vmul.f32 %v1042, 0.2
  %v1107 = vmul.f32 %v1043, 0.2
  %v1108 = vmul.f32 %v1044, 0.2
  %v1109 = vmul.f32 %v1045, 0.2
  %v1110 = vmul.f32 %v1046, 0.2
  %v1111 = vmul.f32 %v1047, 0.2
  %v1112 = vmul.f32 %v1048, 0.2
  %v1113 = vmul.f32 %v1049, 0.2
  %v1114 = vmul.f32 %v1050, 0.2
  %v1115 = vmul.f32 %v1051, 0.2
  %v1116 = vmul.f32 %v1052, 0.2
  %v1117 = vmul.f32 %v1053, 0.2
  %v1118 = vmul.f32 %v1054, 0.2
  %v1119 = vmul.f32 %v1055, 0.2
  %v1120 = vmul.f32 %v1056, 0.2
  %v1121 = vmul.f32 %v1057, 0.2
  %v1122 = vmul.f32 %v1058, 0.2
  %v1123 = vmul.f32 %v1059, 0.2
  %v1124 = vmul.f32 %v1060, 0.2
  %v1125 = vmul.f32 %v1061, 0.2
  %v1126 = vmul.f32 %v1062, 0.2
  %v1127 = vmul.f32 %v1063, 0.2
  %v1128 = vmul.f32 %v1064, 0.2
  %v1129 = vmul.f32 %v1065, 0.2
  %v1130 = vmul.f32 %v1066, 0.2
  %v1131 = vmul.f32 %v1067, 0.2
  %v1132 = vmul.f32 %v1068, 0.2
  %v1133 = vmul.f32 %v1069, 0.2
  %v1134 = vmul.f32 %v1070, 0.2
  %v1135 = vmul.f32 %v1071, 0.2
  %v1136 = vmul.f32 %v1072, 0.2
  %v1137 = vmul.f32 %v1073, 0.2
  %v1138 = vmul.f32 %v1074, 0.2
  %v1139 = vmul.f32 %v1075, 0.2
  %v1140 = vmul.f32 %v1076, 0.2
  %v1141 = vmul.f32 %v1077, 0.2
  %v1142 = vmul.f32 %v1078, 0.2
  %v1143 = vmul.f32 %v1079, 0.2
  %v1144 = vmul.f32 %v1080, 0.2
  %v1145 = vmax.f32 %v1017, %v1081
  %v1146 = vmax.f32 %v1018, %v1082
  %v1147 = vmax.f32 %v1019, %v1083
  %v1148 = vmax.f32 %v1020, %v1084
  %v1149 = vmax.f32 %v1021, %v1085
  %v1150 = vmax.f32 %v1022, %v1086
  %v1151 = vmax.f32 %v1023, %v1087
  %v1152 = vmax.f32 %v1024, %v1088
  %v1153 = vmax.f32 %v1025, %v1089
  %v1154 = vmax.f32 %v1026, %v1090
  %v1155 = vmax.f32 %v1027, %v1091
  %v1156 = vmax.f32 %v1028, %v1092
  %v1157 = vmax.f32 %v1029, %v1093
  %v1158 = vmax.f32 %v1030, %v1094
  %v1159 = vmax.f32 %v1031, %v1095
  %v1160 = vmax.f32 %v1032, %v1096
  %v1161 = vmax.f32 %v1033, %v1097
  %v1162 = vmax.f32 %v1034, %v1098
  %v1163 = vmax.f32 %v1035, %v1099
  %v1164 = vmax.f32 %v1036, %v1100
  %v1165 = vmax.f32 %v1037, %v1101
  %v1166 = vmax.f32 %v1038, %v1102
  %v1167 = vmax.f32 %v1039, %v1103
  %v1168 = vmax.f32 %v1040, %v1104
  %v1169 = vmax.f32 %v1041, %v1105
  %v1170 = vmax.f32 %v1042, %v1106
  %v1171 = vmax.f32 %v1043, %v1107
  %v1172 = vmax.f32 %v1044, %v1108
  %v1173 = vmax.f32 %v1045, %v1109
  %v1174 = vmax.f32 %v1046, %v1110
  %v1175 = vmax.f32 %v1047, %v1111
  %v1176 = vmax.f32 %v1048, %v1112
  %v1177 = vmax.f32 %v1049, %v1113
  %v1178 = vmax.f32 %v1050, %v1114
  %v1179 = vmax.f32 %v1051, %v1115
  %v1180 = vmax.f32 %v1052, %v1116
  %v1181 = vmax.f32 %v1053, %v1117
  %v1182 = vmax.f32 %v1054, %v1118
  %v1183 = vmax.f32 %v1055, %v1119
  %v1184 = vmax.f32 %v1056, %v1120
  %v1185 = vmax.f32 %v1057, %v1121
  %v1186 = vmax.f32 %v1058, %v1122
  %v1187 = vmax.f32 %v1059, %v1123
  %v1188 = vmax.f32 %v1060, %v1124
  %v1189 = vmax.f32 %v1061, %v1125
  %v1190 = vmax.f32 %v1062, %v1126
  %v1191 = vmax.f32 %v1063, %v1127
  %v1192 = vmax.f32 %v1064, %v1128
  %v1193 = vmax.f32 %v1065, %v1129
  %v1194 = vmax.f32 %v1066, %v1130
  %v1195 = vmax.f32 %v1067, %v1131
  %v1196 = vmax.f32 %v1068, %v1132
  %v1197 = vmax.f32 %v1069, %v1133
  %v1198 = vmax.f32 %v1070, %v1134
  %v1199 = vmax.f32 %v1071, %v1135
  %v1200 = vmax.f32 %v1072, %v1136
  %v1201 = vmax.f32 %v1073, %v1137
  %v1202 = vmax.f32 %v1074, %v1138
  %v1203 = vmax.f32 %v1075, %v1139
  %v1204 = vmax.f32 %v1076, %v1140
  %v1205 = vmax.f32 %v1077, %v1141
  %v1206 = vmax.f32 %v1078, %v1142
  %v1207 = vmax.f32 %v1079, %v1143
  %v1208 = vmax.f32 %v1080, %v1144
  %v1209 = vpack.c.bf16 %v1149, %v1145
  %v1210 = vpack.c.bf16 %v1150, %v1146
  %v1211 = vpack.c.bf16 %v1151, %v1147
  %v1212 = vpack.c.bf16 %v1152, %v1148
  %v1213 = vpack.c.bf16 %v1157, %v1153
  %v1214 = vpack.c.bf16 %v1158, %v1154
  %v1215 = vpack.c.bf16 %v1159, %v1155
  %v1216 = vpack.c.bf16 %v1160, %v1156
  %v1217 = vpack.c.bf16 %v1165, %v1161
  %v1218 = vpack.c.bf16 %v1166, %v1162
  %v1219 = vpack.c.bf16 %v1167, %v1163
  %v1220 = vpack.c.bf16 %v1168, %v1164
  %v1221 = vpack.c.bf16 %v1173, %v1169
  %v1222 = vpack.c.bf16 %v1174, %v1170
  %v1223 = vpack.c.bf16 %v1175, %v1171
  %v1224 = vpack.c.bf16 %v1176, %v1172
  %v1225 = vpack.c.bf16 %v1181, %v1177
  %v1226 = vpack.c.bf16 %v1182, %v1178
  %v1227 = vpack.c.bf16 %v1183, %v1179
  %v1228 = vpack.c.bf16 %v1184, %v1180
  %v1229 = vpack.c.bf16 %v1189, %v1185
  %v1230 = vpack.c.bf16 %v1190, %v1186
  %v1231 = vpack.c.bf16 %v1191, %v1187
  %v1232 = vpack.c.bf16 %v1192, %v1188
  %v1233 = vpack.c.bf16 %v1197, %v1193
  %v1234 = vpack.c.bf16 %v1198, %v1194
  %v1235 = vpack.c.bf16 %v1199, %v1195
  %v1236 = vpack.c.bf16 %v1200, %v1196
  %v1237 = vpack.c.bf16 %v1205, %v1201
  %v1238 = vpack.c.bf16 %v1206, %v1202
  %v1239 = vpack.c.bf16 %v1207, %v1203
  %v1240 = vpack.c.bf16 %v1208, %v1204
  %v1241 = vld [vmem:[%s5] sm:$0xff]
  %v1242 = vld [vmem:[%s5 + $0x8] sm:$0xff]
  %v1243 = vld [vmem:[%s5 + $0x10] sm:$0xff]
  %v1244 = vld [vmem:[%s5 + $0x18] sm:$0xff]
  %v1245 = vld [vmem:[%s5 + $0x20] sm:$0xff]
  %v1246 = vld [vmem:[%s5 + $0x28] sm:$0xff]
  %v1247 = vld [vmem:[%s5 + $0x30] sm:$0xff]
  %v1248 = vld [vmem:[%s5 + $0x38] sm:$0xff]
  %v1249 = vld [vmem:[%s5 + $0x40] sm:$0xff]
  %v1250 = vld [vmem:[%s5 + $0x48] sm:$0xff]
  %v1251 = vld [vmem:[%s5 + $0x50] sm:$0xff]
  %v1252 = vld [vmem:[%s5 + $0x58] sm:$0xff]
  %v1253 = vld [vmem:[%s5 + $0x60] sm:$0xff]
  %v1254 = vld [vmem:[%s5 + $0x68] sm:$0xff]
  %v1255 = vld [vmem:[%s5 + $0x70] sm:$0xff]
  %v1256 = vld [vmem:[%s5 + $0x78] sm:$0xff]
  %v1257 = vld [vmem:[%s5 + $0x80] sm:$0xff]
  %v1258 = vld [vmem:[%s5 + $0x88] sm:$0xff]
  %v1259 = vld [vmem:[%s5 + $0x90] sm:$0xff]
  %v1260 = vld [vmem:[%s5 + $0x98] sm:$0xff]
  %v1261 = vld [vmem:[%s5 + $0xa0] sm:$0xff]
  %v1262 = vld [vmem:[%s5 + $0xa8] sm:$0xff]
  %v1263 = vld [vmem:[%s5 + $0xb0] sm:$0xff]
  %v1264 = vld [vmem:[%s5 + $0xb8] sm:$0xff]
  %v1265 = vld [vmem:[%s5 + $0xc0] sm:$0xff]
  %v1266 = vld [vmem:[%s5 + $0xc8] sm:$0xff]
  %v1267 = vld [vmem:[%s5 + $0xd0] sm:$0xff]
  %v1268 = vld [vmem:[%s5 + $0xd8] sm:$0xff]
  %v1269 = vld [vmem:[%s5 + $0xe0] sm:$0xff]
  %v1270 = vld [vmem:[%s5 + $0xe8] sm:$0xff]
  %v1271 = vld [vmem:[%s5 + $0xf0] sm:$0xff]
  %v1272 = vld [vmem:[%s5 + $0xf8] sm:$0xff]
  %v1273 = vld [vmem:[%s5 + $0x100] sm:$0xff]
  %v1274 = vld [vmem:[%s5 + $0x108] sm:$0xff]
  %v1275 = vld [vmem:[%s5 + $0x110] sm:$0xff]
  %v1276 = vld [vmem:[%s5 + $0x118] sm:$0xff]
  %v1277 = vld [vmem:[%s5 + $0x120] sm:$0xff]
  %v1278 = vld [vmem:[%s5 + $0x128] sm:$0xff]
  %v1279 = vld [vmem:[%s5 + $0x130] sm:$0xff]
  %v1280 = vld [vmem:[%s5 + $0x138] sm:$0xff]
  %v1281 = vld [vmem:[%s5 + $0x140] sm:$0xff]
  %v1282 = vld [vmem:[%s5 + $0x148] sm:$0xff]
  %v1283 = vld [vmem:[%s5 + $0x150] sm:$0xff]
  %v1284 = vld [vmem:[%s5 + $0x158] sm:$0xff]
  %v1285 = vld [vmem:[%s5 + $0x160] sm:$0xff]
  %v1286 = vld [vmem:[%s5 + $0x168] sm:$0xff]
  %v1287 = vld [vmem:[%s5 + $0x170] sm:$0xff]
  %v1288 = vld [vmem:[%s5 + $0x178] sm:$0xff]
  %v1289 = vld [vmem:[%s5 + $0x180] sm:$0xff]
  %v1290 = vld [vmem:[%s5 + $0x188] sm:$0xff]
  %v1291 = vld [vmem:[%s5 + $0x190] sm:$0xff]
  %v1292 = vld [vmem:[%s5 + $0x198] sm:$0xff]
  %v1293 = vld [vmem:[%s5 + $0x1a0] sm:$0xff]
  %v1294 = vld [vmem:[%s5 + $0x1a8] sm:$0xff]
  %v1295 = vld [vmem:[%s5 + $0x1b0] sm:$0xff]
  %v1296 = vld [vmem:[%s5 + $0x1b8] sm:$0xff]
  %v1297 = vld [vmem:[%s5 + $0x1c0] sm:$0xff]
  %v1298 = vld [vmem:[%s5 + $0x1c8] sm:$0xff]
  %v1299 = vld [vmem:[%s5 + $0x1d0] sm:$0xff]
  %v1300 = vld [vmem:[%s5 + $0x1d8] sm:$0xff]
  %v1301 = vld [vmem:[%s5 + $0x1e0] sm:$0xff]
  %v1302 = vld [vmem:[%s5 + $0x1e8] sm:$0xff]
  %v1303 = vld [vmem:[%s5 + $0x1f0] sm:$0xff]
  %v1304 = vld [vmem:[%s5 + $0x1f8] sm:$0xff]
  %v1305 = vld [vmem:[%s6] sm:$0x3]
  %v1307 = vlaneseq
  %v1308 = vshrl.u32 %v1307, 7
  %v1309 = vsub.s32 0, %v1308
  %v1310 = vrot.slane %v1305, %v1309
  %v1311 = vlaneseq
  %v1312 = vshrl.u32 %v1311, 7
  %v1313 = vsub.s32 1, %v1312
  %v1314 = vrot.slane %v1305, %v1313
  %v1381 = vunpack.c.l.b16 %v1241
  %v1382 = vunpack.c.h.b16 %v1241
  %v1383 = vunpack.c.l.b16 %v1242
  %v1384 = vunpack.c.h.b16 %v1242
  %v1385 = vunpack.c.l.b16 %v1243
  %v1386 = vunpack.c.h.b16 %v1243
  %v1387 = vunpack.c.l.b16 %v1244
  %v1388 = vunpack.c.h.b16 %v1244
  %v1389 = vunpack.c.l.b16 %v1245
  %v1390 = vunpack.c.h.b16 %v1245
  %v1391 = vunpack.c.l.b16 %v1246
  %v1392 = vunpack.c.h.b16 %v1246
  %v1393 = vunpack.c.l.b16 %v1247
  %v1394 = vunpack.c.h.b16 %v1247
  %v1395 = vunpack.c.l.b16 %v1248
  %v1396 = vunpack.c.h.b16 %v1248
  %v1397 = vunpack.c.l.b16 %v1249
  %v1398 = vunpack.c.h.b16 %v1249
  %v1399 = vunpack.c.l.b16 %v1250
  %v1400 = vunpack.c.h.b16 %v1250
  %v1401 = vunpack.c.l.b16 %v1251
  %v1402 = vunpack.c.h.b16 %v1251
  %v1403 = vunpack.c.l.b16 %v1252
  %v1404 = vunpack.c.h.b16 %v1252
  %v1405 = vunpack.c.l.b16 %v1253
  %v1406 = vunpack.c.h.b16 %v1253
  %v1407 = vunpack.c.l.b16 %v1254
  %v1408 = vunpack.c.h.b16 %v1254
  %v1409 = vunpack.c.l.b16 %v1255
  %v1410 = vunpack.c.h.b16 %v1255
  %v1411 = vunpack.c.l.b16 %v1256
  %v1412 = vunpack.c.h.b16 %v1256
  %v1413 = vunpack.c.l.b16 %v1257
  %v1414 = vunpack.c.h.b16 %v1257
  %v1415 = vunpack.c.l.b16 %v1258
  %v1416 = vunpack.c.h.b16 %v1258
  %v1417 = vunpack.c.l.b16 %v1259
  %v1418 = vunpack.c.h.b16 %v1259
  %v1419 = vunpack.c.l.b16 %v1260
  %v1420 = vunpack.c.h.b16 %v1260
  %v1421 = vunpack.c.l.b16 %v1261
  %v1422 = vunpack.c.h.b16 %v1261
  %v1423 = vunpack.c.l.b16 %v1262
  %v1424 = vunpack.c.h.b16 %v1262
  %v1425 = vunpack.c.l.b16 %v1263
  %v1426 = vunpack.c.h.b16 %v1263
  %v1427 = vunpack.c.l.b16 %v1264
  %v1428 = vunpack.c.h.b16 %v1264
  %v1429 = vunpack.c.l.b16 %v1265
  %v1430 = vunpack.c.h.b16 %v1265
  %v1431 = vunpack.c.l.b16 %v1266
  %v1432 = vunpack.c.h.b16 %v1266
  %v1433 = vunpack.c.l.b16 %v1267
  %v1434 = vunpack.c.h.b16 %v1267
  %v1435 = vunpack.c.l.b16 %v1268
  %v1436 = vunpack.c.h.b16 %v1268
  %v1437 = vunpack.c.l.b16 %v1269
  %v1438 = vunpack.c.h.b16 %v1269
  %v1439 = vunpack.c.l.b16 %v1270
  %v1440 = vunpack.c.h.b16 %v1270
  %v1441 = vunpack.c.l.b16 %v1271
  %v1442 = vunpack.c.h.b16 %v1271
  %v1443 = vunpack.c.l.b16 %v1272
  %v1444 = vunpack.c.h.b16 %v1272
  %v1445 = vunpack.c.l.b16 %v1273
  %v1446 = vunpack.c.h.b16 %v1273
  %v1447 = vunpack.c.l.b16 %v1274
  %v1448 = vunpack.c.h.b16 %v1274
  %v1449 = vunpack.c.l.b16 %v1275
  %v1450 = vunpack.c.h.b16 %v1275
  %v1451 = vunpack.c.l.b16 %v1276
  %v1452 = vunpack.c.h.b16 %v1276
  %v1453 = vunpack.c.l.b16 %v1277
  %v1454 = vunpack.c.h.b16 %v1277
  %v1455 = vunpack.c.l.b16 %v1278
  %v1456 = vunpack.c.h.b16 %v1278
  %v1457 = vunpack.c.l.b16 %v1279
  %v1458 = vunpack.c.h.b16 %v1279
  %v1459 = vunpack.c.l.b16 %v1280
  %v1460 = vunpack.c.h.b16 %v1280
  %v1461 = vunpack.c.l.b16 %v1281
  %v1462 = vunpack.c.h.b16 %v1281
  %v1463 = vunpack.c.l.b16 %v1282
  %v1464 = vunpack.c.h.b16 %v1282
  %v1465 = vunpack.c.l.b16 %v1283
  %v1466 = vunpack.c.h.b16 %v1283
  %v1467 = vunpack.c.l.b16 %v1284
  %v1468 = vunpack.c.h.b16 %v1284
  %v1469 = vunpack.c.l.b16 %v1285
  %v1470 = vunpack.c.h.b16 %v1285
  %v1471 = vunpack.c.l.b16 %v1286
  %v1472 = vunpack.c.h.b16 %v1286
  %v1473 = vunpack.c.l.b16 %v1287
  %v1474 = vunpack.c.h.b16 %v1287
  %v1475 = vunpack.c.l.b16 %v1288
  %v1476 = vunpack.c.h.b16 %v1288
  %v1477 = vunpack.c.l.b16 %v1289
  %v1478 = vunpack.c.h.b16 %v1289
  %v1479 = vunpack.c.l.b16 %v1290
  %v1480 = vunpack.c.h.b16 %v1290
  %v1481 = vunpack.c.l.b16 %v1291
  %v1482 = vunpack.c.h.b16 %v1291
  %v1483 = vunpack.c.l.b16 %v1292
  %v1484 = vunpack.c.h.b16 %v1292
  %v1485 = vunpack.c.l.b16 %v1293
  %v1486 = vunpack.c.h.b16 %v1293
  %v1487 = vunpack.c.l.b16 %v1294
  %v1488 = vunpack.c.h.b16 %v1294
  %v1489 = vunpack.c.l.b16 %v1295
  %v1490 = vunpack.c.h.b16 %v1295
  %v1491 = vunpack.c.l.b16 %v1296
  %v1492 = vunpack.c.h.b16 %v1296
  %v1493 = vunpack.c.l.b16 %v1297
  %v1494 = vunpack.c.h.b16 %v1297
  %v1495 = vunpack.c.l.b16 %v1298
  %v1496 = vunpack.c.h.b16 %v1298
  %v1497 = vunpack.c.l.b16 %v1299
  %v1498 = vunpack.c.h.b16 %v1299
  %v1499 = vunpack.c.l.b16 %v1300
  %v1500 = vunpack.c.h.b16 %v1300
  %v1501 = vunpack.c.l.b16 %v1301
  %v1502 = vunpack.c.h.b16 %v1301
  %v1503 = vunpack.c.l.b16 %v1302
  %v1504 = vunpack.c.h.b16 %v1302
  %v1505 = vunpack.c.l.b16 %v1303
  %v1506 = vunpack.c.h.b16 %v1303
  %v1507 = vunpack.c.l.b16 %v1304
  %v1508 = vunpack.c.h.b16 %v1304
  %v1509 = vpack.c.b16 %v1383, %v1381
  %v1510 = vpack.c.b16 %v1384, %v1382
  %v1511 = vpack.c.b16 %v1387, %v1385
  %v1512 = vpack.c.b16 %v1388, %v1386
  %v1513 = vpack.c.b16 %v1391, %v1389
  %v1514 = vpack.c.b16 %v1392, %v1390
  %v1515 = vpack.c.b16 %v1395, %v1393
  %v1516 = vpack.c.b16 %v1396, %v1394
  %v1517 = vpack.c.b16 %v1399, %v1397
  %v1518 = vpack.c.b16 %v1400, %v1398
  %v1519 = vpack.c.b16 %v1403, %v1401
  %v1520 = vpack.c.b16 %v1404, %v1402
  %v1521 = vpack.c.b16 %v1407, %v1405
  %v1522 = vpack.c.b16 %v1408, %v1406
  %v1523 = vpack.c.b16 %v1411, %v1409
  %v1524 = vpack.c.b16 %v1412, %v1410
  %v1525 = vpack.c.b16 %v1415, %v1413
  %v1526 = vpack.c.b16 %v1416, %v1414
  %v1527 = vpack.c.b16 %v1419, %v1417
  %v1528 = vpack.c.b16 %v1420, %v1418
  %v1529 = vpack.c.b16 %v1423, %v1421
  %v1530 = vpack.c.b16 %v1424, %v1422
  %v1531 = vpack.c.b16 %v1427, %v1425
  %v1532 = vpack.c.b16 %v1428, %v1426
  %v1533 = vpack.c.b16 %v1431, %v1429
  %v1534 = vpack.c.b16 %v1432, %v1430
  %v1535 = vpack.c.b16 %v1435, %v1433
  %v1536 = vpack.c.b16 %v1436, %v1434
  %v1537 = vpack.c.b16 %v1439, %v1437
  %v1538 = vpack.c.b16 %v1440, %v1438
  %v1539 = vpack.c.b16 %v1443, %v1441
  %v1540 = vpack.c.b16 %v1444, %v1442
  %v1541 = vpack.c.b16 %v1447, %v1445
  %v1542 = vpack.c.b16 %v1448, %v1446
  %v1543 = vpack.c.b16 %v1451, %v1449
  %v1544 = vpack.c.b16 %v1452, %v1450
  %v1545 = vpack.c.b16 %v1455, %v1453
  %v1546 = vpack.c.b16 %v1456, %v1454
  %v1547 = vpack.c.b16 %v1459, %v1457
  %v1548 = vpack.c.b16 %v1460, %v1458
  %v1549 = vpack.c.b16 %v1463, %v1461
  %v1550 = vpack.c.b16 %v1464, %v1462
  %v1551 = vpack.c.b16 %v1467, %v1465
  %v1552 = vpack.c.b16 %v1468, %v1466
  %v1553 = vpack.c.b16 %v1471, %v1469
  %v1554 = vpack.c.b16 %v1472, %v1470
  %v1555 = vpack.c.b16 %v1475, %v1473
  %v1556 = vpack.c.b16 %v1476, %v1474
  %v1557 = vpack.c.b16 %v1479, %v1477
  %v1558 = vpack.c.b16 %v1480, %v1478
  %v1559 = vpack.c.b16 %v1483, %v1481
  %v1560 = vpack.c.b16 %v1484, %v1482
  %v1561 = vpack.c.b16 %v1487, %v1485
  %v1562 = vpack.c.b16 %v1488, %v1486
  %v1563 = vpack.c.b16 %v1491, %v1489
  %v1564 = vpack.c.b16 %v1492, %v1490
  %v1565 = vpack.c.b16 %v1495, %v1493
  %v1566 = vpack.c.b16 %v1496, %v1494
  %v1567 = vpack.c.b16 %v1499, %v1497
  %v1568 = vpack.c.b16 %v1500, %v1498
  %v1569 = vpack.c.b16 %v1503, %v1501
  %v1570 = vpack.c.b16 %v1504, %v1502
  %v1571 = vpack.c.b16 %v1507, %v1505
  %v1572 = vpack.c.b16 %v1508, %v1506
  %1637 = vmatprep.subr.bf16.mxu0 %v1510
  %1638 = vmatpush1.bf16.msra.mxu0 %v1509
  %1639 = vmatprep.subr.bf16.mxu0 %v1512
  %1640 = vmatpush1.bf16.msra.mxu0 %v1511
  %1641 = vmatprep.subr.bf16.mxu0 %v1514
  %1642 = vmatpush1.bf16.msra.mxu0 %v1513
  %1643 = vmatprep.subr.bf16.mxu0 %v1516
  %1644 = vmatpush1.bf16.msra.mxu0 %v1515
  %1645 = vmatprep.subr.bf16.mxu0 %v1518
  %1646 = vmatpush1.bf16.msra.mxu0 %v1517
  %1647 = vmatprep.subr.bf16.mxu0 %v1520
  %1648 = vmatpush1.bf16.msra.mxu0 %v1519
  %1649 = vmatprep.subr.bf16.mxu0 %v1522
  %1650 = vmatpush1.bf16.msra.mxu0 %v1521
  %1651 = vmatprep.subr.bf16.mxu0 %v1524
  %1652 = vmatpush1.bf16.msra.mxu0 %v1523
  %1653 = vmatprep.subr.bf16.mxu0 %v1526
  %1654 = vmatpush1.bf16.msra.mxu0 %v1525
  %1655 = vmatprep.subr.bf16.mxu0 %v1528
  %1656 = vmatpush1.bf16.msra.mxu0 %v1527
  %1657 = vmatprep.subr.bf16.mxu0 %v1530
  %1658 = vmatpush1.bf16.msra.mxu0 %v1529
  %1659 = vmatprep.subr.bf16.mxu0 %v1532
  %1660 = vmatpush1.bf16.msra.mxu0 %v1531
  %1661 = vmatprep.subr.bf16.mxu0 %v1534
  %1662 = vmatpush1.bf16.msra.mxu0 %v1533
  %1663 = vmatprep.subr.bf16.mxu0 %v1536
  %1664 = vmatpush1.bf16.msra.mxu0 %v1535
  %1665 = vmatprep.subr.bf16.mxu0 %v1538
  %1666 = vmatpush1.bf16.msra.mxu0 %v1537
  %1667 = vmatprep.subr.bf16.mxu0 %v1540
  %1668 = vmatpush1.bf16.msra.mxu0 %v1539
  %1669 = vmatprep.mubr.bf16.mxu0 %v1210
  %1670 = vmatmul.mubr.bf16.gmra.mrb[0].mxu0 %v1209
  %v1671 = vpop.f32.mrb[0].mxu0
  %v1672 = vadd.f32 %v1310, %v1671
  %v1673 = vpop.f32.mrb[0].mxu0
  %v1674 = vadd.f32 %v1314, %v1673
  %v1675 = vpop.f32.mrb[0].mxu0
  %v1676 = vadd.f32 %v1310, %v1675
  %v1677 = vpop.f32.mrb[0].mxu0
  %v1678 = vadd.f32 %v1314, %v1677
  %1679 = vmatprep.mubr.bf16.mxu0 %v1214
  %1680 = vmatmul.mubr.bf16.gmra.mrb[0].mxu0 %v1213
  %v1681 = vpop.f32.mrb[0].mxu0
  %v1682 = vadd.f32 %v1310, %v1681
  %v1683 = vpop.f32.mrb[0].mxu0
  %v1684 = vadd.f32 %v1314, %v1683
  %v1685 = vpop.f32.mrb[0].mxu0
  %v1686 = vadd.f32 %v1310, %v1685
  %v1687 = vpop.f32.mrb[0].mxu0
  %v1688 = vadd.f32 %v1314, %v1687
  %1689 = vmatprep.mubr.bf16.mxu0 %v1218
  %1690 = vmatmul.mubr.bf16.gmra.mrb[0].mxu0 %v1217
  %v1691 = vpop.f32.mrb[0].mxu0
  %v1692 = vadd.f32 %v1310, %v1691
  %v1693 = vpop.f32.mrb[0].mxu0
  %v1694 = vadd.f32 %v1314, %v1693
  %v1695 = vpop.f32.mrb[0].mxu0
  %v1696 = vadd.f32 %v1310, %v1695
  %v1697 = vpop.f32.mrb[0].mxu0
  %v1698 = vadd.f32 %v1314, %v1697
  %1699 = vmatprep.mubr.bf16.mxu0 %v1222
  %1700 = vmatmul.mubr.bf16.gmra.mrb[0].mxu0 %v1221
  %v1701 = vpop.f32.mrb[0].mxu0
  %v1702 = vadd.f32 %v1310, %v1701
  %v1703 = vpop.f32.mrb[0].mxu0
  %v1704 = vadd.f32 %v1314, %v1703
  %v1705 = vpop.f32.mrb[0].mxu0
  %v1706 = vadd.f32 %v1310, %v1705
  %v1707 = vpop.f32.mrb[0].mxu0
  %v1708 = vadd.f32 %v1314, %v1707
  %1709 = vmatprep.mubr.bf16.mxu0 %v1226
  %1710 = vmatmul.mubr.bf16.gmra.mrb[0].mxu0 %v1225
  %v1711 = vpop.f32.mrb[0].mxu0
  %v1712 = vadd.f32 %v1310, %v1711
  %v1713 = vpop.f32.mrb[0].mxu0
  %v1714 = vadd.f32 %v1314, %v1713
  %v1715 = vpop.f32.mrb[0].mxu0
  %v1716 = vadd.f32 %v1310, %v1715
  %v1717 = vpop.f32.mrb[0].mxu0
  %v1718 = vadd.f32 %v1314, %v1717
  %1719 = vmatprep.mubr.bf16.mxu0 %v1230
  %1720 = vmatmul.mubr.bf16.gmra.mrb[0].mxu0 %v1229
  %v1721 = vpop.f32.mrb[0].mxu0
  %v1722 = vadd.f32 %v1310, %v1721
  %v1723 = vpop.f32.mrb[0].mxu0
  %v1724 = vadd.f32 %v1314, %v1723
  %v1725 = vpop.f32.mrb[0].mxu0
  %v1726 = vadd.f32 %v1310, %v1725
  %v1727 = vpop.f32.mrb[0].mxu0
  %v1728 = vadd.f32 %v1314, %v1727
  %1729 = vmatprep.mubr.bf16.mxu0 %v1234
  %1730 = vmatmul.mubr.bf16.gmra.mrb[0].mxu0 %v1233
  %v1731 = vpop.f32.mrb[0].mxu0
  %v1732 = vadd.f32 %v1310, %v1731
  %v1733 = vpop.f32.mrb[0].mxu0
  %v1734 = vadd.f32 %v1314, %v1733
  %v1735 = vpop.f32.mrb[0].mxu0
  %v1736 = vadd.f32 %v1310, %v1735
  %v1737 = vpop.f32.mrb[0].mxu0
  %v1738 = vadd.f32 %v1314, %v1737
  %1739 = vmatprep.mubr.bf16.mxu0 %v1238
  %1740 = vmatmul.mubr.bf16.gmra.mrb[0].mxu0 %v1237
  %v1741 = vpop.f32.mrb[0].mxu0
  %v1742 = vadd.f32 %v1310, %v1741
  %v1743 = vpop.f32.mrb[0].mxu0
  %v1744 = vadd.f32 %v1314, %v1743
  %v1745 = vpop.f32.mrb[0].mxu0
  %v1746 = vadd.f32 %v1310, %v1745
  %v1747 = vpop.f32.mrb[0].mxu0
  %v1748 = vadd.f32 %v1314, %v1747
  %1749 = vdwg.mxu0
  %1750 = vmatprep.subr.bf16.mxu0 %v1542
  %1751 = vmatpush1.bf16.msra.mxu0 %v1541
  %1752 = vmatprep.subr.bf16.mxu0 %v1544
  %1753 = vmatpush1.bf16.msra.mxu0 %v1543
  %1754 = vmatprep.subr.bf16.mxu0 %v1546
  %1755 = vmatpush1.bf16.msra.mxu0 %v1545
  %1756 = vmatprep.subr.bf16.mxu0 %v1548
  %1757 = vmatpush1.bf16.msra.mxu0 %v1547
  %1758 = vmatprep.subr.bf16.mxu0 %v1550
  %1759 = vmatpush1.bf16.msra.mxu0 %v1549
  %1760 = vmatprep.subr.bf16.mxu0 %v1552
  %1761 = vmatpush1.bf16.msra.mxu0 %v1551
  %1762 = vmatprep.subr.bf16.mxu0 %v1554
  %1763 = vmatpush1.bf16.msra.mxu0 %v1553
  %1764 = vmatprep.subr.bf16.mxu0 %v1556
  %1765 = vmatpush1.bf16.msra.mxu0 %v1555
  %1766 = vmatprep.subr.bf16.mxu0 %v1558
  %1767 = vmatpush1.bf16.msra.mxu0 %v1557
  %1768 = vmatprep.subr.bf16.mxu0 %v1560
  %1769 = vmatpush1.bf16.msra.mxu0 %v1559
  %1770 = vmatprep.subr.bf16.mxu0 %v1562
  %1771 = vmatpush1.bf16.msra.mxu0 %v1561
  %1772 = vmatprep.subr.bf16.mxu0 %v1564
  %1773 = vmatpush1.bf16.msra.mxu0 %v1563
  %1774 = vmatprep.subr.bf16.mxu0 %v1566
  %1775 = vmatpush1.bf16.msra.mxu0 %v1565
  %1776 = vmatprep.subr.bf16.mxu0 %v1568
  %1777 = vmatpush1.bf16.msra.mxu0 %v1567
  %1778 = vmatprep.subr.bf16.mxu0 %v1570
  %1779 = vmatpush1.bf16.msra.mxu0 %v1569
  %1780 = vmatprep.subr.bf16.mxu0 %v1572
  %1781 = vmatpush1.bf16.msra.mxu0 %v1571
  %1782 = vmatprep.mubr.bf16.mxu0 %v1212
  %1783 = vmatmul.mubr.bf16.gmra.mrb[0].mxu0 %v1211
  %v1784 = vpop.f32.mrb[0].mxu0
  %v1785 = vadd.f32 %v1672, %v1784
  %v1786 = vpop.f32.mrb[0].mxu0
  %v1787 = vadd.f32 %v1674, %v1786
  %v1788 = vpop.f32.mrb[0].mxu0
  %v1789 = vadd.f32 %v1676, %v1788
  %v1790 = vpop.f32.mrb[0].mxu0
  %v1791 = vadd.f32 %v1678, %v1790
  %1792 = vmatprep.mubr.bf16.mxu0 %v1216
  %1793 = vmatmul.mubr.bf16.gmra.mrb[0].mxu0 %v1215
  %v1794 = vpop.f32.mrb[0].mxu0
  %v1795 = vadd.f32 %v1682, %v1794
  %v1796 = vpop.f32.mrb[0].mxu0
  %v1797 = vadd.f32 %v1684, %v1796
  %v1798 = vpop.f32.mrb[0].mxu0
  %v1799 = vadd.f32 %v1686, %v1798
  %v1800 = vpop.f32.mrb[0].mxu0
  %v1801 = vadd.f32 %v1688, %v1800
  %1802 = vmatprep.mubr.bf16.mxu0 %v1220
  %1803 = vmatmul.mubr.bf16.gmra.mrb[0].mxu0 %v1219
  %v1804 = vpop.f32.mrb[0].mxu0
  %v1805 = vadd.f32 %v1692, %v1804
  %v1806 = vpop.f32.mrb[0].mxu0
  %v1807 = vadd.f32 %v1694, %v1806
  %v1808 = vpop.f32.mrb[0].mxu0
  %v1809 = vadd.f32 %v1696, %v1808
  %v1810 = vpop.f32.mrb[0].mxu0
  %v1811 = vadd.f32 %v1698, %v1810
  %1812 = vmatprep.mubr.bf16.mxu0 %v1224
  %1813 = vmatmul.mubr.bf16.gmra.mrb[0].mxu0 %v1223
  %v1814 = vpop.f32.mrb[0].mxu0
  %v1815 = vadd.f32 %v1702, %v1814
  %v1816 = vpop.f32.mrb[0].mxu0
  %v1817 = vadd.f32 %v1704, %v1816
  %v1818 = vpop.f32.mrb[0].mxu0
  %v1819 = vadd.f32 %v1706, %v1818
  %v1820 = vpop.f32.mrb[0].mxu0
  %v1821 = vadd.f32 %v1708, %v1820
  %1822 = vmatprep.mubr.bf16.mxu0 %v1228
  %1823 = vmatmul.mubr.bf16.gmra.mrb[0].mxu0 %v1227
  %v1824 = vpop.f32.mrb[0].mxu0
  %v1825 = vadd.f32 %v1712, %v1824
  %v1826 = vpop.f32.mrb[0].mxu0
  %v1827 = vadd.f32 %v1714, %v1826
  %v1828 = vpop.f32.mrb[0].mxu0
  %v1829 = vadd.f32 %v1716, %v1828
  %v1830 = vpop.f32.mrb[0].mxu0
  %v1831 = vadd.f32 %v1718, %v1830
  %1832 = vmatprep.mubr.bf16.mxu0 %v1232
  %1833 = vmatmul.mubr.bf16.gmra.mrb[0].mxu0 %v1231
  %v1834 = vpop.f32.mrb[0].mxu0
  %v1835 = vadd.f32 %v1722, %v1834
  %v1836 = vpop.f32.mrb[0].mxu0
  %v1837 = vadd.f32 %v1724, %v1836
  %v1838 = vpop.f32.mrb[0].mxu0
  %v1839 = vadd.f32 %v1726, %v1838
  %v1840 = vpop.f32.mrb[0].mxu0
  %v1841 = vadd.f32 %v1728, %v1840
  %1842 = vmatprep.mubr.bf16.mxu0 %v1236
  %1843 = vmatmul.mubr.bf16.gmra.mrb[0].mxu0 %v1235
  %v1844 = vpop.f32.mrb[0].mxu0
  %v1845 = vadd.f32 %v1732, %v1844
  %v1846 = vpop.f32.mrb[0].mxu0
  %v1847 = vadd.f32 %v1734, %v1846
  %v1848 = vpop.f32.mrb[0].mxu0
  %v1849 = vadd.f32 %v1736, %v1848
  %v1850 = vpop.f32.mrb[0].mxu0
  %v1851 = vadd.f32 %v1738, %v1850
  %1852 = vmatprep.mubr.bf16.mxu0 %v1240
  %1853 = vmatmul.mubr.bf16.gmra.mrb[0].mxu0 %v1239
  %v1854 = vpop.f32.mrb[0].mxu0
  %v1855 = vadd.f32 %v1742, %v1854
  %v1856 = vpop.f32.mrb[0].mxu0
  %v1857 = vadd.f32 %v1744, %v1856
  %v1858 = vpop.f32.mrb[0].mxu0
  %v1859 = vadd.f32 %v1746, %v1858
  %v1860 = vpop.f32.mrb[0].mxu0
  %v1861 = vadd.f32 %v1748, %v1860
  %1862 = vdwg.mxu0
  %v1863 = vld [vmem:[%s7] sm:$0x3]
  %v1864 = vld [vmem:[%s8] sm:$0x3]
  %v1865 = vadd.f32 %v1785, %v1787
  %1866 = vadd.xlane.f32.xlu0 %v1865
  %v1867 = vpop.xlane.xlu0 %1866
  %v1868 = vadd.f32 %v1789, %v1791
  %1869 = vadd.xlane.f32.xlu0 %v1868
  %v1870 = vpop.xlane.xlu0 %1869
  %v1871 = vadd.f32 %v1795, %v1797
  %1872 = vadd.xlane.f32.xlu0 %v1871
  %v1873 = vpop.xlane.xlu0 %1872
  %v1874 = vadd.f32 %v1799, %v1801
  %1875 = vadd.xlane.f32.xlu0 %v1874
  %v1876 = vpop.xlane.xlu0 %1875
  %v1877 = vadd.f32 %v1805, %v1807
  %1878 = vadd.xlane.f32.xlu0 %v1877
  %v1879 = vpop.xlane.xlu0 %1878
  %v1880 = vadd.f32 %v1809, %v1811
  %1881 = vadd.xlane.f32.xlu0 %v1880
  %v1882 = vpop.xlane.xlu0 %1881
  %v1883 = vadd.f32 %v1815, %v1817
  %1884 = vadd.xlane.f32.xlu0 %v1883
  %v1885 = vpop.xlane.xlu0 %1884
  %v1886 = vadd.f32 %v1819, %v1821
  %1887 = vadd.xlane.f32.xlu0 %v1886
  %v1888 = vpop.xlane.xlu0 %1887
  %v1889 = vadd.f32 %v1825, %v1827
  %1890 = vadd.xlane.f32.xlu0 %v1889
  %v1891 = vpop.xlane.xlu0 %1890
  %v1892 = vadd.f32 %v1829, %v1831
  %1893 = vadd.xlane.f32.xlu0 %v1892
  %v1894 = vpop.xlane.xlu0 %1893
  %v1895 = vadd.f32 %v1835, %v1837
  %1896 = vadd.xlane.f32.xlu0 %v1895
  %v1897 = vpop.xlane.xlu0 %1896
  %v1898 = vadd.f32 %v1839, %v1841
  %1899 = vadd.xlane.f32.xlu0 %v1898
  %v1900 = vpop.xlane.xlu0 %1899
  %v1901 = vadd.f32 %v1845, %v1847
  %1902 = vadd.xlane.f32.xlu0 %v1901
  %v1903 = vpop.xlane.xlu0 %1902
  %v1904 = vadd.f32 %v1849, %v1851
  %1905 = vadd.xlane.f32.xlu0 %v1904
  %v1906 = vpop.xlane.xlu0 %1905
  %v1907 = vadd.f32 %v1855, %v1857
  %1908 = vadd.xlane.f32.xlu0 %v1907
  %v1909 = vpop.xlane.xlu0 %1908
  %v1910 = vadd.f32 %v1859, %v1861
  %1911 = vadd.xlane.f32.xlu0 %v1910
  %v1912 = vpop.xlane.xlu0 %1911
  %v1913 = vrcp.pop 256.0
  %v1914 = vmul.f32 %v1867, %v1913
  %v1915 = vmul.f32 %v1870, %v1913
  %v1916 = vmul.f32 %v1873, %v1913
  %v1917 = vmul.f32 %v1876, %v1913
  %v1918 = vmul.f32 %v1879, %v1913
  %v1919 = vmul.f32 %v1882, %v1913
  %v1920 = vmul.f32 %v1885, %v1913
  %v1921 = vmul.f32 %v1888, %v1913
  %v1922 = vmul.f32 %v1891, %v1913
  %v1923 = vmul.f32 %v1894, %v1913
  %v1924 = vmul.f32 %v1897, %v1913
  %v1925 = vmul.f32 %v1900, %v1913
  %v1926 = vmul.f32 %v1903, %v1913
  %v1927 = vmul.f32 %v1906, %v1913
  %v1928 = vmul.f32 %v1909, %v1913
  %v1929 = vmul.f32 %v1912, %v1913
  %v1930 = vmul.f32 %v1785, %v1785
  %v1931 = vmul.f32 %v1787, %v1787
  %v1932 = vmul.f32 %v1789, %v1789
  %v1933 = vmul.f32 %v1791, %v1791
  %v1934 = vmul.f32 %v1795, %v1795
  %v1935 = vmul.f32 %v1797, %v1797
  %v1936 = vmul.f32 %v1799, %v1799
  %v1937 = vmul.f32 %v1801, %v1801
  %v1938 = vmul.f32 %v1805, %v1805
  %v1939 = vmul.f32 %v1807, %v1807
  %v1940 = vmul.f32 %v1809, %v1809
  %v1941 = vmul.f32 %v1811, %v1811
  %v1942 = vmul.f32 %v1815, %v1815
  %v1943 = vmul.f32 %v1817, %v1817
  %v1944 = vmul.f32 %v1819, %v1819
  %v1945 = vmul.f32 %v1821, %v1821
  %v1946 = vmul.f32 %v1825, %v1825
  %v1947 = vmul.f32 %v1827, %v1827
  %v1948 = vmul.f32 %v1829, %v1829
  %v1949 = vmul.f32 %v1831, %v1831
  %v1950 = vmul.f32 %v1835, %v1835
  %v1951 = vmul.f32 %v1837, %v1837
  %v1952 = vmul.f32 %v1839, %v1839
  %v1953 = vmul.f32 %v1841, %v1841
  %v1954 = vmul.f32 %v1845, %v1845
  %v1955 = vmul.f32 %v1847, %v1847
  %v1956 = vmul.f32 %v1849, %v1849
  %v1957 = vmul.f32 %v1851, %v1851
  %v1958 = vmul.f32 %v1855, %v1855
  %v1959 = vmul.f32 %v1857, %v1857
  %v1960 = vmul.f32 %v1859, %v1859
  %v1961 = vmul.f32 %v1861, %v1861
  %v1962 = vadd.f32 %v1930, %v1931
  %1963 = vadd.xlane.f32.xlu0 %v1962
  %v1964 = vpop.xlane.xlu0 %1963
  %v1965 = vadd.f32 %v1932, %v1933
  %1966 = vadd.xlane.f32.xlu0 %v1965
  %v1967 = vpop.xlane.xlu0 %1966
  %v1968 = vadd.f32 %v1934, %v1935
  %1969 = vadd.xlane.f32.xlu0 %v1968
  %v1970 = vpop.xlane.xlu0 %1969
  %v1971 = vadd.f32 %v1936, %v1937
  %1972 = vadd.xlane.f32.xlu0 %v1971
  %v1973 = vpop.xlane.xlu0 %1972
  %v1974 = vadd.f32 %v1938, %v1939
  %1975 = vadd.xlane.f32.xlu0 %v1974
  %v1976 = vpop.xlane.xlu0 %1975
  %v1977 = vadd.f32 %v1940, %v1941
  %1978 = vadd.xlane.f32.xlu0 %v1977
  %v1979 = vpop.xlane.xlu0 %1978
  %v1980 = vadd.f32 %v1942, %v1943
  %1981 = vadd.xlane.f32.xlu0 %v1980
  %v1982 = vpop.xlane.xlu0 %1981
  %v1983 = vadd.f32 %v1944, %v1945
  %1984 = vadd.xlane.f32.xlu0 %v1983
  %v1985 = vpop.xlane.xlu0 %1984
  %v1986 = vadd.f32 %v1946, %v1947
  %1987 = vadd.xlane.f32.xlu0 %v1986
  %v1988 = vpop.xlane.xlu0 %1987
  %v1989 = vadd.f32 %v1948, %v1949
  %1990 = vadd.xlane.f32.xlu0 %v1989
  %v1991 = vpop.xlane.xlu0 %1990
  %v1992 = vadd.f32 %v1950, %v1951
  %1993 = vadd.xlane.f32.xlu0 %v1992
  %v1994 = vpop.xlane.xlu0 %1993
  %v1995 = vadd.f32 %v1952, %v1953
  %1996 = vadd.xlane.f32.xlu0 %v1995
  %v1997 = vpop.xlane.xlu0 %1996
  %v1998 = vadd.f32 %v1954, %v1955
  %1999 = vadd.xlane.f32.xlu0 %v1998
  %v2000 = vpop.xlane.xlu0 %1999
  %v2001 = vadd.f32 %v1956, %v1957
  %2002 = vadd.xlane.f32.xlu0 %v2001
  %v2003 = vpop.xlane.xlu0 %2002
  %v2004 = vadd.f32 %v1958, %v1959
  %2005 = vadd.xlane.f32.xlu0 %v2004
  %v2006 = vpop.xlane.xlu0 %2005
  %v2007 = vadd.f32 %v1960, %v1961
  %2008 = vadd.xlane.f32.xlu0 %v2007
  %v2009 = vpop.xlane.xlu0 %2008
  %v2010 = vmul.f32 %v1964, %v1913
  %v2011 = vmul.f32 %v1967, %v1913
  %v2012 = vmul.f32 %v1970, %v1913
  %v2013 = vmul.f32 %v1973, %v1913
  %v2014 = vmul.f32 %v1976, %v1913
  %v2015 = vmul.f32 %v1979, %v1913
  %v2016 = vmul.f32 %v1982, %v1913
  %v2017 = vmul.f32 %v1985, %v1913
  %v2018 = vmul.f32 %v1988, %v1913
  %v2019 = vmul.f32 %v1991, %v1913
  %v2020 = vmul.f32 %v1994, %v1913
  %v2021 = vmul.f32 %v1997, %v1913
  %v2022 = vmul.f32 %v2000, %v1913
  %v2023 = vmul.f32 %v2003, %v1913
  %v2024 = vmul.f32 %v2006, %v1913
  %v2025 = vmul.f32 %v2009, %v1913
  %v2026 = vmul.f32 %v1914, %v1914
  %v2027 = vmul.f32 %v1915, %v1915
  %v2028 = vmul.f32 %v1916, %v1916
  %v2029 = vmul.f32 %v1917, %v1917
  %v2030 = vmul.f32 %v1918, %v1918
  %v2031 = vmul.f32 %v1919, %v1919
  %v2032 = vmul.f32 %v1920, %v1920
  %v2033 = vmul.f32 %v1921, %v1921
  %v2034 = vmul.f32 %v1922, %v1922
  %v2035 = vmul.f32 %v1923, %v1923
  %v2036 = vmul.f32 %v1924, %v1924
  %v2037 = vmul.f32 %v1925, %v1925
  %v2038 = vmul.f32 %v1926, %v1926
  %v2039 = vmul.f32 %v1927, %v1927
  %v2040 = vmul.f32 %v1928, %v1928
  %v2041 = vmul.f32 %v1929, %v1929
  %v2042 = vsub.f32 %v2010, %v2026
  %v2043 = vsub.f32 %v2011, %v2027
  %v2044 = vsub.f32 %v2012, %v2028
  %v2045 = vsub.f32 %v2013, %v2029
  %v2046 = vsub.f32 %v2014, %v2030
  %v2047 = vsub.f32 %v2015, %v2031
  %v2048 = vsub.f32 %v2016, %v2032
  %v2049 = vsub.f32 %v2017, %v2033
  %v2050 = vsub.f32 %v2018, %v2034
  %v2051 = vsub.f32 %v2019, %v2035
  %v2052 = vsub.f32 %v2020, %v2036
  %v2053 = vsub.f32 %v2021, %v2037
  %v2054 = vsub.f32 %v2022, %v2038
  %v2055 = vsub.f32 %v2023, %v2039
  %v2056 = vsub.f32 %v2024, %v2040
  %v2057 = vsub.f32 %v2025, %v2041
  %v2058 = vmax.f32 %v2042, 0.0
  %v2059 = vmax.f32 %v2043, 0.0
  %v2060 = vmax.f32 %v2044, 0.0
  %v2061 = vmax.f32 %v2045, 0.0
  %v2062 = vmax.f32 %v2046, 0.0
  %v2063 = vmax.f32 %v2047, 0.0
  %v2064 = vmax.f32 %v2048, 0.0
  %v2065 = vmax.f32 %v2049, 0.0
  %v2066 = vmax.f32 %v2050, 0.0
  %v2067 = vmax.f32 %v2051, 0.0
  %v2068 = vmax.f32 %v2052, 0.0
  %v2069 = vmax.f32 %v2053, 0.0
  %v2070 = vmax.f32 %v2054, 0.0
  %v2071 = vmax.f32 %v2055, 0.0
  %v2072 = vmax.f32 %v2056, 0.0
  %v2073 = vmax.f32 %v2057, 0.0
  %v2074 = vsub.f32 %v1785, %v1914
  %v2075 = vsub.f32 %v1787, %v1914
  %v2076 = vsub.f32 %v1789, %v1915
  %v2077 = vsub.f32 %v1791, %v1915
  %v2078 = vsub.f32 %v1795, %v1916
  %v2079 = vsub.f32 %v1797, %v1916
  %v2080 = vsub.f32 %v1799, %v1917
  %v2081 = vsub.f32 %v1801, %v1917
  %v2082 = vsub.f32 %v1805, %v1918
  %v2083 = vsub.f32 %v1807, %v1918
  %v2084 = vsub.f32 %v1809, %v1919
  %v2085 = vsub.f32 %v1811, %v1919
  %v2086 = vsub.f32 %v1815, %v1920
  %v2087 = vsub.f32 %v1817, %v1920
  %v2088 = vsub.f32 %v1819, %v1921
  %v2089 = vsub.f32 %v1821, %v1921
  %v2090 = vsub.f32 %v1825, %v1922
  %v2091 = vsub.f32 %v1827, %v1922
  %v2092 = vsub.f32 %v1829, %v1923
  %v2093 = vsub.f32 %v1831, %v1923
  %v2094 = vsub.f32 %v1835, %v1924
  %v2095 = vsub.f32 %v1837, %v1924
  %v2096 = vsub.f32 %v1839, %v1925
  %v2097 = vsub.f32 %v1841, %v1925
  %v2098 = vsub.f32 %v1845, %v1926
  %v2099 = vsub.f32 %v1847, %v1926
  %v2100 = vsub.f32 %v1849, %v1927
  %v2101 = vsub.f32 %v1851, %v1927
  %v2102 = vsub.f32 %v1855, %v1928
  %v2103 = vsub.f32 %v1857, %v1928
  %v2104 = vsub.f32 %v1859, %v1929
  %v2105 = vsub.f32 %v1861, %v1929
  %v2106 = vadd.f32 %v2058, 1e-05
  %v2107 = vadd.f32 %v2059, 1e-05
  %v2108 = vadd.f32 %v2060, 1e-05
  %v2109 = vadd.f32 %v2061, 1e-05
  %v2110 = vadd.f32 %v2062, 1e-05
  %v2111 = vadd.f32 %v2063, 1e-05
  %v2112 = vadd.f32 %v2064, 1e-05
  %v2113 = vadd.f32 %v2065, 1e-05
  %v2114 = vadd.f32 %v2066, 1e-05
  %v2115 = vadd.f32 %v2067, 1e-05
  %v2116 = vadd.f32 %v2068, 1e-05
  %v2117 = vadd.f32 %v2069, 1e-05
  %v2118 = vadd.f32 %v2070, 1e-05
  %v2119 = vadd.f32 %v2071, 1e-05
  %v2120 = vadd.f32 %v2072, 1e-05
  %v2121 = vadd.f32 %v2073, 1e-05
  %v2122 = vrsqrt.pop %v2106
  %v2123 = vrsqrt.pop %v2107
  %v2124 = vrsqrt.pop %v2108
  %v2125 = vrsqrt.pop %v2109
  %v2126 = vrsqrt.pop %v2110
  %v2127 = vrsqrt.pop %v2111
  %v2128 = vrsqrt.pop %v2112
  %v2129 = vrsqrt.pop %v2113
  %v2130 = vrsqrt.pop %v2114
  %v2131 = vrsqrt.pop %v2115
  %v2132 = vrsqrt.pop %v2116
  %v2133 = vrsqrt.pop %v2117
  %v2134 = vrsqrt.pop %v2118
  %v2135 = vrsqrt.pop %v2119
  %v2136 = vrsqrt.pop %v2120
  %v2137 = vrsqrt.pop %v2121
  %v2138 = vmul.f32 %v2074, %v2122
  %v2139 = vmul.f32 %v2075, %v2122
  %v2140 = vmul.f32 %v2076, %v2123
  %v2141 = vmul.f32 %v2077, %v2123
  %v2142 = vmul.f32 %v2078, %v2124
  %v2143 = vmul.f32 %v2079, %v2124
  %v2144 = vmul.f32 %v2080, %v2125
  %v2145 = vmul.f32 %v2081, %v2125
  %v2146 = vmul.f32 %v2082, %v2126
  %v2147 = vmul.f32 %v2083, %v2126
  %v2148 = vmul.f32 %v2084, %v2127
  %v2149 = vmul.f32 %v2085, %v2127
  %v2150 = vmul.f32 %v2086, %v2128
  %v2151 = vmul.f32 %v2087, %v2128
  %v2152 = vmul.f32 %v2088, %v2129
  %v2153 = vmul.f32 %v2089, %v2129
  %v2154 = vmul.f32 %v2090, %v2130
  %v2155 = vmul.f32 %v2091, %v2130
  %v2156 = vmul.f32 %v2092, %v2131
  %v2157 = vmul.f32 %v2093, %v2131
  %v2158 = vmul.f32 %v2094, %v2132
  %v2159 = vmul.f32 %v2095, %v2132
  %v2160 = vmul.f32 %v2096, %v2133
  %v2161 = vmul.f32 %v2097, %v2133
  %v2162 = vmul.f32 %v2098, %v2134
  %v2163 = vmul.f32 %v2099, %v2134
  %v2164 = vmul.f32 %v2100, %v2135
  %v2165 = vmul.f32 %v2101, %v2135
  %v2166 = vmul.f32 %v2102, %v2136
  %v2167 = vmul.f32 %v2103, %v2136
  %v2168 = vmul.f32 %v2104, %v2137
  %v2169 = vmul.f32 %v2105, %v2137
  %v2171 = vlaneseq
  %v2172 = vshrl.u32 %v2171, 7
  %v2173 = vsub.s32 0, %v2172
  %v2174 = vrot.slane %v1863, %v2173
  %v2175 = vlaneseq
  %v2176 = vshrl.u32 %v2175, 7
  %v2177 = vsub.s32 1, %v2176
  %v2178 = vrot.slane %v1863, %v2177
  %v2181 = vmul.f32 %v2138, %v2174
  %v2182 = vmul.f32 %v2139, %v2178
  %v2183 = vmul.f32 %v2140, %v2174
  %v2184 = vmul.f32 %v2141, %v2178
  %v2185 = vmul.f32 %v2142, %v2174
  %v2186 = vmul.f32 %v2143, %v2178
  %v2187 = vmul.f32 %v2144, %v2174
  %v2188 = vmul.f32 %v2145, %v2178
  %v2189 = vmul.f32 %v2146, %v2174
  %v2190 = vmul.f32 %v2147, %v2178
  %v2191 = vmul.f32 %v2148, %v2174
  %v2192 = vmul.f32 %v2149, %v2178
  %v2193 = vmul.f32 %v2150, %v2174
  %v2194 = vmul.f32 %v2151, %v2178
  %v2195 = vmul.f32 %v2152, %v2174
  %v2196 = vmul.f32 %v2153, %v2178
  %v2197 = vmul.f32 %v2154, %v2174
  %v2198 = vmul.f32 %v2155, %v2178
  %v2199 = vmul.f32 %v2156, %v2174
  %v2200 = vmul.f32 %v2157, %v2178
  %v2201 = vmul.f32 %v2158, %v2174
  %v2202 = vmul.f32 %v2159, %v2178
  %v2203 = vmul.f32 %v2160, %v2174
  %v2204 = vmul.f32 %v2161, %v2178
  %v2205 = vmul.f32 %v2162, %v2174
  %v2206 = vmul.f32 %v2163, %v2178
  %v2207 = vmul.f32 %v2164, %v2174
  %v2208 = vmul.f32 %v2165, %v2178
  %v2209 = vmul.f32 %v2166, %v2174
  %v2210 = vmul.f32 %v2167, %v2178
  %v2211 = vmul.f32 %v2168, %v2174
  %v2212 = vmul.f32 %v2169, %v2178
  %v2214 = vlaneseq
  %v2215 = vshrl.u32 %v2214, 7
  %v2216 = vsub.s32 0, %v2215
  %v2217 = vrot.slane %v1864, %v2216
  %v2218 = vlaneseq
  %v2219 = vshrl.u32 %v2218, 7
  %v2220 = vsub.s32 1, %v2219
  %v2221 = vrot.slane %v1864, %v2220
  %v2224 = vadd.f32 %v2181, %v2217
  %v2225 = vadd.f32 %v2182, %v2221
  %v2226 = vadd.f32 %v2183, %v2217
  %v2227 = vadd.f32 %v2184, %v2221
  %v2228 = vadd.f32 %v2185, %v2217
  %v2229 = vadd.f32 %v2186, %v2221
  %v2230 = vadd.f32 %v2187, %v2217
  %v2231 = vadd.f32 %v2188, %v2221
  %v2232 = vadd.f32 %v2189, %v2217
  %v2233 = vadd.f32 %v2190, %v2221
  %v2234 = vadd.f32 %v2191, %v2217
  %v2235 = vadd.f32 %v2192, %v2221
  %v2236 = vadd.f32 %v2193, %v2217
  %v2237 = vadd.f32 %v2194, %v2221
  %v2238 = vadd.f32 %v2195, %v2217
  %v2239 = vadd.f32 %v2196, %v2221
  %v2240 = vadd.f32 %v2197, %v2217
  %v2241 = vadd.f32 %v2198, %v2221
  %v2242 = vadd.f32 %v2199, %v2217
  %v2243 = vadd.f32 %v2200, %v2221
  %v2244 = vadd.f32 %v2201, %v2217
  %v2245 = vadd.f32 %v2202, %v2221
  %v2246 = vadd.f32 %v2203, %v2217
  %v2247 = vadd.f32 %v2204, %v2221
  %v2248 = vadd.f32 %v2205, %v2217
  %v2249 = vadd.f32 %v2206, %v2221
  %v2250 = vadd.f32 %v2207, %v2217
  %v2251 = vadd.f32 %v2208, %v2221
  %v2252 = vadd.f32 %v2209, %v2217
  %v2253 = vadd.f32 %v2210, %v2221
  %v2254 = vadd.f32 %v2211, %v2217
  %v2255 = vadd.f32 %v2212, %v2221
  %v2256 = vmul.f32 %v2224, 0.2
  %v2257 = vmul.f32 %v2225, 0.2
  %v2258 = vmul.f32 %v2226, 0.2
  %v2259 = vmul.f32 %v2227, 0.2
  %v2260 = vmul.f32 %v2228, 0.2
  %v2261 = vmul.f32 %v2229, 0.2
  %v2262 = vmul.f32 %v2230, 0.2
  %v2263 = vmul.f32 %v2231, 0.2
  %v2264 = vmul.f32 %v2232, 0.2
  %v2265 = vmul.f32 %v2233, 0.2
  %v2266 = vmul.f32 %v2234, 0.2
  %v2267 = vmul.f32 %v2235, 0.2
  %v2268 = vmul.f32 %v2236, 0.2
  %v2269 = vmul.f32 %v2237, 0.2
  %v2270 = vmul.f32 %v2238, 0.2
  %v2271 = vmul.f32 %v2239, 0.2
  %v2272 = vmul.f32 %v2240, 0.2
  %v2273 = vmul.f32 %v2241, 0.2
  %v2274 = vmul.f32 %v2242, 0.2
  %v2275 = vmul.f32 %v2243, 0.2
  %v2276 = vmul.f32 %v2244, 0.2
  %v2277 = vmul.f32 %v2245, 0.2
  %v2278 = vmul.f32 %v2246, 0.2
  %v2279 = vmul.f32 %v2247, 0.2
  %v2280 = vmul.f32 %v2248, 0.2
  %v2281 = vmul.f32 %v2249, 0.2
  %v2282 = vmul.f32 %v2250, 0.2
  %v2283 = vmul.f32 %v2251, 0.2
  %v2284 = vmul.f32 %v2252, 0.2
  %v2285 = vmul.f32 %v2253, 0.2
  %v2286 = vmul.f32 %v2254, 0.2
  %v2287 = vmul.f32 %v2255, 0.2
  %v2288 = vmax.f32 %v2224, %v2256
  %v2289 = vmax.f32 %v2225, %v2257
  %v2290 = vmax.f32 %v2226, %v2258
  %v2291 = vmax.f32 %v2227, %v2259
  %v2292 = vmax.f32 %v2228, %v2260
  %v2293 = vmax.f32 %v2229, %v2261
  %v2294 = vmax.f32 %v2230, %v2262
  %v2295 = vmax.f32 %v2231, %v2263
  %v2296 = vmax.f32 %v2232, %v2264
  %v2297 = vmax.f32 %v2233, %v2265
  %v2298 = vmax.f32 %v2234, %v2266
  %v2299 = vmax.f32 %v2235, %v2267
  %v2300 = vmax.f32 %v2236, %v2268
  %v2301 = vmax.f32 %v2237, %v2269
  %v2302 = vmax.f32 %v2238, %v2270
  %v2303 = vmax.f32 %v2239, %v2271
  %v2304 = vmax.f32 %v2240, %v2272
  %v2305 = vmax.f32 %v2241, %v2273
  %v2306 = vmax.f32 %v2242, %v2274
  %v2307 = vmax.f32 %v2243, %v2275
  %v2308 = vmax.f32 %v2244, %v2276
  %v2309 = vmax.f32 %v2245, %v2277
  %v2310 = vmax.f32 %v2246, %v2278
  %v2311 = vmax.f32 %v2247, %v2279
  %v2312 = vmax.f32 %v2248, %v2280
  %v2313 = vmax.f32 %v2249, %v2281
  %v2314 = vmax.f32 %v2250, %v2282
  %v2315 = vmax.f32 %v2251, %v2283
  %v2316 = vmax.f32 %v2252, %v2284
  %v2317 = vmax.f32 %v2253, %v2285
  %v2318 = vmax.f32 %v2254, %v2286
  %v2319 = vmax.f32 %v2255, %v2287
  %v2320 = vpack.c.bf16 %v2290, %v2288
  %v2321 = vpack.c.bf16 %v2291, %v2289
  %v2322 = vpack.c.bf16 %v2294, %v2292
  %v2323 = vpack.c.bf16 %v2295, %v2293
  %v2324 = vpack.c.bf16 %v2298, %v2296
  %v2325 = vpack.c.bf16 %v2299, %v2297
  %v2326 = vpack.c.bf16 %v2302, %v2300
  %v2327 = vpack.c.bf16 %v2303, %v2301
  %v2328 = vpack.c.bf16 %v2306, %v2304
  %v2329 = vpack.c.bf16 %v2307, %v2305
  %v2330 = vpack.c.bf16 %v2310, %v2308
  %v2331 = vpack.c.bf16 %v2311, %v2309
  %v2332 = vpack.c.bf16 %v2314, %v2312
  %v2333 = vpack.c.bf16 %v2315, %v2313
  %v2334 = vpack.c.bf16 %v2318, %v2316
  %v2335 = vpack.c.bf16 %v2319, %v2317
  %v2336 = vld [vmem:[%s9] sm:$0xf]
  %v2337 = vld [vmem:[%s9 + $0x4] sm:$0xf]
  %v2338 = vld [vmem:[%s9 + $0x8] sm:$0xf]
  %v2339 = vld [vmem:[%s9 + $0xc] sm:$0xf]
  %v2340 = vld [vmem:[%s9 + $0x10] sm:$0xf]
  %v2341 = vld [vmem:[%s9 + $0x14] sm:$0xf]
  %v2342 = vld [vmem:[%s9 + $0x18] sm:$0xf]
  %v2343 = vld [vmem:[%s9 + $0x1c] sm:$0xf]
  %v2344 = vld [vmem:[%s9 + $0x20] sm:$0xf]
  %v2345 = vld [vmem:[%s9 + $0x24] sm:$0xf]
  %v2346 = vld [vmem:[%s9 + $0x28] sm:$0xf]
  %v2347 = vld [vmem:[%s9 + $0x2c] sm:$0xf]
  %v2348 = vld [vmem:[%s9 + $0x30] sm:$0xf]
  %v2349 = vld [vmem:[%s9 + $0x34] sm:$0xf]
  %v2350 = vld [vmem:[%s9 + $0x38] sm:$0xf]
  %v2351 = vld [vmem:[%s9 + $0x3c] sm:$0xf]
  %v2352 = vld [vmem:[%s9 + $0x40] sm:$0xf]
  %v2353 = vld [vmem:[%s9 + $0x44] sm:$0xf]
  %v2354 = vld [vmem:[%s9 + $0x48] sm:$0xf]
  %v2355 = vld [vmem:[%s9 + $0x4c] sm:$0xf]
  %v2356 = vld [vmem:[%s9 + $0x50] sm:$0xf]
  %v2357 = vld [vmem:[%s9 + $0x54] sm:$0xf]
  %v2358 = vld [vmem:[%s9 + $0x58] sm:$0xf]
  %v2359 = vld [vmem:[%s9 + $0x5c] sm:$0xf]
  %v2360 = vld [vmem:[%s9 + $0x60] sm:$0xf]
  %v2361 = vld [vmem:[%s9 + $0x64] sm:$0xf]
  %v2362 = vld [vmem:[%s9 + $0x68] sm:$0xf]
  %v2363 = vld [vmem:[%s9 + $0x6c] sm:$0xf]
  %v2364 = vld [vmem:[%s9 + $0x70] sm:$0xf]
  %v2365 = vld [vmem:[%s9 + $0x74] sm:$0xf]
  %v2366 = vld [vmem:[%s9 + $0x78] sm:$0xf]
  %v2367 = vld [vmem:[%s9 + $0x7c] sm:$0xf]
  %v2368 = vld [vmem:[%s10] sm:$0x1]
  %v2370 = vlaneseq
  %v2371 = vshrl.u32 %v2370, 7
  %v2372 = vsub.s32 0, %v2371
  %v2373 = vrot.slane %v2368, %v2372
  %v2407 = vunpack.c.l.b16 %v2336
  %v2408 = vunpack.c.l.b16 %v2337
  %v2409 = vunpack.c.l.b16 %v2338
  %v2410 = vunpack.c.l.b16 %v2339
  %v2411 = vunpack.c.l.b16 %v2340
  %v2412 = vunpack.c.l.b16 %v2341
  %v2413 = vunpack.c.l.b16 %v2342
  %v2414 = vunpack.c.l.b16 %v2343
  %v2415 = vunpack.c.l.b16 %v2344
  %v2416 = vunpack.c.l.b16 %v2345
  %v2417 = vunpack.c.l.b16 %v2346
  %v2418 = vunpack.c.l.b16 %v2347
  %v2419 = vunpack.c.l.b16 %v2348
  %v2420 = vunpack.c.l.b16 %v2349
  %v2421 = vunpack.c.l.b16 %v2350
  %v2422 = vunpack.c.l.b16 %v2351
  %v2423 = vunpack.c.l.b16 %v2352
  %v2424 = vunpack.c.l.b16 %v2353
  %v2425 = vunpack.c.l.b16 %v2354
  %v2426 = vunpack.c.l.b16 %v2355
  %v2427 = vunpack.c.l.b16 %v2356
  %v2428 = vunpack.c.l.b16 %v2357
  %v2429 = vunpack.c.l.b16 %v2358
  %v2430 = vunpack.c.l.b16 %v2359
  %v2431 = vunpack.c.l.b16 %v2360
  %v2432 = vunpack.c.l.b16 %v2361
  %v2433 = vunpack.c.l.b16 %v2362
  %v2434 = vunpack.c.l.b16 %v2363
  %v2435 = vunpack.c.l.b16 %v2364
  %v2436 = vunpack.c.l.b16 %v2365
  %v2437 = vunpack.c.l.b16 %v2366
  %v2438 = vunpack.c.l.b16 %v2367
  %v2439 = vpack.c.b16 %v2408, %v2407
  %v2440 = vpack.c.b16 %v2410, %v2409
  %v2441 = vpack.c.b16 %v2412, %v2411
  %v2442 = vpack.c.b16 %v2414, %v2413
  %v2443 = vpack.c.b16 %v2416, %v2415
  %v2444 = vpack.c.b16 %v2418, %v2417
  %v2445 = vpack.c.b16 %v2420, %v2419
  %v2446 = vpack.c.b16 %v2422, %v2421
  %v2447 = vpack.c.b16 %v2424, %v2423
  %v2448 = vpack.c.b16 %v2426, %v2425
  %v2449 = vpack.c.b16 %v2428, %v2427
  %v2450 = vpack.c.b16 %v2430, %v2429
  %v2451 = vpack.c.b16 %v2432, %v2431
  %v2452 = vpack.c.b16 %v2434, %v2433
  %v2453 = vpack.c.b16 %v2436, %v2435
  %v2454 = vpack.c.b16 %v2438, %v2437
  %2471 = vmatprep.subr.bf16.mxu0 0
  %2472 = vmatpush1.bf16.msra.mxu0 %v2439
  %2473 = vmatprep.subr.bf16.mxu0 0
  %2474 = vmatpush1.bf16.msra.mxu0 %v2440
  %2475 = vmatprep.subr.bf16.mxu0 0
  %2476 = vmatpush1.bf16.msra.mxu0 %v2441
  %2477 = vmatprep.subr.bf16.mxu0 0
  %2478 = vmatpush1.bf16.msra.mxu0 %v2442
  %2479 = vmatprep.subr.bf16.mxu0 0
  %2480 = vmatpush1.bf16.msra.mxu0 %v2443
  %2481 = vmatprep.subr.bf16.mxu0 0
  %2482 = vmatpush1.bf16.msra.mxu0 %v2444
  %2483 = vmatprep.subr.bf16.mxu0 0
  %2484 = vmatpush1.bf16.msra.mxu0 %v2445
  %2485 = vmatprep.subr.bf16.mxu0 0
  %2486 = vmatpush1.bf16.msra.mxu0 %v2446
  %2487 = vmatprep.subr.bf16.mxu0 0
  %2488 = vmatpush1.bf16.msra.mxu0 %v2447
  %2489 = vmatprep.subr.bf16.mxu0 0
  %2490 = vmatpush1.bf16.msra.mxu0 %v2448
  %2491 = vmatprep.subr.bf16.mxu0 0
  %2492 = vmatpush1.bf16.msra.mxu0 %v2449
  %2493 = vmatprep.subr.bf16.mxu0 0
  %2494 = vmatpush1.bf16.msra.mxu0 %v2450
  %2495 = vmatprep.subr.bf16.mxu0 0
  %2496 = vmatpush1.bf16.msra.mxu0 %v2451
  %2497 = vmatprep.subr.bf16.mxu0 0
  %2498 = vmatpush1.bf16.msra.mxu0 %v2452
  %2499 = vmatprep.subr.bf16.mxu0 0
  %2500 = vmatpush1.bf16.msra.mxu0 %v2453
  %2501 = vmatprep.subr.bf16.mxu0 0
  %2502 = vmatpush1.bf16.msra.mxu0 %v2454
  %2503 = vmatprep.mubr.bf16.mxu0 %v2321
  %2504 = vmatmul.mubr.bf16.gmra.mrb[0].mxu0 %v2320
  %v2505 = vpop.f32.mrb[0].mxu0
  %v2506 = vadd.f32 %v2373, %v2505
  %v2507 = vpop.f32.mrb[0].mxu0
  %v2508 = vpop.f32.mrb[0].mxu0
  %v2509 = vadd.f32 %v2373, %v2508
  %v2510 = vpop.f32.mrb[0].mxu0
  %2511 = vmatprep.mubr.bf16.mxu0 %v2323
  %2512 = vmatmul.mubr.bf16.gmra.mrb[0].mxu0 %v2322
  %v2513 = vpop.f32.mrb[0].mxu0
  %v2514 = vadd.f32 %v2373, %v2513
  %v2515 = vpop.f32.mrb[0].mxu0
  %v2516 = vpop.f32.mrb[0].mxu0
  %v2517 = vadd.f32 %v2373, %v2516
  %v2518 = vpop.f32.mrb[0].mxu0
  %2519 = vmatprep.mubr.bf16.mxu0 %v2325
  %2520 = vmatmul.mubr.bf16.gmra.mrb[0].mxu0 %v2324
  %v2521 = vpop.f32.mrb[0].mxu0
  %v2522 = vadd.f32 %v2373, %v2521
  %v2523 = vpop.f32.mrb[0].mxu0
  %v2524 = vpop.f32.mrb[0].mxu0
  %v2525 = vadd.f32 %v2373, %v2524
  %v2526 = vpop.f32.mrb[0].mxu0
  %2527 = vmatprep.mubr.bf16.mxu0 %v2327
  %2528 = vmatmul.mubr.bf16.gmra.mrb[0].mxu0 %v2326
  %v2529 = vpop.f32.mrb[0].mxu0
  %v2530 = vadd.f32 %v2373, %v2529
  %v2531 = vpop.f32.mrb[0].mxu0
  %v2532 = vpop.f32.mrb[0].mxu0
  %v2533 = vadd.f32 %v2373, %v2532
  %v2534 = vpop.f32.mrb[0].mxu0
  %2535 = vmatprep.mubr.bf16.mxu0 %v2329
  %2536 = vmatmul.mubr.bf16.gmra.mrb[0].mxu0 %v2328
  %v2537 = vpop.f32.mrb[0].mxu0
  %v2538 = vadd.f32 %v2373, %v2537
  %v2539 = vpop.f32.mrb[0].mxu0
  %v2540 = vpop.f32.mrb[0].mxu0
  %v2541 = vadd.f32 %v2373, %v2540
  %v2542 = vpop.f32.mrb[0].mxu0
  %2543 = vmatprep.mubr.bf16.mxu0 %v2331
  %2544 = vmatmul.mubr.bf16.gmra.mrb[0].mxu0 %v2330
  %v2545 = vpop.f32.mrb[0].mxu0
  %v2546 = vadd.f32 %v2373, %v2545
  %v2547 = vpop.f32.mrb[0].mxu0
  %v2548 = vpop.f32.mrb[0].mxu0
  %v2549 = vadd.f32 %v2373, %v2548
  %v2550 = vpop.f32.mrb[0].mxu0
  %2551 = vmatprep.mubr.bf16.mxu0 %v2333
  %2552 = vmatmul.mubr.bf16.gmra.mrb[0].mxu0 %v2332
  %v2553 = vpop.f32.mrb[0].mxu0
  %v2554 = vadd.f32 %v2373, %v2553
  %v2555 = vpop.f32.mrb[0].mxu0
  %v2556 = vpop.f32.mrb[0].mxu0
  %v2557 = vadd.f32 %v2373, %v2556
  %v2558 = vpop.f32.mrb[0].mxu0
  %2559 = vmatprep.mubr.bf16.mxu0 %v2335
  %2560 = vmatmul.mubr.bf16.gmra.mrb[0].mxu0 %v2334
  %v2561 = vpop.f32.mrb[0].mxu0
  %v2562 = vadd.f32 %v2373, %v2561
  %v2563 = vpop.f32.mrb[0].mxu0
  %v2564 = vpop.f32.mrb[0].mxu0
  %v2565 = vadd.f32 %v2373, %v2564
  %v2566 = vpop.f32.mrb[0].mxu0
  %2567 = vdwg.mxu0
  %v2568 = vld [vmem:[%s11] sm:$0x1]
  %v2569 = vld [vmem:[%s12] sm:$0x1]
  %2570 = vadd.xlane.f32.xlu0 %v2506
  %v2571 = vpop.xlane.xlu0 %2570
  %2572 = vadd.xlane.f32.xlu0 %v2509
  %v2573 = vpop.xlane.xlu0 %2572
  %2574 = vadd.xlane.f32.xlu0 %v2514
  %v2575 = vpop.xlane.xlu0 %2574
  %2576 = vadd.xlane.f32.xlu0 %v2517
  %v2577 = vpop.xlane.xlu0 %2576
  %2578 = vadd.xlane.f32.xlu0 %v2522
  %v2579 = vpop.xlane.xlu0 %2578
  %2580 = vadd.xlane.f32.xlu0 %v2525
  %v2581 = vpop.xlane.xlu0 %2580
  %2582 = vadd.xlane.f32.xlu0 %v2530
  %v2583 = vpop.xlane.xlu0 %2582
  %2584 = vadd.xlane.f32.xlu0 %v2533
  %v2585 = vpop.xlane.xlu0 %2584
  %2586 = vadd.xlane.f32.xlu0 %v2538
  %v2587 = vpop.xlane.xlu0 %2586
  %2588 = vadd.xlane.f32.xlu0 %v2541
  %v2589 = vpop.xlane.xlu0 %2588
  %2590 = vadd.xlane.f32.xlu0 %v2546
  %v2591 = vpop.xlane.xlu0 %2590
  %2592 = vadd.xlane.f32.xlu0 %v2549
  %v2593 = vpop.xlane.xlu0 %2592
  %2594 = vadd.xlane.f32.xlu0 %v2554
  %v2595 = vpop.xlane.xlu0 %2594
  %2596 = vadd.xlane.f32.xlu0 %v2557
  %v2597 = vpop.xlane.xlu0 %2596
  %2598 = vadd.xlane.f32.xlu0 %v2562
  %v2599 = vpop.xlane.xlu0 %2598
  %2600 = vadd.xlane.f32.xlu0 %v2565
  %v2601 = vpop.xlane.xlu0 %2600
  %v2602 = vrcp.pop 128.0
  %v2603 = vmul.f32 %v2571, %v2602
  %v2604 = vmul.f32 %v2573, %v2602
  %v2605 = vmul.f32 %v2575, %v2602
  %v2606 = vmul.f32 %v2577, %v2602
  %v2607 = vmul.f32 %v2579, %v2602
  %v2608 = vmul.f32 %v2581, %v2602
  %v2609 = vmul.f32 %v2583, %v2602
  %v2610 = vmul.f32 %v2585, %v2602
  %v2611 = vmul.f32 %v2587, %v2602
  %v2612 = vmul.f32 %v2589, %v2602
  %v2613 = vmul.f32 %v2591, %v2602
  %v2614 = vmul.f32 %v2593, %v2602
  %v2615 = vmul.f32 %v2595, %v2602
  %v2616 = vmul.f32 %v2597, %v2602
  %v2617 = vmul.f32 %v2599, %v2602
  %v2618 = vmul.f32 %v2601, %v2602
  %v2619 = vmul.f32 %v2506, %v2506
  %v2620 = vmul.f32 %v2509, %v2509
  %v2621 = vmul.f32 %v2514, %v2514
  %v2622 = vmul.f32 %v2517, %v2517
  %v2623 = vmul.f32 %v2522, %v2522
  %v2624 = vmul.f32 %v2525, %v2525
  %v2625 = vmul.f32 %v2530, %v2530
  %v2626 = vmul.f32 %v2533, %v2533
  %v2627 = vmul.f32 %v2538, %v2538
  %v2628 = vmul.f32 %v2541, %v2541
  %v2629 = vmul.f32 %v2546, %v2546
  %v2630 = vmul.f32 %v2549, %v2549
  %v2631 = vmul.f32 %v2554, %v2554
  %v2632 = vmul.f32 %v2557, %v2557
  %v2633 = vmul.f32 %v2562, %v2562
  %v2634 = vmul.f32 %v2565, %v2565
  %2635 = vadd.xlane.f32.xlu0 %v2619
  %v2636 = vpop.xlane.xlu0 %2635
  %2637 = vadd.xlane.f32.xlu0 %v2620
  %v2638 = vpop.xlane.xlu0 %2637
  %2639 = vadd.xlane.f32.xlu0 %v2621
  %v2640 = vpop.xlane.xlu0 %2639
  %2641 = vadd.xlane.f32.xlu0 %v2622
  %v2642 = vpop.xlane.xlu0 %2641
  %2643 = vadd.xlane.f32.xlu0 %v2623
  %v2644 = vpop.xlane.xlu0 %2643
  %2645 = vadd.xlane.f32.xlu0 %v2624
  %v2646 = vpop.xlane.xlu0 %2645
  %2647 = vadd.xlane.f32.xlu0 %v2625
  %v2648 = vpop.xlane.xlu0 %2647
  %2649 = vadd.xlane.f32.xlu0 %v2626
  %v2650 = vpop.xlane.xlu0 %2649
  %2651 = vadd.xlane.f32.xlu0 %v2627
  %v2652 = vpop.xlane.xlu0 %2651
  %2653 = vadd.xlane.f32.xlu0 %v2628
  %v2654 = vpop.xlane.xlu0 %2653
  %2655 = vadd.xlane.f32.xlu0 %v2629
  %v2656 = vpop.xlane.xlu0 %2655
  %2657 = vadd.xlane.f32.xlu0 %v2630
  %v2658 = vpop.xlane.xlu0 %2657
  %2659 = vadd.xlane.f32.xlu0 %v2631
  %v2660 = vpop.xlane.xlu0 %2659
  %2661 = vadd.xlane.f32.xlu0 %v2632
  %v2662 = vpop.xlane.xlu0 %2661
  %2663 = vadd.xlane.f32.xlu0 %v2633
  %v2664 = vpop.xlane.xlu0 %2663
  %2665 = vadd.xlane.f32.xlu0 %v2634
  %v2666 = vpop.xlane.xlu0 %2665
  %v2667 = vmul.f32 %v2636, %v2602
  %v2668 = vmul.f32 %v2638, %v2602
  %v2669 = vmul.f32 %v2640, %v2602
  %v2670 = vmul.f32 %v2642, %v2602
  %v2671 = vmul.f32 %v2644, %v2602
  %v2672 = vmul.f32 %v2646, %v2602
  %v2673 = vmul.f32 %v2648, %v2602
  %v2674 = vmul.f32 %v2650, %v2602
  %v2675 = vmul.f32 %v2652, %v2602
  %v2676 = vmul.f32 %v2654, %v2602
  %v2677 = vmul.f32 %v2656, %v2602
  %v2678 = vmul.f32 %v2658, %v2602
  %v2679 = vmul.f32 %v2660, %v2602
  %v2680 = vmul.f32 %v2662, %v2602
  %v2681 = vmul.f32 %v2664, %v2602
  %v2682 = vmul.f32 %v2666, %v2602
  %v2683 = vmul.f32 %v2603, %v2603
  %v2684 = vmul.f32 %v2604, %v2604
  %v2685 = vmul.f32 %v2605, %v2605
  %v2686 = vmul.f32 %v2606, %v2606
  %v2687 = vmul.f32 %v2607, %v2607
  %v2688 = vmul.f32 %v2608, %v2608
  %v2689 = vmul.f32 %v2609, %v2609
  %v2690 = vmul.f32 %v2610, %v2610
  %v2691 = vmul.f32 %v2611, %v2611
  %v2692 = vmul.f32 %v2612, %v2612
  %v2693 = vmul.f32 %v2613, %v2613
  %v2694 = vmul.f32 %v2614, %v2614
  %v2695 = vmul.f32 %v2615, %v2615
  %v2696 = vmul.f32 %v2616, %v2616
  %v2697 = vmul.f32 %v2617, %v2617
  %v2698 = vmul.f32 %v2618, %v2618
  %v2699 = vsub.f32 %v2667, %v2683
  %v2700 = vsub.f32 %v2668, %v2684
  %v2701 = vsub.f32 %v2669, %v2685
  %v2702 = vsub.f32 %v2670, %v2686
  %v2703 = vsub.f32 %v2671, %v2687
  %v2704 = vsub.f32 %v2672, %v2688
  %v2705 = vsub.f32 %v2673, %v2689
  %v2706 = vsub.f32 %v2674, %v2690
  %v2707 = vsub.f32 %v2675, %v2691
  %v2708 = vsub.f32 %v2676, %v2692
  %v2709 = vsub.f32 %v2677, %v2693
  %v2710 = vsub.f32 %v2678, %v2694
  %v2711 = vsub.f32 %v2679, %v2695
  %v2712 = vsub.f32 %v2680, %v2696
  %v2713 = vsub.f32 %v2681, %v2697
  %v2714 = vsub.f32 %v2682, %v2698
  %v2715 = vmax.f32 %v2699, 0.0
  %v2716 = vmax.f32 %v2700, 0.0
  %v2717 = vmax.f32 %v2701, 0.0
  %v2718 = vmax.f32 %v2702, 0.0
  %v2719 = vmax.f32 %v2703, 0.0
  %v2720 = vmax.f32 %v2704, 0.0
  %v2721 = vmax.f32 %v2705, 0.0
  %v2722 = vmax.f32 %v2706, 0.0
  %v2723 = vmax.f32 %v2707, 0.0
  %v2724 = vmax.f32 %v2708, 0.0
  %v2725 = vmax.f32 %v2709, 0.0
  %v2726 = vmax.f32 %v2710, 0.0
  %v2727 = vmax.f32 %v2711, 0.0
  %v2728 = vmax.f32 %v2712, 0.0
  %v2729 = vmax.f32 %v2713, 0.0
  %v2730 = vmax.f32 %v2714, 0.0
  %v2731 = vsub.f32 %v2506, %v2603
  %v2732 = vsub.f32 %v2509, %v2604
  %v2733 = vsub.f32 %v2514, %v2605
  %v2734 = vsub.f32 %v2517, %v2606
  %v2735 = vsub.f32 %v2522, %v2607
  %v2736 = vsub.f32 %v2525, %v2608
  %v2737 = vsub.f32 %v2530, %v2609
  %v2738 = vsub.f32 %v2533, %v2610
  %v2739 = vsub.f32 %v2538, %v2611
  %v2740 = vsub.f32 %v2541, %v2612
  %v2741 = vsub.f32 %v2546, %v2613
  %v2742 = vsub.f32 %v2549, %v2614
  %v2743 = vsub.f32 %v2554, %v2615
  %v2744 = vsub.f32 %v2557, %v2616
  %v2745 = vsub.f32 %v2562, %v2617
  %v2746 = vsub.f32 %v2565, %v2618
  %v2747 = vadd.f32 %v2715, 1e-05
  %v2748 = vadd.f32 %v2716, 1e-05
  %v2749 = vadd.f32 %v2717, 1e-05
  %v2750 = vadd.f32 %v2718, 1e-05
  %v2751 = vadd.f32 %v2719, 1e-05
  %v2752 = vadd.f32 %v2720, 1e-05
  %v2753 = vadd.f32 %v2721, 1e-05
  %v2754 = vadd.f32 %v2722, 1e-05
  %v2755 = vadd.f32 %v2723, 1e-05
  %v2756 = vadd.f32 %v2724, 1e-05
  %v2757 = vadd.f32 %v2725, 1e-05
  %v2758 = vadd.f32 %v2726, 1e-05
  %v2759 = vadd.f32 %v2727, 1e-05
  %v2760 = vadd.f32 %v2728, 1e-05
  %v2761 = vadd.f32 %v2729, 1e-05
  %v2762 = vadd.f32 %v2730, 1e-05
  %v2763 = vrsqrt.pop %v2747
  %v2764 = vrsqrt.pop %v2748
  %v2765 = vrsqrt.pop %v2749
  %v2766 = vrsqrt.pop %v2750
  %v2767 = vrsqrt.pop %v2751
  %v2768 = vrsqrt.pop %v2752
  %v2769 = vrsqrt.pop %v2753
  %v2770 = vrsqrt.pop %v2754
  %v2771 = vrsqrt.pop %v2755
  %v2772 = vrsqrt.pop %v2756
  %v2773 = vrsqrt.pop %v2757
  %v2774 = vrsqrt.pop %v2758
  %v2775 = vrsqrt.pop %v2759
  %v2776 = vrsqrt.pop %v2760
  %v2777 = vrsqrt.pop %v2761
  %v2778 = vrsqrt.pop %v2762
  %v2779 = vmul.f32 %v2731, %v2763
  %v2780 = vmul.f32 %v2732, %v2764
  %v2781 = vmul.f32 %v2733, %v2765
  %v2782 = vmul.f32 %v2734, %v2766
  %v2783 = vmul.f32 %v2735, %v2767
  %v2784 = vmul.f32 %v2736, %v2768
  %v2785 = vmul.f32 %v2737, %v2769
  %v2786 = vmul.f32 %v2738, %v2770
  %v2787 = vmul.f32 %v2739, %v2771
  %v2788 = vmul.f32 %v2740, %v2772
  %v2789 = vmul.f32 %v2741, %v2773
  %v2790 = vmul.f32 %v2742, %v2774
  %v2791 = vmul.f32 %v2743, %v2775
  %v2792 = vmul.f32 %v2744, %v2776
  %v2793 = vmul.f32 %v2745, %v2777
  %v2794 = vmul.f32 %v2746, %v2778
  %v2796 = vlaneseq
  %v2797 = vshrl.u32 %v2796, 7
  %v2798 = vsub.s32 0, %v2797
  %v2799 = vrot.slane %v2568, %v2798
  %v2801 = vmul.f32 %v2779, %v2799
  %v2802 = vmul.f32 %v2780, %v2799
  %v2803 = vmul.f32 %v2781, %v2799
  %v2804 = vmul.f32 %v2782, %v2799
  %v2805 = vmul.f32 %v2783, %v2799
  %v2806 = vmul.f32 %v2784, %v2799
  %v2807 = vmul.f32 %v2785, %v2799
  %v2808 = vmul.f32 %v2786, %v2799
  %v2809 = vmul.f32 %v2787, %v2799
  %v2810 = vmul.f32 %v2788, %v2799
  %v2811 = vmul.f32 %v2789, %v2799
  %v2812 = vmul.f32 %v2790, %v2799
  %v2813 = vmul.f32 %v2791, %v2799
  %v2814 = vmul.f32 %v2792, %v2799
  %v2815 = vmul.f32 %v2793, %v2799
  %v2816 = vmul.f32 %v2794, %v2799
  %v2818 = vlaneseq
  %v2819 = vshrl.u32 %v2818, 7
  %v2820 = vsub.s32 0, %v2819
  %v2821 = vrot.slane %v2569, %v2820
  %v2823 = vadd.f32 %v2801, %v2821
  %v2824 = vadd.f32 %v2802, %v2821
  %v2825 = vadd.f32 %v2803, %v2821
  %v2826 = vadd.f32 %v2804, %v2821
  %v2827 = vadd.f32 %v2805, %v2821
  %v2828 = vadd.f32 %v2806, %v2821
  %v2829 = vadd.f32 %v2807, %v2821
  %v2830 = vadd.f32 %v2808, %v2821
  %v2831 = vadd.f32 %v2809, %v2821
  %v2832 = vadd.f32 %v2810, %v2821
  %v2833 = vadd.f32 %v2811, %v2821
  %v2834 = vadd.f32 %v2812, %v2821
  %v2835 = vadd.f32 %v2813, %v2821
  %v2836 = vadd.f32 %v2814, %v2821
  %v2837 = vadd.f32 %v2815, %v2821
  %v2838 = vadd.f32 %v2816, %v2821
  %v2839 = vmul.f32 %v2823, 0.2
  %v2840 = vmul.f32 %v2824, 0.2
  %v2841 = vmul.f32 %v2825, 0.2
  %v2842 = vmul.f32 %v2826, 0.2
  %v2843 = vmul.f32 %v2827, 0.2
  %v2844 = vmul.f32 %v2828, 0.2
  %v2845 = vmul.f32 %v2829, 0.2
  %v2846 = vmul.f32 %v2830, 0.2
  %v2847 = vmul.f32 %v2831, 0.2
  %v2848 = vmul.f32 %v2832, 0.2
  %v2849 = vmul.f32 %v2833, 0.2
  %v2850 = vmul.f32 %v2834, 0.2
  %v2851 = vmul.f32 %v2835, 0.2
  %v2852 = vmul.f32 %v2836, 0.2
  %v2853 = vmul.f32 %v2837, 0.2
  %v2854 = vmul.f32 %v2838, 0.2
  %v2855 = vmax.f32 %v2823, %v2839
  %v2856 = vmax.f32 %v2824, %v2840
  %v2857 = vmax.f32 %v2825, %v2841
  %v2858 = vmax.f32 %v2826, %v2842
  %v2859 = vmax.f32 %v2827, %v2843
  %v2860 = vmax.f32 %v2828, %v2844
  %v2861 = vmax.f32 %v2829, %v2845
  %v2862 = vmax.f32 %v2830, %v2846
  %v2863 = vmax.f32 %v2831, %v2847
  %v2864 = vmax.f32 %v2832, %v2848
  %v2865 = vmax.f32 %v2833, %v2849
  %v2866 = vmax.f32 %v2834, %v2850
  %v2867 = vmax.f32 %v2835, %v2851
  %v2868 = vmax.f32 %v2836, %v2852
  %v2869 = vmax.f32 %v2837, %v2853
  %v2870 = vmax.f32 %v2838, %v2854
  %v2871 = vpack.c.bf16 %v2856, %v2855
  %v2872 = vpack.c.bf16 %v2858, %v2857
  %v2873 = vpack.c.bf16 %v2860, %v2859
  %v2874 = vpack.c.bf16 %v2862, %v2861
  %v2875 = vpack.c.bf16 %v2864, %v2863
  %v2876 = vpack.c.bf16 %v2866, %v2865
  %v2877 = vpack.c.bf16 %v2868, %v2867
  %v2878 = vpack.c.bf16 %v2870, %v2869
  %v2879 = vld [vmem:[%s13] sm:$0xf]
  %v2880 = vld [vmem:[%s13 + $0x4] sm:$0xf]
  %v2881 = vld [vmem:[%s13 + $0x8] sm:$0xf]
  %v2882 = vld [vmem:[%s13 + $0xc] sm:$0xf]
  %v2883 = vld [vmem:[%s13 + $0x10] sm:$0xf]
  %v2884 = vld [vmem:[%s13 + $0x14] sm:$0xf]
  %v2885 = vld [vmem:[%s13 + $0x18] sm:$0xf]
  %v2886 = vld [vmem:[%s13 + $0x1c] sm:$0xf]
  %v2887 = vld [vmem:[%s13 + $0x20] sm:$0xf]
  %v2888 = vld [vmem:[%s13 + $0x24] sm:$0xf]
  %v2889 = vld [vmem:[%s13 + $0x28] sm:$0xf]
  %v2890 = vld [vmem:[%s13 + $0x2c] sm:$0xf]
  %v2891 = vld [vmem:[%s13 + $0x30] sm:$0xf]
  %v2892 = vld [vmem:[%s13 + $0x34] sm:$0xf]
  %v2893 = vld [vmem:[%s13 + $0x38] sm:$0xf]
  %v2894 = vld [vmem:[%s13 + $0x3c] sm:$0xf]
  %v2895 = vld [vmem:[%s14] sm:$0x1]
  %v2897 = vlaneseq
  %v2898 = vshrl.u32 %v2897, 7
  %v2899 = vsub.s32 0, %v2898
  %v2900 = vrot.slane %v2895, %v2899
  %v2918 = vunpack.c.l.b16 %v2879
  %v2919 = vunpack.c.l.b16 %v2880
  %v2920 = vunpack.c.l.b16 %v2881
  %v2921 = vunpack.c.l.b16 %v2882
  %v2922 = vunpack.c.l.b16 %v2883
  %v2923 = vunpack.c.l.b16 %v2884
  %v2924 = vunpack.c.l.b16 %v2885
  %v2925 = vunpack.c.l.b16 %v2886
  %v2926 = vunpack.c.l.b16 %v2887
  %v2927 = vunpack.c.l.b16 %v2888
  %v2928 = vunpack.c.l.b16 %v2889
  %v2929 = vunpack.c.l.b16 %v2890
  %v2930 = vunpack.c.l.b16 %v2891
  %v2931 = vunpack.c.l.b16 %v2892
  %v2932 = vunpack.c.l.b16 %v2893
  %v2933 = vunpack.c.l.b16 %v2894
  %v2934 = vpack.c.b16 %v2919, %v2918
  %v2935 = vpack.c.b16 %v2921, %v2920
  %v2936 = vpack.c.b16 %v2923, %v2922
  %v2937 = vpack.c.b16 %v2925, %v2924
  %v2938 = vpack.c.b16 %v2927, %v2926
  %v2939 = vpack.c.b16 %v2929, %v2928
  %v2940 = vpack.c.b16 %v2931, %v2930
  %v2941 = vpack.c.b16 %v2933, %v2932
  %2950 = vmatprep.subr.bf16.mxu0 0
  %2951 = vmatpush1.bf16.msra.mxu0 %v2934
  %2952 = vmatprep.subr.bf16.mxu0 0
  %2953 = vmatpush1.bf16.msra.mxu0 %v2935
  %2954 = vmatprep.subr.bf16.mxu0 0
  %2955 = vmatpush1.bf16.msra.mxu0 %v2936
  %2956 = vmatprep.subr.bf16.mxu0 0
  %2957 = vmatpush1.bf16.msra.mxu0 %v2937
  %2958 = vmatprep.subr.bf16.mxu0 0
  %2959 = vmatpush1.bf16.msra.mxu0 %v2938
  %2960 = vmatprep.subr.bf16.mxu0 0
  %2961 = vmatpush1.bf16.msra.mxu0 %v2939
  %2962 = vmatprep.subr.bf16.mxu0 0
  %2963 = vmatpush1.bf16.msra.mxu0 %v2940
  %2964 = vmatprep.subr.bf16.mxu0 0
  %2965 = vmatpush1.bf16.msra.mxu0 %v2941
  %2966 = vmatprep.subr.bf16.mxu0 0
  %2967 = vmatpush1.bf16.msra.mxu0 0
  %2968 = vmatprep.subr.bf16.mxu0 0
  %2969 = vmatpush1.bf16.msra.mxu0 0
  %2970 = vmatprep.subr.bf16.mxu0 0
  %2971 = vmatpush1.bf16.msra.mxu0 0
  %2972 = vmatprep.subr.bf16.mxu0 0
  %2973 = vmatpush1.bf16.msra.mxu0 0
  %2974 = vmatprep.subr.bf16.mxu0 0
  %2975 = vmatpush1.bf16.msra.mxu0 0
  %2976 = vmatprep.subr.bf16.mxu0 0
  %2977 = vmatpush1.bf16.msra.mxu0 0
  %2978 = vmatprep.subr.bf16.mxu0 0
  %2979 = vmatpush1.bf16.msra.mxu0 0
  %2980 = vmatprep.subr.bf16.mxu0 0
  %2981 = vmatpush1.bf16.msra.mxu0 0
  %2982 = vmatprep.mubr.bf16.mxu0 0
  %2983 = vmatmul.mubr.bf16.gmra.mrb[0].mxu0 %v2871
  %v2984 = vpop.f32.mrb[0].mxu0
  %v2985 = vadd.f32 %v2900, %v2984
  %v2986 = vpop.f32.mrb[0].mxu0
  %v2987 = vpop.f32.mrb[0].mxu0
  %v2988 = vadd.f32 %v2900, %v2987
  %v2989 = vpop.f32.mrb[0].mxu0
  %2990 = vmatprep.mubr.bf16.mxu0 0
  %2991 = vmatmul.mubr.bf16.gmra.mrb[0].mxu0 %v2872
  %v2992 = vpop.f32.mrb[0].mxu0
  %v2993 = vadd.f32 %v2900, %v2992
  %v2994 = vpop.f32.mrb[0].mxu0
  %v2995 = vpop.f32.mrb[0].mxu0
  %v2996 = vadd.f32 %v2900, %v2995
  %v2997 = vpop.f32.mrb[0].mxu0
  %2998 = vmatprep.mubr.bf16.mxu0 0
  %2999 = vmatmul.mubr.bf16.gmra.mrb[0].mxu0 %v2873
  %v3000 = vpop.f32.mrb[0].mxu0
  %v3001 = vadd.f32 %v2900, %v3000
  %v3002 = vpop.f32.mrb[0].mxu0
  %v3003 = vpop.f32.mrb[0].mxu0
  %v3004 = vadd.f32 %v2900, %v3003
  %v3005 = vpop.f32.mrb[0].mxu0
  %3006 = vmatprep.mubr.bf16.mxu0 0
  %3007 = vmatmul.mubr.bf16.gmra.mrb[0].mxu0 %v2874
  %v3008 = vpop.f32.mrb[0].mxu0
  %v3009 = vadd.f32 %v2900, %v3008
  %v3010 = vpop.f32.mrb[0].mxu0
  %v3011 = vpop.f32.mrb[0].mxu0
  %v3012 = vadd.f32 %v2900, %v3011
  %v3013 = vpop.f32.mrb[0].mxu0
  %3014 = vmatprep.mubr.bf16.mxu0 0
  %3015 = vmatmul.mubr.bf16.gmra.mrb[0].mxu0 %v2875
  %v3016 = vpop.f32.mrb[0].mxu0
  %v3017 = vadd.f32 %v2900, %v3016
  %v3018 = vpop.f32.mrb[0].mxu0
  %v3019 = vpop.f32.mrb[0].mxu0
  %v3020 = vadd.f32 %v2900, %v3019
  %v3021 = vpop.f32.mrb[0].mxu0
  %3022 = vmatprep.mubr.bf16.mxu0 0
  %3023 = vmatmul.mubr.bf16.gmra.mrb[0].mxu0 %v2876
  %v3024 = vpop.f32.mrb[0].mxu0
  %v3025 = vadd.f32 %v2900, %v3024
  %v3026 = vpop.f32.mrb[0].mxu0
  %v3027 = vpop.f32.mrb[0].mxu0
  %v3028 = vadd.f32 %v2900, %v3027
  %v3029 = vpop.f32.mrb[0].mxu0
  %3030 = vmatprep.mubr.bf16.mxu0 0
  %3031 = vmatmul.mubr.bf16.gmra.mrb[0].mxu0 %v2877
  %v3032 = vpop.f32.mrb[0].mxu0
  %v3033 = vadd.f32 %v2900, %v3032
  %v3034 = vpop.f32.mrb[0].mxu0
  %v3035 = vpop.f32.mrb[0].mxu0
  %v3036 = vadd.f32 %v2900, %v3035
  %v3037 = vpop.f32.mrb[0].mxu0
  %3038 = vmatprep.mubr.bf16.mxu0 0
  %3039 = vmatmul.mubr.bf16.gmra.mrb[0].mxu0 %v2878
  %v3040 = vpop.f32.mrb[0].mxu0
  %v3041 = vadd.f32 %v2900, %v3040
  %v3042 = vpop.f32.mrb[0].mxu0
  %v3043 = vpop.f32.mrb[0].mxu0
  %v3044 = vadd.f32 %v2900, %v3043
  %v3045 = vpop.f32.mrb[0].mxu0
  %3046 = vdwg.mxu0
  %v3047 = vpack.c.bf16 %v2988, %v2985
  %v3048 = vpack.c.bf16 %v2996, %v2993
  %v3049 = vpack.c.bf16 %v3004, %v3001
  %v3050 = vpack.c.bf16 %v3012, %v3009
  %v3051 = vpack.c.bf16 %v3020, %v3017
  %v3052 = vpack.c.bf16 %v3028, %v3025
  %v3053 = vpack.c.bf16 %v3036, %v3033
  %v3054 = vpack.c.bf16 %v3044, %v3041
  %v3063 = vunpack.c.l.b16 %v3047
  %v3064 = vunpack.c.h.b16 %v3047
  %v3065 = vunpack.c.l.b16 %v3048
  %v3066 = vunpack.c.h.b16 %v3048
  %v3067 = vunpack.c.l.b16 %v3049
  %v3068 = vunpack.c.h.b16 %v3049
  %v3069 = vunpack.c.l.b16 %v3050
  %v3070 = vunpack.c.h.b16 %v3050
  %v3071 = vunpack.c.l.b16 %v3051
  %v3072 = vunpack.c.h.b16 %v3051
  %v3073 = vunpack.c.l.b16 %v3052
  %v3074 = vunpack.c.h.b16 %v3052
  %v3075 = vunpack.c.l.b16 %v3053
  %v3076 = vunpack.c.h.b16 %v3053
  %v3077 = vunpack.c.l.b16 %v3054
  %v3078 = vunpack.c.h.b16 %v3054
  %v3079 = vpack.c.b16 %v3063, %v3063
  %v3080 = vpack.c.b16 %v3064, %v3064
  %v3081 = vpack.c.b16 %v3065, %v3065
  %v3082 = vpack.c.b16 %v3066, %v3066
  %v3083 = vpack.c.b16 %v3067, %v3067
  %v3084 = vpack.c.b16 %v3068, %v3068
  %v3085 = vpack.c.b16 %v3069, %v3069
  %v3086 = vpack.c.b16 %v3070, %v3070
  %v3087 = vpack.c.b16 %v3071, %v3071
  %v3088 = vpack.c.b16 %v3072, %v3072
  %v3089 = vpack.c.b16 %v3073, %v3073
  %v3090 = vpack.c.b16 %v3074, %v3074
  %v3091 = vpack.c.b16 %v3075, %v3075
  %v3092 = vpack.c.b16 %v3076, %v3076
  %v3093 = vpack.c.b16 %v3077, %v3077
  %v3094 = vpack.c.b16 %v3078, %v3078
  %3111 = vst [vmem:[%s15] sm:$0xf] %v3079
  %3112 = vst [vmem:[%s15 + $0x4] sm:$0xf] %v3080
  %3113 = vst [vmem:[%s15 + $0x8] sm:$0xf] %v3081
  %3114 = vst [vmem:[%s15 + $0xc] sm:$0xf] %v3082
  %3115 = vst [vmem:[%s15 + $0x10] sm:$0xf] %v3083
  %3116 = vst [vmem:[%s15 + $0x14] sm:$0xf] %v3084
  %3117 = vst [vmem:[%s15 + $0x18] sm:$0xf] %v3085
  %3118 = vst [vmem:[%s15 + $0x1c] sm:$0xf] %v3086
  %3119 = vst [vmem:[%s15 + $0x20] sm:$0xf] %v3087
  %3120 = vst [vmem:[%s15 + $0x24] sm:$0xf] %v3088
  %3121 = vst [vmem:[%s15 + $0x28] sm:$0xf] %v3089
  %3122 = vst [vmem:[%s15 + $0x2c] sm:$0xf] %v3090
  %3123 = vst [vmem:[%s15 + $0x30] sm:$0xf] %v3091
  %3124 = vst [vmem:[%s15 + $0x34] sm:$0xf] %v3092
  %3125 = vst [vmem:[%s15 + $0x38] sm:$0xf] %v3093
  %3126 = vst [vmem:[%s15 + $0x3c] sm:$0xf] %v3094
  // Predicated region
  $region62: #{length_estimator.1} parent=0 // pred_check
    _
  $region63: #{length_estimator.1} parent=0 // pred_check_branch
    %3128 = sbr.rel (0) target = $region65
  $region64: #{length_estimator.1} parent=0 // pred_region
    _
  $region65: #{length_estimator.1} parent=0 // pred_fallthru
    _
  // Predicated region
  $region66: #{length_estimator.1} parent=0 // pred_check
    _
  $region67: #{length_estimator.1} parent=0 // pred_check_branch
    %3130 = sbr.rel (0) target = $region69
  $region68: #{length_estimator.1} parent=0 // pred_region
    _
  $region69: #{length_estimator.1} parent=0 // pred_fallthru
    _

</llo_original>
